<compile_context>
chip_gen: v7x
topology: tpu7x:2x2x1
jax: 0.10.0
libtpu: 0.0.40
codegen_flags: <defaults>
</compile_context>

<pallas_src>
import functools

import numpy as np
import jax
import jax.numpy as jnp
from jax.experimental import pallas as pl
from jax.experimental.pallas import tpu as pltpu


# ----------------------------------------------------------------------------
# Pallas kernel
# ----------------------------------------------------------------------------
def _lstm_cell_grouped(gates, c, Hp):
    """LSTM cell on pre-activations `gates` (B_pad, 4*Hp) with gate blocks ordered
    (i, f, o, g), each padded to Hp(=multiple of 128) lanes. Element-wise math in f32."""
    act = jax.nn.sigmoid(gates[:, :3 * Hp])   # i, f, o in one EUP pass (lane-aligned blocks)
    g = jnp.tanh(gates[:, 3 * Hp:])
    i = act[:, 0 * Hp:1 * Hp]
    f = act[:, 1 * Hp:2 * Hp]
    o = act[:, 2 * Hp:3 * Hp]
    c_new = f * c + i * g
    h_new = o * jnp.tanh(c_new)
    return h_new, c_new


def autoencoder_kernel(x_ref, p_in_ref, p_out_ref,
                       enc_wih_ref, enc_whh_ref, enc_b_ref,
                       dec_wih_ref, dec_whh_ref, dec_b_ref,
                       out_w_ref, out_b_ref,
                       y_ref, xg_scr, hs_scr, *, T, B_pad, E_pad, H_pad):
    # x_ref:    (B*T, F) batch-major rows (row = b*T + t)
    # p_in:     (T*B_pad, B*T) bf16 one-hot: batch-major -> time-major (batch padded)
    # p_out:    (B*T, T*B_pad) bf16 one-hot: time-major (padded) -> batch-major
    # enc_wih:  (F, 4*E_pad) bf16   enc_whh: (E_pad, 4*E_pad) bf16   enc_b: (1, 4*E_pad) f32
    # dec_wih:  (E_pad, 4*H_pad) bf16  dec_whh: (H_pad, 4*H_pad) bf16  dec_b: (1, 4*H_pad) f32
    # out_w:    (H_pad, F_out) bf16    out_b: (1, F_out) f32
    # y_ref:    (B*T, F_out) f32 batch-major
    # xg_scr:   (T*B_pad, 4*E_pad) f32 VMEM   hs_scr: (T*B_pad, H_pad) f32 VMEM
    bf16 = jnp.bfloat16
    f32 = jnp.float32

    # ---- gather x rows into time-major, batch-padded order on the MXU (exact one-hot) ----
    # x_tm[t*B_pad + b] = x[b*T + t] for b < B; exact zeros in the pad rows.
    x_tm = jnp.dot(p_in_ref[...], x_ref[...].astype(bf16),
                   preferred_element_type=f32).astype(bf16)               # (T*B_pad, F)

    # ---- encoder: input projection hoisted off the recurrence, bias folded in ----
    xg_scr[...] = jnp.dot(x_tm, enc_wih_ref[...],
                          preferred_element_type=f32) + enc_b_ref[...]

    h = jnp.zeros((B_pad, E_pad), f32)
    c = jnp.zeros((B_pad, E_pad), f32)
    # TODO(synk): for much larger T carry h/c through lax.fori_loop(..., unroll=...) instead
    # of a full static unroll, to cap vreg live ranges.
    for t in range(T):  # static unroll; h/c carried in registers
        gates = xg_scr[t * B_pad:(t + 1) * B_pad, :] + jnp.dot(
            h.astype(bf16), enc_whh_ref[...], preferred_element_type=f32)
        h, c = _lstm_cell_grouped(gates, c, E_pad)
    emb = jnp.maximum(h, 0.0)   # ReLU(h_T); dropout == identity (eval mode)

    # ---- decoder: input is the same embedding at every step -> project once ----
    xd = jnp.dot(emb.astype(bf16), dec_wih_ref[...],
                 preferred_element_type=f32) + dec_b_ref[...]             # (B_pad, 4*H_pad)

    hd = jnp.zeros((B_pad, H_pad), f32)
    cd = jnp.zeros((B_pad, H_pad), f32)
    for t in range(T):  # static unroll; hd/cd carried in registers
        gates = xd + jnp.dot(hd.astype(bf16), dec_whh_ref[...],
                             preferred_element_type=f32)
        hd, cd = _lstm_cell_grouped(gates, cd, H_pad)
        # Whole-(8,128)-tile f32 store per step: no masked / read-modify-write traffic.
        hs_scr[t * B_pad:(t + 1) * B_pad, :] = jnp.maximum(hd, 0.0)

    # ---- un-permute to batch-major rows (MXU one-hot) and apply the output head ----
    hs_bt = jnp.dot(p_out_ref[...], hs_scr[...].astype(bf16),
                    preferred_element_type=f32)                           # (B*T, H_pad)
    y = jnp.dot(hs_bt.astype(bf16), out_w_ref[...],
                preferred_element_type=f32) + out_b_ref[...]              # (B*T, F_out)
    y_ref[...] = y.astype(y_ref.dtype)


# ----------------------------------------------------------------------------
# Wrapper
# ----------------------------------------------------------------------------
_VMEM = pl.BlockSpec(memory_space=pltpu.MemorySpace.VMEM)


def _perm_matrices(B, T, B_pad):
    """One-hot row-permutation matrices (exact in bf16) for in-kernel MXU gathers."""
    p_in = np.zeros((T * B_pad, B * T), np.float32)    # batch-major -> time-major (padded)
    p_out = np.zeros((B * T, T * B_pad), np.float32)   # time-major (padded) -> batch-major
    for b in range(B):
        for t in range(T):
            p_in[t * B_pad + b, b * T + t] = 1.0
            p_out[b * T + t, t * B_pad + b] = 1.0
    return jnp.asarray(p_in, jnp.bfloat16), jnp.asarray(p_out, jnp.bfloat16)


@jax.jit
def recurrent_autoencoder_forward(x, params):
    """x: (B, T, n_features) f32 -> (B, T, out_features) f32 (batch-first, like PyTorch)."""
    B, T, F = x.shape
    E_pad = params["enc_whh"].shape[0]      # padded per-gate width (>= embedding_dim)
    H_pad = params["dec_whh"].shape[0]      # padded per-gate width (>= 2*embedding_dim)
    F_out = params["out_w"].shape[1]
    B_pad = ((B + 7) // 8) * 8              # pad batch to full (8,128) sublane tiles

    p_in, p_out = _perm_matrices(B, T, B_pad)
    kernel = functools.partial(autoencoder_kernel, T=T, B_pad=B_pad,
                               E_pad=E_pad, H_pad=H_pad)

    # NOTE: at production batch sizes, add a ("parallel",) grid over batch blocks so both
    # v7x TensorCores are used and input/output DMA double-buffers behind the recurrence;
    # at B=2 a grid would only add overhead.
    y2d = pl.pallas_call(
        kernel,
        out_shape=jax.ShapeDtypeStruct((B * T, F_out), jnp.float32),
        in_specs=[_VMEM] * 11,
        out_specs=_VMEM,
        scratch_shapes=[pltpu.VMEM((T * B_pad, 4 * E_pad), jnp.float32),
                        pltpu.VMEM((T * B_pad, H_pad), jnp.float32)],
    )(x.reshape(B * T, F), p_in, p_out,
      params["enc_wih"], params["enc_whh"], params["enc_b"],
      params["dec_wih"], params["dec_whh"], params["dec_b"],
      params["out_w"], params["out_b"])

    return y2d.reshape(B, T, F_out)


# ----------------------------------------------------------------------------
# Parameters: PyTorch layout -> kernel layout (transpose, gate regroup, lane pad, bf16)
# ----------------------------------------------------------------------------
GATE_PERM = (0, 1, 3, 2)   # torch (i, f, g, o) -> kernel (i, f, o, g)


def make_torch_params(key, n_features, out_features, embedding_dim):
    """Random params in PyTorch nn.LSTM / nn.Linear layout (gate order i,f,g,o)."""
    E = embedding_dim
    H = 2 * E
    ks = jax.random.split(key, 10)

    def u(k, shape, scale):
        return jax.random.uniform(k, shape, jnp.float32, -scale, scale)

    se = 1.0 / float(np.sqrt(E))
    sh = 1.0 / float(np.sqrt(H))
    return {
        "enc_w_ih": u(ks[0], (4 * E, n_features), se),
        "enc_w_hh": u(ks[1], (4 * E, E), se),
        "enc_b_ih": u(ks[2], (4 * E,), se),
        "enc_b_hh": u(ks[3], (4 * E,), se),
        "dec_w_ih": u(ks[4], (4 * H, E), sh),
        "dec_w_hh": u(ks[5], (4 * H, H), sh),
        "dec_b_ih": u(ks[6], (4 * H,), sh),
        "dec_b_hh": u(ks[7], (4 * H,), sh),
        "out_w":    u(ks[8], (out_features, H), sh),
        "out_b":    u(ks[9], (out_features,), sh),
    }


def _pack_gates(w_t, H, Hp):
    """(..., 4H) torch-gate-ordered columns -> (..., 4*Hp): reorder to (i,f,o,g) and pad
    each gate block to Hp lanes so every in-kernel slice is 128-lane aligned."""
    blocks = []
    for g in GATE_PERM:
        blk = w_t[..., g * H:(g + 1) * H]
        pad = [(0, 0)] * (w_t.ndim - 1) + [(0, Hp - H)]
        blocks.append(jnp.pad(blk, pad))
    return jnp.concatenate(blocks, axis=-1)


def _pad_rows(w, rows_to):
    return jnp.pad(w, ((0, rows_to - w.shape[0]), (0, 0)))


def convert_params(raw, embedding_dim):
    E = embedding_dim
    H = 2 * E
    Ep = ((E + 127) // 128) * 128
    Hp = ((H + 127) // 128) * 128
    bf16 = jnp.bfloat16
    f32 = jnp.float32
    return {
        "enc_wih": _pack_gates(raw["enc_w_ih"].T, E, Ep).astype(bf16),              # (F, 4Ep)
        "enc_whh": _pad_rows(_pack_gates(raw["enc_w_hh"].T, E, Ep), Ep).astype(bf16),
        "enc_b":   _pack_gates((raw["enc_b_ih"] + raw["enc_b_hh"])[None, :], E, Ep).astype(f32),
        "dec_wih": _pad_rows(_pack_gates(raw["dec_w_ih"].T, H, Hp), Ep).astype(bf16),
        "dec_whh": _pad_rows(_pack_gates(raw["dec_w_hh"].T, H, Hp), Hp).astype(bf16),
        "dec_b":   _pack_gates((raw["dec_b_ih"] + raw["dec_b_hh"])[None, :], H, Hp).astype(f32),
        "out_w":   _pad_rows(raw["out_w"].T, Hp).astype(bf16),                      # (Hp, F_out)
        "out_b":   raw["out_b"][None, :].astype(f32),
    }


# ----------------------------------------------------------------------------
# Pure-JAX reference (PyTorch semantics, same bf16-operand / f32-accumulate matmuls)
# ----------------------------------------------------------------------------
def _ref_forward(x, raw):
    bf16 = jnp.bfloat16
    B, T, _ = x.shape
    E = raw["enc_w_hh"].shape[1]
    H = raw["dec_w_hh"].shape[1]

    def cell(h, c, gates, Hd):
        i = jax.nn.sigmoid(gates[:, 0 * Hd:1 * Hd])
        f = jax.nn.sigmoid(gates[:, 1 * Hd:2 * Hd])
        g = jnp.tanh(gates[:, 2 * Hd:3 * Hd])
        o = jax.nn.sigmoid(gates[:, 3 * Hd:4 * Hd])
        c = f * c + i * g
        h = o * jnp.tanh(c)
        return h, c

    def mm(a, w):   # a @ w.T with bf16 operands, f32 accumulation (mirrors the kernel)
        return jnp.dot(a.astype(bf16), w.T.astype(bf16),
                       preferred_element_type=jnp.float32)

    enc_b = (raw["enc_b_ih"] + raw["enc_b_hh"])[None, :]
    h = jnp.zeros((B, E), jnp.float32)
    c = jnp.zeros((B, E), jnp.float32)
    for t in range(T):
        gates = mm(x[:, t, :], raw["enc_w_ih"]) + mm(h, raw["enc_w_hh"]) + enc_b
        h, c = cell(h, c, gates, E)
    emb = jnp.maximum(h, 0.0)

    dec_b = (raw["dec_b_ih"] + raw["dec_b_hh"])[None, :]
    xd = mm(emb, raw["dec_w_ih"]) + dec_b
    hd = jnp.zeros((B, H), jnp.float32)
    cd = jnp.zeros((B, H), jnp.float32)
    ys = []
    for t in range(T):
        gates = xd + mm(hd, raw["dec_w_hh"])
        hd, cd = cell(hd, cd, gates, H)
        ys.append(mm(jnp.maximum(hd, 0.0), raw["out_w"]) + raw["out_b"][None, :])
    return jnp.stack(ys, axis=1)


# ----------------------------------------------------------------------------
if __name__ == "__main__":
    B, T = 2, 8
    n_features, out_features, embedding_dim = 4, 4, 32

    key = jax.random.PRNGKey(0)
    kx, kp = jax.random.split(key)
    x = jax.random.normal(kx, (B, T, n_features), jnp.float32)
    raw = make_torch_params(kp, n_features, out_features, embedding_dim)
    kparams = convert_params(raw, embedding_dim)

    y = recurrent_autoencoder_forward(x, kparams)
    y = jax.block_until_ready(y)
    assert y.shape == (B, T, out_features), y.shape

    y_ref = _ref_forward(x, raw)
    err = float(jnp.max(jnp.abs(y - y_ref)))
    assert err < 2e-3, err

    print("KERNEL_OK")
</pallas_src>

<mosaic_0001>
module attributes {stable_mosaic.version = 11 : i64} {
  func.func @autoencoder_kernel(%arg0: memref<16x4xf32, #tpu.memory_space<vmem>>, %arg1: memref<64x16xbf16, #tpu.memory_space<vmem>>, %arg2: memref<16x64xbf16, #tpu.memory_space<vmem>>, %arg3: memref<4x512xbf16, #tpu.memory_space<vmem>>, %arg4: memref<128x512xbf16, #tpu.memory_space<vmem>>, %arg5: memref<1x512xf32, #tpu.memory_space<vmem>>, %arg6: memref<128x512xbf16, #tpu.memory_space<vmem>>, %arg7: memref<128x512xbf16, #tpu.memory_space<vmem>>, %arg8: memref<1x512xf32, #tpu.memory_space<vmem>>, %arg9: memref<128x4xbf16, #tpu.memory_space<vmem>>, %arg10: memref<1x4xf32, #tpu.memory_space<vmem>>, %arg11: memref<16x4xf32, #tpu.memory_space<vmem>>, %arg12: memref<64x512xf32, #tpu.memory_space<vmem>>, %arg13: memref<64x128xf32, #tpu.memory_space<vmem>>) attributes {dimension_semantics = [], scalar_prefetch = 0 : i64, scratch_operands = 2 : i64, tpu.core_type = #tpu.core_type<tc>} {
    %c0 = arith.constant 0 : index
    %c0_0 = arith.constant 0 : index
    %0 = vector.load %arg1[%c0, %c0_0] : memref<64x16xbf16, #tpu.memory_space<vmem>>, vector<64x16xbf16>
    %c0_1 = arith.constant 0 : index
    %c0_2 = arith.constant 0 : index
    %1 = vector.load %arg0[%c0_1, %c0_2] : memref<16x4xf32, #tpu.memory_space<vmem>>, vector<16x4xf32>
    %2 = arith.truncf %1 : vector<16x4xf32> to vector<16x4xbf16>
    %cst = arith.constant dense<0.000000e+00> : vector<64x4xf32>
    %3 = tpu.matmul %0, %2, %cst {dimension_numbers = #tpu.dot_dimension_numbers<[1], [0], [0], [1], [0, 0, 1, 1], [], []>} : vector<64x16xbf16>, vector<16x4xbf16>, vector<64x4xf32> -> vector<64x4xf32>
    %4 = arith.truncf %3 : vector<64x4xf32> to vector<64x4xbf16>
    %c0_3 = arith.constant 0 : index
    %c0_4 = arith.constant 0 : index
    %5 = vector.load %arg3[%c0_3, %c0_4] : memref<4x512xbf16, #tpu.memory_space<vmem>>, vector<4x512xbf16>
    %cst_5 = arith.constant dense<0.000000e+00> : vector<64x512xf32>
    %6 = tpu.matmul %4, %5, %cst_5 {dimension_numbers = #tpu.dot_dimension_numbers<[1], [0], [0], [1], [0, 0, 1, 1], [], []>} : vector<64x4xbf16>, vector<4x512xbf16>, vector<64x512xf32> -> vector<64x512xf32>
    %c0_6 = arith.constant 0 : index
    %c0_7 = arith.constant 0 : index
    %7 = vector.load %arg5[%c0_6, %c0_7] : memref<1x512xf32, #tpu.memory_space<vmem>>, vector<1x512xf32>
    %8 = vector.broadcast %7 : vector<1x512xf32> to vector<64x512xf32>
    %9 = arith.addf %6, %8 : vector<64x512xf32>
    %c0_8 = arith.constant 0 : index
    %c0_9 = arith.constant 0 : index
    %10 = vector.load %arg12[%c0_8, %c0_9] : memref<64x512xf32, #tpu.memory_space<vmem>>, vector<64x512xf32>
    tpu.vector_store %arg12[%c0_8, %c0_9], %9 {strides = array<i32>} : memref<64x512xf32, #tpu.memory_space<vmem>>, vector<64x512xf32>,
    %cst_10 = arith.constant 0.000000e+00 : f32
    %11 = vector.broadcast %cst_10 : f32 to vector<8x128xf32>
    %cst_11 = arith.constant 0.000000e+00 : f32
    %12 = vector.broadcast %cst_11 : f32 to vector<8x128xf32>
    %c0_12 = arith.constant 0 : index
    %c0_13 = arith.constant 0 : index
    %13 = vector.load %arg12[%c0_12, %c0_13] : memref<64x512xf32, #tpu.memory_space<vmem>>, vector<8x512xf32>
    %14 = arith.truncf %11 : vector<8x128xf32> to vector<8x128xbf16>
    %c0_14 = arith.constant 0 : index
    %c0_15 = arith.constant 0 : index
    %15 = vector.load %arg4[%c0_14, %c0_15] : memref<128x512xbf16, #tpu.memory_space<vmem>>, vector<128x512xbf16>
    %cst_16 = arith.constant dense<0.000000e+00> : vector<8x512xf32>
    %16 = tpu.matmul %14, %15, %cst_16 {dimension_numbers = #tpu.dot_dimension_numbers<[1], [0], [0], [1], [0, 0, 1, 1], [], []>} : vector<8x128xbf16>, vector<128x512xbf16>, vector<8x512xf32> -> vector<8x512xf32>
    %17 = arith.addf %13, %16 : vector<8x512xf32>
    %18 = vector.extract_strided_slice %17 {offsets = [0, 0], sizes = [8, 384], strides = [1, 1]} : vector<8x512xf32> to vector<8x384xf32>
    %19 = arith.negf %18 : vector<8x384xf32>
    %20 = math.exp %19 : vector<8x384xf32>
    %cst_17 = arith.constant 1.000000e+00 : f32
    %21 = vector.broadcast %cst_17 : f32 to vector<8x384xf32>
    %22 = arith.addf %21, %20 : vector<8x384xf32>
    %23 = arith.divf %21, %22 : vector<8x384xf32>
    %24 = vector.extract_strided_slice %17 {offsets = [0, 384], sizes = [8, 128], strides = [1, 1]} : vector<8x512xf32> to vector<8x128xf32>
    %25 = math.tanh %24 : vector<8x128xf32>
    %26 = vector.extract_strided_slice %23 {offsets = [0, 0], sizes = [8, 128], strides = [1, 1]} : vector<8x384xf32> to vector<8x128xf32>
    %27 = vector.extract_strided_slice %23 {offsets = [0, 128], sizes = [8, 128], strides = [1, 1]} : vector<8x384xf32> to vector<8x128xf32>
    %28 = vector.extract_strided_slice %23 {offsets = [0, 256], sizes = [8, 128], strides = [1, 1]} : vector<8x384xf32> to vector<8x128xf32>
    %29 = arith.mulf %27, %12 : vector<8x128xf32>
    %30 = arith.mulf %26, %25 : vector<8x128xf32>
    %31 = arith.addf %29, %30 : vector<8x128xf32>
    %32 = math.tanh %31 : vector<8x128xf32>
    %33 = arith.mulf %28, %32 : vector<8x128xf32>
    %c8 = arith.constant 8 : index
    %c0_18 = arith.constant 0 : index
    %34 = vector.load %arg12[%c8, %c0_18] : memref<64x512xf32, #tpu.memory_space<vmem>>, vector<8x512xf32>
    %35 = arith.truncf %33 : vector<8x128xf32> to vector<8x128xbf16>
    %c0_19 = arith.constant 0 : index
    %c0_20 = arith.constant 0 : index
    %36 = vector.load %arg4[%c0_19, %c0_20] : memref<128x512xbf16, #tpu.memory_space<vmem>>, vector<128x512xbf16>
    %cst_21 = arith.constant dense<0.000000e+00> : vector<8x512xf32>
    %37 = tpu.matmul %35, %36, %cst_21 {dimension_numbers = #tpu.dot_dimension_numbers<[1], [0], [0], [1], [0, 0, 1, 1], [], []>} : vector<8x128xbf16>, vector<128x512xbf16>, vector<8x512xf32> -> vector<8x512xf32>
    %38 = arith.addf %34, %37 : vector<8x512xf32>
    %39 = vector.extract_strided_slice %38 {offsets = [0, 0], sizes = [8, 384], strides = [1, 1]} : vector<8x512xf32> to vector<8x384xf32>
    %40 = arith.negf %39 : vector<8x384xf32>
    %41 = math.exp %40 : vector<8x384xf32>
    %cst_22 = arith.constant 1.000000e+00 : f32
    %42 = vector.broadcast %cst_22 : f32 to vector<8x384xf32>
    %43 = arith.addf %42, %41 : vector<8x384xf32>
    %44 = arith.divf %42, %43 : vector<8x384xf32>
    %45 = vector.extract_strided_slice %38 {offsets = [0, 384], sizes = [8, 128], strides = [1, 1]} : vector<8x512xf32> to vector<8x128xf32>
    %46 = math.tanh %45 : vector<8x128xf32>
    %47 = vector.extract_strided_slice %44 {offsets = [0, 0], sizes = [8, 128], strides = [1, 1]} : vector<8x384xf32> to vector<8x128xf32>
    %48 = vector.extract_strided_slice %44 {offsets = [0, 128], sizes = [8, 128], strides = [1, 1]} : vector<8x384xf32> to vector<8x128xf32>
    %49 = vector.extract_strided_slice %44 {offsets = [0, 256], sizes = [8, 128], strides = [1, 1]} : vector<8x384xf32> to vector<8x128xf32>
    %50 = arith.mulf %48, %31 : vector<8x128xf32>
    %51 = arith.mulf %47, %46 : vector<8x128xf32>
    %52 = arith.addf %50, %51 : vector<8x128xf32>
    %53 = math.tanh %52 : vector<8x128xf32>
    %54 = arith.mulf %49, %53 : vector<8x128xf32>
    %c16 = arith.constant 16 : index
    %c0_23 = arith.constant 0 : index
    %55 = vector.load %arg12[%c16, %c0_23] : memref<64x512xf32, #tpu.memory_space<vmem>>, vector<8x512xf32>
    %56 = arith.truncf %54 : vector<8x128xf32> to vector<8x128xbf16>
    %c0_24 = arith.constant 0 : index
    %c0_25 = arith.constant 0 : index
    %57 = vector.load %arg4[%c0_24, %c0_25] : memref<128x512xbf16, #tpu.memory_space<vmem>>, vector<128x512xbf16>
    %cst_26 = arith.constant dense<0.000000e+00> : vector<8x512xf32>
    %58 = tpu.matmul %56, %57, %cst_26 {dimension_numbers = #tpu.dot_dimension_numbers<[1], [0], [0], [1], [0, 0, 1, 1], [], []>} : vector<8x128xbf16>, vector<128x512xbf16>, vector<8x512xf32> -> vector<8x512xf32>
    %59 = arith.addf %55, %58 : vector<8x512xf32>
    %60 = vector.extract_strided_slice %59 {offsets = [0, 0], sizes = [8, 384], strides = [1, 1]} : vector<8x512xf32> to vector<8x384xf32>
    %61 = arith.negf %60 : vector<8x384xf32>
    %62 = math.exp %61 : vector<8x384xf32>
    %cst_27 = arith.constant 1.000000e+00 : f32
    %63 = vector.broadcast %cst_27 : f32 to vector<8x384xf32>
    %64 = arith.addf %63, %62 : vector<8x384xf32>
    %65 = arith.divf %63, %64 : vector<8x384xf32>
    %66 = vector.extract_strided_slice %59 {offsets = [0, 384], sizes = [8, 128], strides = [1, 1]} : vector<8x512xf32> to vector<8x128xf32>
    %67 = math.tanh %66 : vector<8x128xf32>
    %68 = vector.extract_strided_slice %65 {offsets = [0, 0], sizes = [8, 128], strides = [1, 1]} : vector<8x384xf32> to vector<8x128xf32>
    %69 = vector.extract_strided_slice %65 {offsets = [0, 128], sizes = [8, 128], strides = [1, 1]} : vector<8x384xf32> to vector<8x128xf32>
    %70 = vector.extract_strided_slice %65 {offsets = [0, 256], sizes = [8, 128], strides = [1, 1]} : vector<8x384xf32> to vector<8x128xf32>
    %71 = arith.mulf %69, %52 : vector<8x128xf32>
    %72 = arith.mulf %68, %67 : vector<8x128xf32>
    %73 = arith.addf %71, %72 : vector<8x128xf32>
    %74 = math.tanh %73 : vector<8x128xf32>
    %75 = arith.mulf %70, %74 : vector<8x128xf32>
    %c24 = arith.constant 24 : index
    %c0_28 = arith.constant 0 : index
    %76 = vector.load %arg12[%c24, %c0_28] : memref<64x512xf32, #tpu.memory_space<vmem>>, vector<8x512xf32>
    %77 = arith.truncf %75 : vector<8x128xf32> to vector<8x128xbf16>
    %c0_29 = arith.constant 0 : index
    %c0_30 = arith.constant 0 : index
    %78 = vector.load %arg4[%c0_29, %c0_30] : memref<128x512xbf16, #tpu.memory_space<vmem>>, vector<128x512xbf16>
    %cst_31 = arith.constant dense<0.000000e+00> : vector<8x512xf32>
    %79 = tpu.matmul %77, %78, %cst_31 {dimension_numbers = #tpu.dot_dimension_numbers<[1], [0], [0], [1], [0, 0, 1, 1], [], []>} : vector<8x128xbf16>, vector<128x512xbf16>, vector<8x512xf32> -> vector<8x512xf32>
    %80 = arith.addf %76, %79 : vector<8x512xf32>
    %81 = vector.extract_strided_slice %80 {offsets = [0, 0], sizes = [8, 384], strides = [1, 1]} : vector<8x512xf32> to vector<8x384xf32>
    %82 = arith.negf %81 : vector<8x384xf32>
    %83 = math.exp %82 : vector<8x384xf32>
    %cst_32 = arith.constant 1.000000e+00 : f32
    %84 = vector.broadcast %cst_32 : f32 to vector<8x384xf32>
    %85 = arith.addf %84, %83 : vector<8x384xf32>
    %86 = arith.divf %84, %85 : vector<8x384xf32>
    %87 = vector.extract_strided_slice %80 {offsets = [0, 384], sizes = [8, 128], strides = [1, 1]} : vector<8x512xf32> to vector<8x128xf32>
    %88 = math.tanh %87 : vector<8x128xf32>
    %89 = vector.extract_strided_slice %86 {offsets = [0, 0], sizes = [8, 128], strides = [1, 1]} : vector<8x384xf32> to vector<8x128xf32>
    %90 = vector.extract_strided_slice %86 {offsets = [0, 128], sizes = [8, 128], strides = [1, 1]} : vector<8x384xf32> to vector<8x128xf32>
    %91 = vector.extract_strided_slice %86 {offsets = [0, 256], sizes = [8, 128], strides = [1, 1]} : vector<8x384xf32> to vector<8x128xf32>
    %92 = arith.mulf %90, %73 : vector<8x128xf32>
    %93 = arith.mulf %89, %88 : vector<8x128xf32>
    %94 = arith.addf %92, %93 : vector<8x128xf32>
    %95 = math.tanh %94 : vector<8x128xf32>
    %96 = arith.mulf %91, %95 : vector<8x128xf32>
    %c32 = arith.constant 32 : index
    %c0_33 = arith.constant 0 : index
    %97 = vector.load %arg12[%c32, %c0_33] : memref<64x512xf32, #tpu.memory_space<vmem>>, vector<8x512xf32>
    %98 = arith.truncf %96 : vector<8x128xf32> to vector<8x128xbf16>
    %c0_34 = arith.constant 0 : index
    %c0_35 = arith.constant 0 : index
    %99 = vector.load %arg4[%c0_34, %c0_35] : memref<128x512xbf16, #tpu.memory_space<vmem>>, vector<128x512xbf16>
    %cst_36 = arith.constant dense<0.000000e+00> : vector<8x512xf32>
    %100 = tpu.matmul %98, %99, %cst_36 {dimension_numbers = #tpu.dot_dimension_numbers<[1], [0], [0], [1], [0, 0, 1, 1], [], []>} : vector<8x128xbf16>, vector<128x512xbf16>, vector<8x512xf32> -> vector<8x512xf32>
    %101 = arith.addf %97, %100 : vector<8x512xf32>
    %102 = vector.extract_strided_slice %101 {offsets = [0, 0], sizes = [8, 384], strides = [1, 1]} : vector<8x512xf32> to vector<8x384xf32>
    %103 = arith.negf %102 : vector<8x384xf32>
    %104 = math.exp %103 : vector<8x384xf32>
    %cst_37 = arith.constant 1.000000e+00 : f32
    %105 = vector.broadcast %cst_37 : f32 to vector<8x384xf32>
    %106 = arith.addf %105, %104 : vector<8x384xf32>
    %107 = arith.divf %105, %106 : vector<8x384xf32>
    %108 = vector.extract_strided_slice %101 {offsets = [0, 384], sizes = [8, 128], strides = [1, 1]} : vector<8x512xf32> to vector<8x128xf32>
    %109 = math.tanh %108 : vector<8x128xf32>
    %110 = vector.extract_strided_slice %107 {offsets = [0, 0], sizes = [8, 128], strides = [1, 1]} : vector<8x384xf32> to vector<8x128xf32>
    %111 = vector.extract_strided_slice %107 {offsets = [0, 128], sizes = [8, 128], strides = [1, 1]} : vector<8x384xf32> to vector<8x128xf32>
    %112 = vector.extract_strided_slice %107 {offsets = [0, 256], sizes = [8, 128], strides = [1, 1]} : vector<8x384xf32> to vector<8x128xf32>
    %113 = arith.mulf %111, %94 : vector<8x128xf32>
    %114 = arith.mulf %110, %109 : vector<8x128xf32>
    %115 = arith.addf %113, %114 : vector<8x128xf32>
    %116 = math.tanh %115 : vector<8x128xf32>
    %117 = arith.mulf %112, %116 : vector<8x128xf32>
    %c40 = arith.constant 40 : index
    %c0_38 = arith.constant 0 : index
    %118 = vector.load %arg12[%c40, %c0_38] : memref<64x512xf32, #tpu.memory_space<vmem>>, vector<8x512xf32>
    %119 = arith.truncf %117 : vector<8x128xf32> to vector<8x128xbf16>
    %c0_39 = arith.constant 0 : index
    %c0_40 = arith.constant 0 : index
    %120 = vector.load %arg4[%c0_39, %c0_40] : memref<128x512xbf16, #tpu.memory_space<vmem>>, vector<128x512xbf16>
    %cst_41 = arith.constant dense<0.000000e+00> : vector<8x512xf32>
    %121 = tpu.matmul %119, %120, %cst_41 {dimension_numbers = #tpu.dot_dimension_numbers<[1], [0], [0], [1], [0, 0, 1, 1], [], []>} : vector<8x128xbf16>, vector<128x512xbf16>, vector<8x512xf32> -> vector<8x512xf32>
    %122 = arith.addf %118, %121 : vector<8x512xf32>
    %123 = vector.extract_strided_slice %122 {offsets = [0, 0], sizes = [8, 384], strides = [1, 1]} : vector<8x512xf32> to vector<8x384xf32>
    %124 = arith.negf %123 : vector<8x384xf32>
    %125 = math.exp %124 : vector<8x384xf32>
    %cst_42 = arith.constant 1.000000e+00 : f32
    %126 = vector.broadcast %cst_42 : f32 to vector<8x384xf32>
    %127 = arith.addf %126, %125 : vector<8x384xf32>
    %128 = arith.divf %126, %127 : vector<8x384xf32>
    %129 = vector.extract_strided_slice %122 {offsets = [0, 384], sizes = [8, 128], strides = [1, 1]} : vector<8x512xf32> to vector<8x128xf32>
    %130 = math.tanh %129 : vector<8x128xf32>
    %131 = vector.extract_strided_slice %128 {offsets = [0, 0], sizes = [8, 128], strides = [1, 1]} : vector<8x384xf32> to vector<8x128xf32>
    %132 = vector.extract_strided_slice %128 {offsets = [0, 128], sizes = [8, 128], strides = [1, 1]} : vector<8x384xf32> to vector<8x128xf32>
    %133 = vector.extract_strided_slice %128 {offsets = [0, 256], sizes = [8, 128], strides = [1, 1]} : vector<8x384xf32> to vector<8x128xf32>
    %134 = arith.mulf %132, %115 : vector<8x128xf32>
    %135 = arith.mulf %131, %130 : vector<8x128xf32>
    %136 = arith.addf %134, %135 : vector<8x128xf32>
    %137 = math.tanh %136 : vector<8x128xf32>
    %138 = arith.mulf %133, %137 : vector<8x128xf32>
    %c48 = arith.constant 48 : index
    %c0_43 = arith.constant 0 : index
    %139 = vector.load %arg12[%c48, %c0_43] : memref<64x512xf32, #tpu.memory_space<vmem>>, vector<8x512xf32>
    %140 = arith.truncf %138 : vector<8x128xf32> to vector<8x128xbf16>
    %c0_44 = arith.constant 0 : index
    %c0_45 = arith.constant 0 : index
    %141 = vector.load %arg4[%c0_44, %c0_45] : memref<128x512xbf16, #tpu.memory_space<vmem>>, vector<128x512xbf16>
    %cst_46 = arith.constant dense<0.000000e+00> : vector<8x512xf32>
    %142 = tpu.matmul %140, %141, %cst_46 {dimension_numbers = #tpu.dot_dimension_numbers<[1], [0], [0], [1], [0, 0, 1, 1], [], []>} : vector<8x128xbf16>, vector<128x512xbf16>, vector<8x512xf32> -> vector<8x512xf32>
    %143 = arith.addf %139, %142 : vector<8x512xf32>
    %144 = vector.extract_strided_slice %143 {offsets = [0, 0], sizes = [8, 384], strides = [1, 1]} : vector<8x512xf32> to vector<8x384xf32>
    %145 = arith.negf %144 : vector<8x384xf32>
    %146 = math.exp %145 : vector<8x384xf32>
    %cst_47 = arith.constant 1.000000e+00 : f32
    %147 = vector.broadcast %cst_47 : f32 to vector<8x384xf32>
    %148 = arith.addf %147, %146 : vector<8x384xf32>
    %149 = arith.divf %147, %148 : vector<8x384xf32>
    %150 = vector.extract_strided_slice %143 {offsets = [0, 384], sizes = [8, 128], strides = [1, 1]} : vector<8x512xf32> to vector<8x128xf32>
    %151 = math.tanh %150 : vector<8x128xf32>
    %152 = vector.extract_strided_slice %149 {offsets = [0, 0], sizes = [8, 128], strides = [1, 1]} : vector<8x384xf32> to vector<8x128xf32>
    %153 = vector.extract_strided_slice %149 {offsets = [0, 128], sizes = [8, 128], strides = [1, 1]} : vector<8x384xf32> to vector<8x128xf32>
    %154 = vector.extract_strided_slice %149 {offsets = [0, 256], sizes = [8, 128], strides = [1, 1]} : vector<8x384xf32> to vector<8x128xf32>
    %155 = arith.mulf %153, %136 : vector<8x128xf32>
    %156 = arith.mulf %152, %151 : vector<8x128xf32>
    %157 = arith.addf %155, %156 : vector<8x128xf32>
    %158 = math.tanh %157 : vector<8x128xf32>
    %159 = arith.mulf %154, %158 : vector<8x128xf32>
    %c56 = arith.constant 56 : index
    %c0_48 = arith.constant 0 : index
    %160 = vector.load %arg12[%c56, %c0_48] : memref<64x512xf32, #tpu.memory_space<vmem>>, vector<8x512xf32>
    %161 = arith.truncf %159 : vector<8x128xf32> to vector<8x128xbf16>
    %c0_49 = arith.constant 0 : index
    %c0_50 = arith.constant 0 : index
    %162 = vector.load %arg4[%c0_49, %c0_50] : memref<128x512xbf16, #tpu.memory_space<vmem>>, vector<128x512xbf16>
    %cst_51 = arith.constant dense<0.000000e+00> : vector<8x512xf32>
    %163 = tpu.matmul %161, %162, %cst_51 {dimension_numbers = #tpu.dot_dimension_numbers<[1], [0], [0], [1], [0, 0, 1, 1], [], []>} : vector<8x128xbf16>, vector<128x512xbf16>, vector<8x512xf32> -> vector<8x512xf32>
    %164 = arith.addf %160, %163 : vector<8x512xf32>
    %165 = vector.extract_strided_slice %164 {offsets = [0, 0], sizes = [8, 384], strides = [1, 1]} : vector<8x512xf32> to vector<8x384xf32>
    %166 = arith.negf %165 : vector<8x384xf32>
    %167 = math.exp %166 : vector<8x384xf32>
    %cst_52 = arith.constant 1.000000e+00 : f32
    %168 = vector.broadcast %cst_52 : f32 to vector<8x384xf32>
    %169 = arith.addf %168, %167 : vector<8x384xf32>
    %170 = arith.divf %168, %169 : vector<8x384xf32>
    %171 = vector.extract_strided_slice %164 {offsets = [0, 384], sizes = [8, 128], strides = [1, 1]} : vector<8x512xf32> to vector<8x128xf32>
    %172 = math.tanh %171 : vector<8x128xf32>
    %173 = vector.extract_strided_slice %170 {offsets = [0, 0], sizes = [8, 128], strides = [1, 1]} : vector<8x384xf32> to vector<8x128xf32>
    %174 = vector.extract_strided_slice %170 {offsets = [0, 128], sizes = [8, 128], strides = [1, 1]} : vector<8x384xf32> to vector<8x128xf32>
    %175 = vector.extract_strided_slice %170 {offsets = [0, 256], sizes = [8, 128], strides = [1, 1]} : vector<8x384xf32> to vector<8x128xf32>
    %176 = arith.mulf %174, %157 : vector<8x128xf32>
    %177 = arith.mulf %173, %172 : vector<8x128xf32>
    %178 = arith.addf %176, %177 : vector<8x128xf32>
    %179 = math.tanh %178 : vector<8x128xf32>
    %180 = arith.mulf %175, %179 : vector<8x128xf32>
    %cst_53 = arith.constant 0.000000e+00 : f32
    %181 = vector.broadcast %cst_53 : f32 to vector<8x128xf32>
    %182 = arith.maximumf %180, %181 : vector<8x128xf32>
    %183 = arith.truncf %182 : vector<8x128xf32> to vector<8x128xbf16>
    %c0_54 = arith.constant 0 : index
    %c0_55 = arith.constant 0 : index
    %184 = vector.load %arg6[%c0_54, %c0_55] : memref<128x512xbf16, #tpu.memory_space<vmem>>, vector<128x512xbf16>
    %cst_56 = arith.constant dense<0.000000e+00> : vector<8x512xf32>
    %185 = tpu.matmul %183, %184, %cst_56 {dimension_numbers = #tpu.dot_dimension_numbers<[1], [0], [0], [1], [0, 0, 1, 1], [], []>} : vector<8x128xbf16>, vector<128x512xbf16>, vector<8x512xf32> -> vector<8x512xf32>
    %c0_57 = arith.constant 0 : index
    %c0_58 = arith.constant 0 : index
    %186 = vector.load %arg8[%c0_57, %c0_58] : memref<1x512xf32, #tpu.memory_space<vmem>>, vector<1x512xf32>
    %187 = vector.broadcast %186 : vector<1x512xf32> to vector<8x512xf32>
    %188 = arith.addf %185, %187 : vector<8x512xf32>
    %cst_59 = arith.constant 0.000000e+00 : f32
    %189 = vector.broadcast %cst_59 : f32 to vector<8x128xf32>
    %cst_60 = arith.constant 0.000000e+00 : f32
    %190 = vector.broadcast %cst_60 : f32 to vector<8x128xf32>
    %191 = arith.truncf %189 : vector<8x128xf32> to vector<8x128xbf16>
    %c0_61 = arith.constant 0 : index
    %c0_62 = arith.constant 0 : index
    %192 = vector.load %arg7[%c0_61, %c0_62] : memref<128x512xbf16, #tpu.memory_space<vmem>>, vector<128x512xbf16>
    %cst_63 = arith.constant dense<0.000000e+00> : vector<8x512xf32>
    %193 = tpu.matmul %191, %192, %cst_63 {dimension_numbers = #tpu.dot_dimension_numbers<[1], [0], [0], [1], [0, 0, 1, 1], [], []>} : vector<8x128xbf16>, vector<128x512xbf16>, vector<8x512xf32> -> vector<8x512xf32>
    %194 = arith.addf %188, %193 : vector<8x512xf32>
    %195 = vector.extract_strided_slice %194 {offsets = [0, 0], sizes = [8, 384], strides = [1, 1]} : vector<8x512xf32> to vector<8x384xf32>
    %196 = arith.negf %195 : vector<8x384xf32>
    %197 = math.exp %196 : vector<8x384xf32>
    %cst_64 = arith.constant 1.000000e+00 : f32
    %198 = vector.broadcast %cst_64 : f32 to vector<8x384xf32>
    %199 = arith.addf %198, %197 : vector<8x384xf32>
    %200 = arith.divf %198, %199 : vector<8x384xf32>
    %201 = vector.extract_strided_slice %194 {offsets = [0, 384], sizes = [8, 128], strides = [1, 1]} : vector<8x512xf32> to vector<8x128xf32>
    %202 = math.tanh %201 : vector<8x128xf32>
    %203 = vector.extract_strided_slice %200 {offsets = [0, 0], sizes = [8, 128], strides = [1, 1]} : vector<8x384xf32> to vector<8x128xf32>
    %204 = vector.extract_strided_slice %200 {offsets = [0, 128], sizes = [8, 128], strides = [1, 1]} : vector<8x384xf32> to vector<8x128xf32>
    %205 = vector.extract_strided_slice %200 {offsets = [0, 256], sizes = [8, 128], strides = [1, 1]} : vector<8x384xf32> to vector<8x128xf32>
    %206 = arith.mulf %204, %190 : vector<8x128xf32>
    %207 = arith.mulf %203, %202 : vector<8x128xf32>
    %208 = arith.addf %206, %207 : vector<8x128xf32>
    %209 = math.tanh %208 : vector<8x128xf32>
    %210 = arith.mulf %205, %209 : vector<8x128xf32>
    %cst_65 = arith.constant 0.000000e+00 : f32
    %211 = vector.broadcast %cst_65 : f32 to vector<8x128xf32>
    %212 = arith.maximumf %210, %211 : vector<8x128xf32>
    %c0_66 = arith.constant 0 : index
    %c0_67 = arith.constant 0 : index
    %213 = vector.load %arg13[%c0_66, %c0_67] : memref<64x128xf32, #tpu.memory_space<vmem>>, vector<8x128xf32>
    tpu.vector_store %arg13[%c0_66, %c0_67], %212 {strides = array<i32>} : memref<64x128xf32, #tpu.memory_space<vmem>>, vector<8x128xf32>,
    %214 = arith.truncf %210 : vector<8x128xf32> to vector<8x128xbf16>
    %c0_68 = arith.constant 0 : index
    %c0_69 = arith.constant 0 : index
    %215 = vector.load %arg7[%c0_68, %c0_69] : memref<128x512xbf16, #tpu.memory_space<vmem>>, vector<128x512xbf16>
    %cst_70 = arith.constant dense<0.000000e+00> : vector<8x512xf32>
    %216 = tpu.matmul %214, %215, %cst_70 {dimension_numbers = #tpu.dot_dimension_numbers<[1], [0], [0], [1], [0, 0, 1, 1], [], []>} : vector<8x128xbf16>, vector<128x512xbf16>, vector<8x512xf32> -> vector<8x512xf32>
    %217 = arith.addf %188, %216 : vector<8x512xf32>
    %218 = vector.extract_strided_slice %217 {offsets = [0, 0], sizes = [8, 384], strides = [1, 1]} : vector<8x512xf32> to vector<8x384xf32>
    %219 = arith.negf %218 : vector<8x384xf32>
    %220 = math.exp %219 : vector<8x384xf32>
    %cst_71 = arith.constant 1.000000e+00 : f32
    %221 = vector.broadcast %cst_71 : f32 to vector<8x384xf32>
    %222 = arith.addf %221, %220 : vector<8x384xf32>
    %223 = arith.divf %221, %222 : vector<8x384xf32>
    %224 = vector.extract_strided_slice %217 {offsets = [0, 384], sizes = [8, 128], strides = [1, 1]} : vector<8x512xf32> to vector<8x128xf32>
    %225 = math.tanh %224 : vector<8x128xf32>
    %226 = vector.extract_strided_slice %223 {offsets = [0, 0], sizes = [8, 128], strides = [1, 1]} : vector<8x384xf32> to vector<8x128xf32>
    %227 = vector.extract_strided_slice %223 {offsets = [0, 128], sizes = [8, 128], strides = [1, 1]} : vector<8x384xf32> to vector<8x128xf32>
    %228 = vector.extract_strided_slice %223 {offsets = [0, 256], sizes = [8, 128], strides = [1, 1]} : vector<8x384xf32> to vector<8x128xf32>
    %229 = arith.mulf %227, %208 : vector<8x128xf32>
    %230 = arith.mulf %226, %225 : vector<8x128xf32>
    %231 = arith.addf %229, %230 : vector<8x128xf32>
    %232 = math.tanh %231 : vector<8x128xf32>
    %233 = arith.mulf %228, %232 : vector<8x128xf32>
    %cst_72 = arith.constant 0.000000e+00 : f32
    %234 = vector.broadcast %cst_72 : f32 to vector<8x128xf32>
    %235 = arith.maximumf %233, %234 : vector<8x128xf32>
    %c8_73 = arith.constant 8 : index
    %c0_74 = arith.constant 0 : index
    %236 = vector.load %arg13[%c8_73, %c0_74] : memref<64x128xf32, #tpu.memory_space<vmem>>, vector<8x128xf32>
    tpu.vector_store %arg13[%c8_73, %c0_74], %235 {strides = array<i32>} : memref<64x128xf32, #tpu.memory_space<vmem>>, vector<8x128xf32>,
    %237 = arith.truncf %233 : vector<8x128xf32> to vector<8x128xbf16>
    %c0_75 = arith.constant 0 : index
    %c0_76 = arith.constant 0 : index
    %238 = vector.load %arg7[%c0_75, %c0_76] : memref<128x512xbf16, #tpu.memory_space<vmem>>, vector<128x512xbf16>
    %cst_77 = arith.constant dense<0.000000e+00> : vector<8x512xf32>
    %239 = tpu.matmul %237, %238, %cst_77 {dimension_numbers = #tpu.dot_dimension_numbers<[1], [0], [0], [1], [0, 0, 1, 1], [], []>} : vector<8x128xbf16>, vector<128x512xbf16>, vector<8x512xf32> -> vector<8x512xf32>
    %240 = arith.addf %188, %239 : vector<8x512xf32>
    %241 = vector.extract_strided_slice %240 {offsets = [0, 0], sizes = [8, 384], strides = [1, 1]} : vector<8x512xf32> to vector<8x384xf32>
    %242 = arith.negf %241 : vector<8x384xf32>
    %243 = math.exp %242 : vector<8x384xf32>
    %cst_78 = arith.constant 1.000000e+00 : f32
    %244 = vector.broadcast %cst_78 : f32 to vector<8x384xf32>
    %245 = arith.addf %244, %243 : vector<8x384xf32>
    %246 = arith.divf %244, %245 : vector<8x384xf32>
    %247 = vector.extract_strided_slice %240 {offsets = [0, 384], sizes = [8, 128], strides = [1, 1]} : vector<8x512xf32> to vector<8x128xf32>
    %248 = math.tanh %247 : vector<8x128xf32>
    %249 = vector.extract_strided_slice %246 {offsets = [0, 0], sizes = [8, 128], strides = [1, 1]} : vector<8x384xf32> to vector<8x128xf32>
    %250 = vector.extract_strided_slice %246 {offsets = [0, 128], sizes = [8, 128], strides = [1, 1]} : vector<8x384xf32> to vector<8x128xf32>
    %251 = vector.extract_strided_slice %246 {offsets = [0, 256], sizes = [8, 128], strides = [1, 1]} : vector<8x384xf32> to vector<8x128xf32>
    %252 = arith.mulf %250, %231 : vector<8x128xf32>
    %253 = arith.mulf %249, %248 : vector<8x128xf32>
    %254 = arith.addf %252, %253 : vector<8x128xf32>
    %255 = math.tanh %254 : vector<8x128xf32>
    %256 = arith.mulf %251, %255 : vector<8x128xf32>
    %cst_79 = arith.constant 0.000000e+00 : f32
    %257 = vector.broadcast %cst_79 : f32 to vector<8x128xf32>
    %258 = arith.maximumf %256, %257 : vector<8x128xf32>
    %c16_80 = arith.constant 16 : index
    %c0_81 = arith.constant 0 : index
    %259 = vector.load %arg13[%c16_80, %c0_81] : memref<64x128xf32, #tpu.memory_space<vmem>>, vector<8x128xf32>
    tpu.vector_store %arg13[%c16_80, %c0_81], %258 {strides = array<i32>} : memref<64x128xf32, #tpu.memory_space<vmem>>, vector<8x128xf32>,
    %260 = arith.truncf %256 : vector<8x128xf32> to vector<8x128xbf16>
    %c0_82 = arith.constant 0 : index
    %c0_83 = arith.constant 0 : index
    %261 = vector.load %arg7[%c0_82, %c0_83] : memref<128x512xbf16, #tpu.memory_space<vmem>>, vector<128x512xbf16>
    %cst_84 = arith.constant dense<0.000000e+00> : vector<8x512xf32>
    %262 = tpu.matmul %260, %261, %cst_84 {dimension_numbers = #tpu.dot_dimension_numbers<[1], [0], [0], [1], [0, 0, 1, 1], [], []>} : vector<8x128xbf16>, vector<128x512xbf16>, vector<8x512xf32> -> vector<8x512xf32>
    %263 = arith.addf %188, %262 : vector<8x512xf32>
    %264 = vector.extract_strided_slice %263 {offsets = [0, 0], sizes = [8, 384], strides = [1, 1]} : vector<8x512xf32> to vector<8x384xf32>
    %265 = arith.negf %264 : vector<8x384xf32>
    %266 = math.exp %265 : vector<8x384xf32>
    %cst_85 = arith.constant 1.000000e+00 : f32
    %267 = vector.broadcast %cst_85 : f32 to vector<8x384xf32>
    %268 = arith.addf %267, %266 : vector<8x384xf32>
    %269 = arith.divf %267, %268 : vector<8x384xf32>
    %270 = vector.extract_strided_slice %263 {offsets = [0, 384], sizes = [8, 128], strides = [1, 1]} : vector<8x512xf32> to vector<8x128xf32>
    %271 = math.tanh %270 : vector<8x128xf32>
    %272 = vector.extract_strided_slice %269 {offsets = [0, 0], sizes = [8, 128], strides = [1, 1]} : vector<8x384xf32> to vector<8x128xf32>
    %273 = vector.extract_strided_slice %269 {offsets = [0, 128], sizes = [8, 128], strides = [1, 1]} : vector<8x384xf32> to vector<8x128xf32>
    %274 = vector.extract_strided_slice %269 {offsets = [0, 256], sizes = [8, 128], strides = [1, 1]} : vector<8x384xf32> to vector<8x128xf32>
    %275 = arith.mulf %273, %254 : vector<8x128xf32>
    %276 = arith.mulf %272, %271 : vector<8x128xf32>
    %277 = arith.addf %275, %276 : vector<8x128xf32>
    %278 = math.tanh %277 : vector<8x128xf32>
    %279 = arith.mulf %274, %278 : vector<8x128xf32>
    %cst_86 = arith.constant 0.000000e+00 : f32
    %280 = vector.broadcast %cst_86 : f32 to vector<8x128xf32>
    %281 = arith.maximumf %279, %280 : vector<8x128xf32>
    %c24_87 = arith.constant 24 : index
    %c0_88 = arith.constant 0 : index
    %282 = vector.load %arg13[%c24_87, %c0_88] : memref<64x128xf32, #tpu.memory_space<vmem>>, vector<8x128xf32>
    tpu.vector_store %arg13[%c24_87, %c0_88], %281 {strides = array<i32>} : memref<64x128xf32, #tpu.memory_space<vmem>>, vector<8x128xf32>,
    %283 = arith.truncf %279 : vector<8x128xf32> to vector<8x128xbf16>
    %c0_89 = arith.constant 0 : index
    %c0_90 = arith.constant 0 : index
    %284 = vector.load %arg7[%c0_89, %c0_90] : memref<128x512xbf16, #tpu.memory_space<vmem>>, vector<128x512xbf16>
    %cst_91 = arith.constant dense<0.000000e+00> : vector<8x512xf32>
    %285 = tpu.matmul %283, %284, %cst_91 {dimension_numbers = #tpu.dot_dimension_numbers<[1], [0], [0], [1], [0, 0, 1, 1], [], []>} : vector<8x128xbf16>, vector<128x512xbf16>, vector<8x512xf32> -> vector<8x512xf32>
    %286 = arith.addf %188, %285 : vector<8x512xf32>
    %287 = vector.extract_strided_slice %286 {offsets = [0, 0], sizes = [8, 384], strides = [1, 1]} : vector<8x512xf32> to vector<8x384xf32>
    %288 = arith.negf %287 : vector<8x384xf32>
    %289 = math.exp %288 : vector<8x384xf32>
    %cst_92 = arith.constant 1.000000e+00 : f32
    %290 = vector.broadcast %cst_92 : f32 to vector<8x384xf32>
    %291 = arith.addf %290, %289 : vector<8x384xf32>
    %292 = arith.divf %290, %291 : vector<8x384xf32>
    %293 = vector.extract_strided_slice %286 {offsets = [0, 384], sizes = [8, 128], strides = [1, 1]} : vector<8x512xf32> to vector<8x128xf32>
    %294 = math.tanh %293 : vector<8x128xf32>
    %295 = vector.extract_strided_slice %292 {offsets = [0, 0], sizes = [8, 128], strides = [1, 1]} : vector<8x384xf32> to vector<8x128xf32>
    %296 = vector.extract_strided_slice %292 {offsets = [0, 128], sizes = [8, 128], strides = [1, 1]} : vector<8x384xf32> to vector<8x128xf32>
    %297 = vector.extract_strided_slice %292 {offsets = [0, 256], sizes = [8, 128], strides = [1, 1]} : vector<8x384xf32> to vector<8x128xf32>
    %298 = arith.mulf %296, %277 : vector<8x128xf32>
    %299 = arith.mulf %295, %294 : vector<8x128xf32>
    %300 = arith.addf %298, %299 : vector<8x128xf32>
    %301 = math.tanh %300 : vector<8x128xf32>
    %302 = arith.mulf %297, %301 : vector<8x128xf32>
    %cst_93 = arith.constant 0.000000e+00 : f32
    %303 = vector.broadcast %cst_93 : f32 to vector<8x128xf32>
    %304 = arith.maximumf %302, %303 : vector<8x128xf32>
    %c32_94 = arith.constant 32 : index
    %c0_95 = arith.constant 0 : index
    %305 = vector.load %arg13[%c32_94, %c0_95] : memref<64x128xf32, #tpu.memory_space<vmem>>, vector<8x128xf32>
    tpu.vector_store %arg13[%c32_94, %c0_95], %304 {strides = array<i32>} : memref<64x128xf32, #tpu.memory_space<vmem>>, vector<8x128xf32>,
    %306 = arith.truncf %302 : vector<8x128xf32> to vector<8x128xbf16>
    %c0_96 = arith.constant 0 : index
    %c0_97 = arith.constant 0 : index
    %307 = vector.load %arg7[%c0_96, %c0_97] : memref<128x512xbf16, #tpu.memory_space<vmem>>, vector<128x512xbf16>
    %cst_98 = arith.constant dense<0.000000e+00> : vector<8x512xf32>
    %308 = tpu.matmul %306, %307, %cst_98 {dimension_numbers = #tpu.dot_dimension_numbers<[1], [0], [0], [1], [0, 0, 1, 1], [], []>} : vector<8x128xbf16>, vector<128x512xbf16>, vector<8x512xf32> -> vector<8x512xf32>
    %309 = arith.addf %188, %308 : vector<8x512xf32>
    %310 = vector.extract_strided_slice %309 {offsets = [0, 0], sizes = [8, 384], strides = [1, 1]} : vector<8x512xf32> to vector<8x384xf32>
    %311 = arith.negf %310 : vector<8x384xf32>
    %312 = math.exp %311 : vector<8x384xf32>
    %cst_99 = arith.constant 1.000000e+00 : f32
    %313 = vector.broadcast %cst_99 : f32 to vector<8x384xf32>
    %314 = arith.addf %313, %312 : vector<8x384xf32>
    %315 = arith.divf %313, %314 : vector<8x384xf32>
    %316 = vector.extract_strided_slice %309 {offsets = [0, 384], sizes = [8, 128], strides = [1, 1]} : vector<8x512xf32> to vector<8x128xf32>
    %317 = math.tanh %316 : vector<8x128xf32>
    %318 = vector.extract_strided_slice %315 {offsets = [0, 0], sizes = [8, 128], strides = [1, 1]} : vector<8x384xf32> to vector<8x128xf32>
    %319 = vector.extract_strided_slice %315 {offsets = [0, 128], sizes = [8, 128], strides = [1, 1]} : vector<8x384xf32> to vector<8x128xf32>
    %320 = vector.extract_strided_slice %315 {offsets = [0, 256], sizes = [8, 128], strides = [1, 1]} : vector<8x384xf32> to vector<8x128xf32>
    %321 = arith.mulf %319, %300 : vector<8x128xf32>
    %322 = arith.mulf %318, %317 : vector<8x128xf32>
    %323 = arith.addf %321, %322 : vector<8x128xf32>
    %324 = math.tanh %323 : vector<8x128xf32>
    %325 = arith.mulf %320, %324 : vector<8x128xf32>
    %cst_100 = arith.constant 0.000000e+00 : f32
    %326 = vector.broadcast %cst_100 : f32 to vector<8x128xf32>
    %327 = arith.maximumf %325, %326 : vector<8x128xf32>
    %c40_101 = arith.constant 40 : index
    %c0_102 = arith.constant 0 : index
    %328 = vector.load %arg13[%c40_101, %c0_102] : memref<64x128xf32, #tpu.memory_space<vmem>>, vector<8x128xf32>
    tpu.vector_store %arg13[%c40_101, %c0_102], %327 {strides = array<i32>} : memref<64x128xf32, #tpu.memory_space<vmem>>, vector<8x128xf32>,
    %329 = arith.truncf %325 : vector<8x128xf32> to vector<8x128xbf16>
    %c0_103 = arith.constant 0 : index
    %c0_104 = arith.constant 0 : index
    %330 = vector.load %arg7[%c0_103, %c0_104] : memref<128x512xbf16, #tpu.memory_space<vmem>>, vector<128x512xbf16>
    %cst_105 = arith.constant dense<0.000000e+00> : vector<8x512xf32>
    %331 = tpu.matmul %329, %330, %cst_105 {dimension_numbers = #tpu.dot_dimension_numbers<[1], [0], [0], [1], [0, 0, 1, 1], [], []>} : vector<8x128xbf16>, vector<128x512xbf16>, vector<8x512xf32> -> vector<8x512xf32>
    %332 = arith.addf %188, %331 : vector<8x512xf32>
    %333 = vector.extract_strided_slice %332 {offsets = [0, 0], sizes = [8, 384], strides = [1, 1]} : vector<8x512xf32> to vector<8x384xf32>
    %334 = arith.negf %333 : vector<8x384xf32>
    %335 = math.exp %334 : vector<8x384xf32>
    %cst_106 = arith.constant 1.000000e+00 : f32
    %336 = vector.broadcast %cst_106 : f32 to vector<8x384xf32>
    %337 = arith.addf %336, %335 : vector<8x384xf32>
    %338 = arith.divf %336, %337 : vector<8x384xf32>
    %339 = vector.extract_strided_slice %332 {offsets = [0, 384], sizes = [8, 128], strides = [1, 1]} : vector<8x512xf32> to vector<8x128xf32>
    %340 = math.tanh %339 : vector<8x128xf32>
    %341 = vector.extract_strided_slice %338 {offsets = [0, 0], sizes = [8, 128], strides = [1, 1]} : vector<8x384xf32> to vector<8x128xf32>
    %342 = vector.extract_strided_slice %338 {offsets = [0, 128], sizes = [8, 128], strides = [1, 1]} : vector<8x384xf32> to vector<8x128xf32>
    %343 = vector.extract_strided_slice %338 {offsets = [0, 256], sizes = [8, 128], strides = [1, 1]} : vector<8x384xf32> to vector<8x128xf32>
    %344 = arith.mulf %342, %323 : vector<8x128xf32>
    %345 = arith.mulf %341, %340 : vector<8x128xf32>
    %346 = arith.addf %344, %345 : vector<8x128xf32>
    %347 = math.tanh %346 : vector<8x128xf32>
    %348 = arith.mulf %343, %347 : vector<8x128xf32>
    %cst_107 = arith.constant 0.000000e+00 : f32
    %349 = vector.broadcast %cst_107 : f32 to vector<8x128xf32>
    %350 = arith.maximumf %348, %349 : vector<8x128xf32>
    %c48_108 = arith.constant 48 : index
    %c0_109 = arith.constant 0 : index
    %351 = vector.load %arg13[%c48_108, %c0_109] : memref<64x128xf32, #tpu.memory_space<vmem>>, vector<8x128xf32>
    tpu.vector_store %arg13[%c48_108, %c0_109], %350 {strides = array<i32>} : memref<64x128xf32, #tpu.memory_space<vmem>>, vector<8x128xf32>,
    %352 = arith.truncf %348 : vector<8x128xf32> to vector<8x128xbf16>
    %c0_110 = arith.constant 0 : index
    %c0_111 = arith.constant 0 : index
    %353 = vector.load %arg7[%c0_110, %c0_111] : memref<128x512xbf16, #tpu.memory_space<vmem>>, vector<128x512xbf16>
    %cst_112 = arith.constant dense<0.000000e+00> : vector<8x512xf32>
    %354 = tpu.matmul %352, %353, %cst_112 {dimension_numbers = #tpu.dot_dimension_numbers<[1], [0], [0], [1], [0, 0, 1, 1], [], []>} : vector<8x128xbf16>, vector<128x512xbf16>, vector<8x512xf32> -> vector<8x512xf32>
    %355 = arith.addf %188, %354 : vector<8x512xf32>
    %356 = vector.extract_strided_slice %355 {offsets = [0, 0], sizes = [8, 384], strides = [1, 1]} : vector<8x512xf32> to vector<8x384xf32>
    %357 = arith.negf %356 : vector<8x384xf32>
    %358 = math.exp %357 : vector<8x384xf32>
    %cst_113 = arith.constant 1.000000e+00 : f32
    %359 = vector.broadcast %cst_113 : f32 to vector<8x384xf32>
    %360 = arith.addf %359, %358 : vector<8x384xf32>
    %361 = arith.divf %359, %360 : vector<8x384xf32>
    %362 = vector.extract_strided_slice %355 {offsets = [0, 384], sizes = [8, 128], strides = [1, 1]} : vector<8x512xf32> to vector<8x128xf32>
    %363 = math.tanh %362 : vector<8x128xf32>
    %364 = vector.extract_strided_slice %361 {offsets = [0, 0], sizes = [8, 128], strides = [1, 1]} : vector<8x384xf32> to vector<8x128xf32>
    %365 = vector.extract_strided_slice %361 {offsets = [0, 128], sizes = [8, 128], strides = [1, 1]} : vector<8x384xf32> to vector<8x128xf32>
    %366 = vector.extract_strided_slice %361 {offsets = [0, 256], sizes = [8, 128], strides = [1, 1]} : vector<8x384xf32> to vector<8x128xf32>
    %367 = arith.mulf %365, %346 : vector<8x128xf32>
    %368 = arith.mulf %364, %363 : vector<8x128xf32>
    %369 = arith.addf %367, %368 : vector<8x128xf32>
    %370 = math.tanh %369 : vector<8x128xf32>
    %371 = arith.mulf %366, %370 : vector<8x128xf32>
    %cst_114 = arith.constant 0.000000e+00 : f32
    %372 = vector.broadcast %cst_114 : f32 to vector<8x128xf32>
    %373 = arith.maximumf %371, %372 : vector<8x128xf32>
    %c56_115 = arith.constant 56 : index
    %c0_116 = arith.constant 0 : index
    %374 = vector.load %arg13[%c56_115, %c0_116] : memref<64x128xf32, #tpu.memory_space<vmem>>, vector<8x128xf32>
    tpu.vector_store %arg13[%c56_115, %c0_116], %373 {strides = array<i32>} : memref<64x128xf32, #tpu.memory_space<vmem>>, vector<8x128xf32>,
    %c0_117 = arith.constant 0 : index
    %c0_118 = arith.constant 0 : index
    %375 = vector.load %arg2[%c0_117, %c0_118] : memref<16x64xbf16, #tpu.memory_space<vmem>>, vector<16x64xbf16>
    %c0_119 = arith.constant 0 : index
    %c0_120 = arith.constant 0 : index
    %376 = vector.load %arg13[%c0_119, %c0_120] : memref<64x128xf32, #tpu.memory_space<vmem>>, vector<64x128xf32>
    %377 = arith.truncf %376 : vector<64x128xf32> to vector<64x128xbf16>
    %cst_121 = arith.constant dense<0.000000e+00> : vector<16x128xf32>
    %378 = tpu.matmul %375, %377, %cst_121 {dimension_numbers = #tpu.dot_dimension_numbers<[1], [0], [0], [1], [0, 0, 1, 1], [], []>} : vector<16x64xbf16>, vector<64x128xbf16>, vector<16x128xf32> -> vector<16x128xf32>
    %379 = arith.truncf %378 : vector<16x128xf32> to vector<16x128xbf16>
    %c0_122 = arith.constant 0 : index
    %c0_123 = arith.constant 0 : index
    %380 = vector.load %arg9[%c0_122, %c0_123] : memref<128x4xbf16, #tpu.memory_space<vmem>>, vector<128x4xbf16>
    %cst_124 = arith.constant dense<0.000000e+00> : vector<16x4xf32>
    %381 = tpu.matmul %379, %380, %cst_124 {dimension_numbers = #tpu.dot_dimension_numbers<[1], [0], [0], [1], [0, 0, 1, 1], [], []>} : vector<16x128xbf16>, vector<128x4xbf16>, vector<16x4xf32> -> vector<16x4xf32>
    %c0_125 = arith.constant 0 : index
    %c0_126 = arith.constant 0 : index
    %382 = vector.load %arg10[%c0_125, %c0_126] : memref<1x4xf32, #tpu.memory_space<vmem>>, vector<1x4xf32>
    %383 = vector.broadcast %382 : vector<1x4xf32> to vector<16x4xf32>
    %384 = arith.addf %381, %383 : vector<16x4xf32>
    %c0_127 = arith.constant 0 : index
    %c0_128 = arith.constant 0 : index
    %385 = vector.load %arg11[%c0_127, %c0_128] : memref<16x4xf32, #tpu.memory_space<vmem>>, vector<16x4xf32>
    tpu.vector_store %arg11[%c0_127, %c0_128], %384 {strides = array<i32>} : memref<16x4xf32, #tpu.memory_space<vmem>>, vector<16x4xf32>,
    return
  }
}

</mosaic_0001>

<llo_original>
// kernel: recurrent_autoencoder_forward.1
$region0: #{recurrent_autoencoder_forward.1}
  #allocation0 [shape = 'u32[]', space=smem, size = 0x4, offset = 0x4, fixed_abs, tag = 'smem constant byte address 0x4 - core index']
  #allocation1 [shape = 'u32[144,128]{1,0:T(1,128)}', space=vmem, size = 0x12000, scoped, tag = 'internal scratch']
  #allocation2 [shape = 'f32[64,512]{1,0:T(8,128)}', space=vmem, size = 0x20000, scoped, tag = 'scratch operand']
  #allocation3 [shape = 'f32[64,128]{1,0:T(8,128)}', space=vmem, size = 0x8000, scoped, tag = 'scratch operand']
  %s0 = inlined_call_operand.vmem [shape: f32[16,4], index: 0, kind: input, shape index: {}]
  %s1 = inlined_call_operand.vmem [shape: bf16[64,16], index: 1, kind: input, shape index: {}]
  %s2 = inlined_call_operand.vmem [shape: bf16[16,64], index: 2, kind: input, shape index: {}]
  %s3 = inlined_call_operand.vmem [shape: bf16[4,512], index: 3, kind: input, shape index: {}]
  %s4 = inlined_call_operand.hbm [shape: bf16[128,512], index: 4, kind: input, shape index: {}]
  %s5 = inlined_call_operand.vmem [shape: f32[1,512], index: 5, kind: input, shape index: {}]
  %s6 = inlined_call_operand.hbm [shape: bf16[128,512], index: 6, kind: input, shape index: {}]
  %s7 = inlined_call_operand.hbm [shape: bf16[128,512], index: 7, kind: input, shape index: {}]
  %s8 = inlined_call_operand.vmem [shape: f32[1,512], index: 8, kind: input, shape index: {}]
  %s9 = inlined_call_operand.vmem [shape: bf16[128,4], index: 9, kind: input, shape index: {}]
  %s10 = inlined_call_operand.vmem [shape: f32[1,4], index: 10, kind: input, shape index: {}]
  %s11 = inlined_call_operand.vmem [shape: f32[16,4], index: 11, kind: output, shape index: {}]
  %s12 = sld [smem:[#allocation0]]
  $region66: #{recurrent_autoencoder_forward.1} parent=0
    _
  %s14 = ssub.s32 1, %s12
  %s15 = scalar_select 0, %s14, %s12
  $region1: #{recurrent_autoencoder_forward.1} parent=0
    #allocation4 [shape = 'u8[131072]{0}', space=vmem, size = 0x20000, scoped, tag = 'input window, operand 4, single buffered']
    #allocation5 [shape = 's32[1]{0}', space=sflag, size = 0x4, scoped, tag = 'scoped memory for recurrent_autoencoder_forward.1']
    #allocation6 [shape = 'u8[131072]{0}', space=vmem, size = 0x20000, scoped, tag = 'input window, operand 6, single buffered']
    #allocation7 [shape = 's32[1]{0}', space=sflag, size = 0x4, scoped, tag = 'scoped memory for recurrent_autoencoder_forward.1']
    #allocation8 [shape = 'u8[131072]{0}', space=vmem, size = 0x20000, scoped, tag = 'input window, operand 7, single buffered']
    %16 = vsyncpa [#allocation5], 0
    %17 = vsyncpa [#allocation7], 0
    // Predicated region
    $region2: #{recurrent_autoencoder_forward.1} parent=1 // pred_check
      _
    $region3: #{recurrent_autoencoder_forward.1} parent=1 // pred_check_branch
      %19 = sbr.rel (0) target = $region5
    $region4: #{recurrent_autoencoder_forward.1} parent=1 // pred_region
      _
    $region5: #{recurrent_autoencoder_forward.1} parent=1 // pred_fallthru
      _
    // Predicated region
    $region6: #{recurrent_autoencoder_forward.1} parent=1 // pred_check
      _
    $region7: #{recurrent_autoencoder_forward.1} parent=1 // pred_check_branch
      %21 = sbr.rel (0) target = $region9
    $region8: #{recurrent_autoencoder_forward.1} parent=1 // pred_region
      _
    $region9: #{recurrent_autoencoder_forward.1} parent=1 // pred_fallthru
      _
    // Predicated region
    $region10: #{recurrent_autoencoder_forward.1} parent=1 // pred_check
      _
    $region11: #{recurrent_autoencoder_forward.1} parent=1 // pred_check_branch
      %23 = sbr.rel (0) target = $region13
    $region12: #{recurrent_autoencoder_forward.1} parent=1 // pred_region
      _
    $region13: #{recurrent_autoencoder_forward.1} parent=1 // pred_fallthru
      _
    // Predicated region
    $region14: #{recurrent_autoencoder_forward.1} parent=1 // pred_check
      _
    $region15: #{recurrent_autoencoder_forward.1} parent=1 // pred_check_branch
      %25 = sbr.rel (0) target = $region17
    $region16: #{recurrent_autoencoder_forward.1} parent=1 // pred_region
      _
    $region17: #{recurrent_autoencoder_forward.1} parent=1 // pred_fallthru
      _
    // Predicated region
    $region18: #{recurrent_autoencoder_forward.1} parent=1 // pred_check
      _
    $region19: #{recurrent_autoencoder_forward.1} parent=1 // pred_check_branch
      %27 = sbr.rel (0) target = $region21
    $region20: #{recurrent_autoencoder_forward.1} parent=1 // pred_region
      %s29 = ssub.s32 4096, 4096
      %30 = vsyncadd [#allocation5], %s29
      %s31 = sshll.u32 [#allocation4], 4
      %s32 = int_to_ptr.vmem [resolvable:$true] %s31
      %37 = dma.hbm_to_vmem [thread:$0]  %s4, 4096, %s32, [#allocation5], 256, 256, 16
    $region21: #{recurrent_autoencoder_forward.1} parent=1 // pred_fallthru
      _
    // Predicated region
    $region22: #{recurrent_autoencoder_forward.1} parent=1 // pred_check
      _
    $region23: #{recurrent_autoencoder_forward.1} parent=1 // pred_check_branch
      %39 = sbr.rel (0) target = $region25
    $region24: #{recurrent_autoencoder_forward.1} parent=1 // pred_region
      _
    $region25: #{recurrent_autoencoder_forward.1} parent=1 // pred_fallthru
      _
    // Predicated region
    $region26: #{recurrent_autoencoder_forward.1} parent=1 // pred_check
      _
    $region27: #{recurrent_autoencoder_forward.1} parent=1 // pred_check_branch
      %41 = sbr.rel (0) target = $region29
    $region28: #{recurrent_autoencoder_forward.1} parent=1 // pred_region
      %s43 = ssub.s32 4096, 4096
      %44 = vsyncadd [#allocation7], %s43
      %s45 = sshll.u32 [#allocation6], 4
      %s46 = int_to_ptr.vmem [resolvable:$true] %s45
      %51 = dma.hbm_to_vmem [thread:$0]  %s6, 4096, %s46, [#allocation7], 256, 256, 16
    $region29: #{recurrent_autoencoder_forward.1} parent=1 // pred_fallthru
      _
    // Predicated region
    $region30: #{recurrent_autoencoder_forward.1} parent=1 // pred_check
      _
    $region31: #{recurrent_autoencoder_forward.1} parent=1 // pred_check_branch
      %53 = sbr.rel (0) target = $region33
    $region32: #{recurrent_autoencoder_forward.1} parent=1 // pred_region
      %s55 = ssub.s32 4096, 4096
      %56 = vsyncadd [#allocation7], %s55
      %s57 = sshll.u32 [#allocation8], 4
      %s58 = int_to_ptr.vmem [resolvable:$true] %s57
      %63 = dma.hbm_to_vmem [thread:$0]  %s7, 4096, %s58, [#allocation7], 256, 256, 16
    $region33: #{recurrent_autoencoder_forward.1} parent=1 // pred_fallthru
      _
    // Predicated region
    $region34: #{recurrent_autoencoder_forward.1} parent=1 // pred_check
      _
    $region35: #{recurrent_autoencoder_forward.1} parent=1 // pred_check_branch
      %65 = sbr.rel (0) target = $region37
    $region36: #{recurrent_autoencoder_forward.1} parent=1 // pred_region
      _
    $region37: #{recurrent_autoencoder_forward.1} parent=1 // pred_fallthru
      _
    // Predicated region
    $region38: #{recurrent_autoencoder_forward.1} parent=1 // pred_check
      _
    $region39: #{recurrent_autoencoder_forward.1} parent=1 // pred_check_branch
      %67 = sbr.rel (0) target = $region41
    $region40: #{recurrent_autoencoder_forward.1} parent=1 // pred_region
      _
    $region41: #{recurrent_autoencoder_forward.1} parent=1 // pred_fallthru
      _
    // Predicated region
    $region42: #{recurrent_autoencoder_forward.1} parent=1 // pred_check
      _
    $region43: #{recurrent_autoencoder_forward.1} parent=1 // pred_check_branch
      %69 = sbr.rel (0) target = $region45
    $region44: #{recurrent_autoencoder_forward.1} parent=1 // pred_region
      _
    $region45: #{recurrent_autoencoder_forward.1} parent=1 // pred_fallthru
      _
    // Predicated region
    $region46: #{recurrent_autoencoder_forward.1} parent=1 // pred_check
      _
    $region47: #{recurrent_autoencoder_forward.1} parent=1 // pred_check_branch
      %71 = sbr.rel (0) target = $region49
    $region48: #{recurrent_autoencoder_forward.1} parent=1 // pred_region
      %72 = dma.done [#allocation5], 4096
    $region49: #{recurrent_autoencoder_forward.1} parent=1 // pred_fallthru
      _
    // Predicated region
    $region50: #{recurrent_autoencoder_forward.1} parent=1 // pred_check
      _
    $region51: #{recurrent_autoencoder_forward.1} parent=1 // pred_check_branch
      %74 = sbr.rel (0) target = $region53
    $region52: #{recurrent_autoencoder_forward.1} parent=1 // pred_region
      %75 = dma.done [#allocation7], 4096
    $region53: #{recurrent_autoencoder_forward.1} parent=1 // pred_fallthru
      _
    // Predicated region
    $region54: #{recurrent_autoencoder_forward.1} parent=1 // pred_check
      _
    $region55: #{recurrent_autoencoder_forward.1} parent=1 // pred_check_branch
      %77 = sbr.rel (0) target = $region57
    $region56: #{recurrent_autoencoder_forward.1} parent=1 // pred_region
      %78 = dma.done [#allocation7], 4096
    $region57: #{recurrent_autoencoder_forward.1} parent=1 // pred_fallthru
      _
    %v80 = vld [vmem:[%s1] sm:$0xf]
    %v81 = vld [vmem:[%s1 + $0x4] sm:$0xf]
    %v82 = vld [vmem:[%s1 + $0x8] sm:$0xf]
    %v83 = vld [vmem:[%s1 + $0xc] sm:$0xf]
    %v84 = vld [vmem:[%s1 + $0x10] sm:$0xf]
    %v85 = vld [vmem:[%s1 + $0x14] sm:$0xf]
    %v86 = vld [vmem:[%s1 + $0x18] sm:$0xf]
    %v87 = vld [vmem:[%s1 + $0x1c] sm:$0xf]
    %v88 = vld [vmem:[%s0] sm:$0xff]
    %v89 = vld [vmem:[%s0 + $0x8] sm:$0xff]
    %v90 = vpack.c.bf16 %v89, %v88
    %v99 = vunpack.c.l.b16 %v80
    %v100 = vunpack.c.l.b16 %v81
    %v101 = vunpack.c.l.b16 %v82
    %v102 = vunpack.c.l.b16 %v83
    %v103 = vunpack.c.l.b16 %v84
    %v104 = vunpack.c.l.b16 %v85
    %v105 = vunpack.c.l.b16 %v86
    %v106 = vunpack.c.l.b16 %v87
    %v107 = vpack.c.b16 %v100, %v99
    %v108 = vpack.c.b16 %v102, %v101
    %v109 = vpack.c.b16 %v104, %v103
    %v110 = vpack.c.b16 %v106, %v105
    %vm111 = vcmask 130048
    %v113 = vsel %vm111, %v107, 0
    %v116 = vsel %vm111, %v108, 0
    %v119 = vsel %vm111, %v109, 0
    %v122 = vsel %vm111, %v110, 0
    %124 = vmatprep.subr.bf16.mxu0 0
    %125 = vmatpush1.bf16.msra.mxu0 %v90
    %126 = vmatprep.subr.bf16.mxu0 0
    %127 = vmatpush1.bf16.msra.mxu0 0
    %128 = vmatprep.subr.bf16.mxu0 0
    %129 = vmatpush1.bf16.msra.mxu0 0
    %130 = vmatprep.subr.bf16.mxu0 0
    %131 = vmatpush1.bf16.msra.mxu0 0
    %132 = vmatprep.subr.bf16.mxu0 0
    %133 = vmatpush1.bf16.msra.mxu0 0
    %134 = vmatprep.subr.bf16.mxu0 0
    %135 = vmatpush1.bf16.msra.mxu0 0
    %136 = vmatprep.subr.bf16.mxu0 0
    %137 = vmatpush1.bf16.msra.mxu0 0
    %138 = vmatprep.subr.bf16.mxu0 0
    %139 = vmatpush1.bf16.msra.mxu0 0
    %140 = vmatprep.subr.bf16.mxu0 0
    %141 = vmatpush1.bf16.msra.mxu0 0
    %142 = vmatprep.subr.bf16.mxu0 0
    %143 = vmatpush1.bf16.msra.mxu0 0
    %144 = vmatprep.subr.bf16.mxu0 0
    %145 = vmatpush1.bf16.msra.mxu0 0
    %146 = vmatprep.subr.bf16.mxu0 0
    %147 = vmatpush1.bf16.msra.mxu0 0
    %148 = vmatprep.subr.bf16.mxu0 0
    %149 = vmatpush1.bf16.msra.mxu0 0
    %150 = vmatprep.subr.bf16.mxu0 0
    %151 = vmatpush1.bf16.msra.mxu0 0
    %152 = vmatprep.subr.bf16.mxu0 0
    %153 = vmatpush1.bf16.msra.mxu0 0
    %154 = vmatprep.subr.bf16.mxu0 0
    %155 = vmatpush1.bf16.msra.mxu0 0
    %156 = vmatprep.mubr.bf16.mxu0 0
    %157 = vmatmul.mubr.bf16.gmra.mrb[0].mxu0 %v113
    %v158 = vpop.f32.mrb[0].mxu0
    %v159 = vadd.f32 0.0, %v158
    %v160 = vpop.f32.mrb[0].mxu0
    %v161 = vpop.f32.mrb[0].mxu0
    %v162 = vadd.f32 0.0, %v161
    %v163 = vpop.f32.mrb[0].mxu0
    %164 = vmatprep.mubr.bf16.mxu0 0
    %165 = vmatmul.mubr.bf16.gmra.mrb[0].mxu0 %v116
    %v166 = vpop.f32.mrb[0].mxu0
    %v167 = vadd.f32 0.0, %v166
    %v168 = vpop.f32.mrb[0].mxu0
    %v169 = vpop.f32.mrb[0].mxu0
    %v170 = vadd.f32 0.0, %v169
    %v171 = vpop.f32.mrb[0].mxu0
    %172 = vmatprep.mubr.bf16.mxu0 0
    %173 = vmatmul.mubr.bf16.gmra.mrb[0].mxu0 %v119
    %v174 = vpop.f32.mrb[0].mxu0
    %v175 = vadd.f32 0.0, %v174
    %v176 = vpop.f32.mrb[0].mxu0
    %v177 = vpop.f32.mrb[0].mxu0
    %v178 = vadd.f32 0.0, %v177
    %v179 = vpop.f32.mrb[0].mxu0
    %180 = vmatprep.mubr.bf16.mxu0 0
    %181 = vmatmul.mubr.bf16.gmra.mrb[0].mxu0 %v122
    %v182 = vpop.f32.mrb[0].mxu0
    %v183 = vadd.f32 0.0, %v182
    %v184 = vpop.f32.mrb[0].mxu0
    %v185 = vpop.f32.mrb[0].mxu0
    %v186 = vadd.f32 0.0, %v185
    %v187 = vpop.f32.mrb[0].mxu0
    %188 = vdwg.mxu0
    %v189 = vpack.c.bf16 %v162, %v159
    %v190 = vpack.c.bf16 %v170, %v167
    %v191 = vpack.c.bf16 %v178, %v175
    %v192 = vpack.c.bf16 %v186, %v183
    %v193 = vld [vmem:[%s3] sm:$0xff]
    %v194 = vld [vmem:[%s5] sm:$0xf]
    %v196 = vlaneseq
    %v197 = vshrl.u32 %v196, 7
    %v198 = vsub.s32 0, %v197
    %v199 = vrot.slane %v194, %v198
    %v200 = vlaneseq
    %v201 = vshrl.u32 %v200, 7
    %v202 = vsub.s32 1, %v201
    %v203 = vrot.slane %v194, %v202
    %v204 = vlaneseq
    %v205 = vshrl.u32 %v204, 7
    %v206 = vsub.s32 2, %v205
    %v207 = vrot.slane %v194, %v206
    %v208 = vlaneseq
    %v209 = vshrl.u32 %v208, 7
    %v210 = vsub.s32 3, %v209
    %v211 = vrot.slane %v194, %v210
    %v217 = vcombine.high %v193, %v193
    %v219 = vunpack.c.l.s4 1983009808
    %v220 = vunpack.c.0.s8 %v219
    %v221 = vlaneseq
    %v222 = vshrl.u32 %v221, 7
    %v223 = vsub.s32 %v220, %v222
    %v224 = vrot.slane %v193, %v223
    %v226 = vunpack.c.l.s4 1983009808
    %v227 = vunpack.c.0.s8 %v226
    %v228 = vlaneseq
    %v229 = vshrl.u32 %v228, 7
    %v230 = vsub.s32 %v227, %v229
    %v231 = vrot.slane %v217, %v230
    %v232 = vcombine.high %v224, %v224
    %v233 = vcombine.high %v231, %v231
    %vm234 = vcmask 31744
    %v236 = vsel %vm234, %v189, 0
    %v239 = vsel %vm234, %v190, 0
    %v242 = vsel %vm234, %v191, 0
    %v245 = vsel %vm234, %v192, 0
    %vm247 = vcmask 1041408
    %v249 = vsel %vm247, %v224, 0
    %v252 = vsel %vm247, %v232, 0
    %v255 = vsel %vm247, %v231, 0
    %v258 = vsel %vm247, %v233, 0
    %260 = vmatprep.subr.bf16.mxu0 %v252
    %261 = vmatpush1.bf16.msra.mxu0 %v249
    %262 = vmatprep.subr.bf16.mxu0 0
    %263 = vmatpush1.bf16.msra.mxu0 0
    %264 = vmatprep.subr.bf16.mxu0 0
    %265 = vmatpush1.bf16.msra.mxu0 0
    %266 = vmatprep.subr.bf16.mxu0 0
    %267 = vmatpush1.bf16.msra.mxu0 0
    %268 = vmatprep.subr.bf16.mxu0 0
    %269 = vmatpush1.bf16.msra.mxu0 0
    %270 = vmatprep.subr.bf16.mxu0 0
    %271 = vmatpush1.bf16.msra.mxu0 0
    %272 = vmatprep.subr.bf16.mxu0 0
    %273 = vmatpush1.bf16.msra.mxu0 0
    %274 = vmatprep.subr.bf16.mxu0 0
    %275 = vmatpush1.bf16.msra.mxu0 0
    %276 = vmatprep.subr.bf16.mxu0 0
    %277 = vmatpush1.bf16.msra.mxu0 0
    %278 = vmatprep.subr.bf16.mxu0 0
    %279 = vmatpush1.bf16.msra.mxu0 0
    %280 = vmatprep.subr.bf16.mxu0 0
    %281 = vmatpush1.bf16.msra.mxu0 0
    %282 = vmatprep.subr.bf16.mxu0 0
    %283 = vmatpush1.bf16.msra.mxu0 0
    %284 = vmatprep.subr.bf16.mxu0 0
    %285 = vmatpush1.bf16.msra.mxu0 0
    %286 = vmatprep.subr.bf16.mxu0 0
    %287 = vmatpush1.bf16.msra.mxu0 0
    %288 = vmatprep.subr.bf16.mxu0 0
    %289 = vmatpush1.bf16.msra.mxu0 0
    %290 = vmatprep.subr.bf16.mxu0 0
    %291 = vmatpush1.bf16.msra.mxu0 0
    %292 = vmatprep.mubr.bf16.mxu0 0
    %293 = vmatmul.mubr.bf16.gmra.mrb[0].mxu0 %v236
    %v294 = vpop.f32.mrb[0].mxu0
    %v295 = vadd.f32 %v199, %v294
    %v296 = vpop.f32.mrb[0].mxu0
    %v297 = vadd.f32 %v203, %v296
    %v298 = vpop.f32.mrb[0].mxu0
    %v299 = vadd.f32 %v199, %v298
    %v300 = vpop.f32.mrb[0].mxu0
    %v301 = vadd.f32 %v203, %v300
    %302 = vmatprep.mubr.bf16.mxu0 0
    %303 = vmatmul.mubr.bf16.gmra.mrb[0].mxu0 %v239
    %v304 = vpop.f32.mrb[0].mxu0
    %v305 = vadd.f32 %v199, %v304
    %v306 = vpop.f32.mrb[0].mxu0
    %v307 = vadd.f32 %v203, %v306
    %v308 = vpop.f32.mrb[0].mxu0
    %v309 = vadd.f32 %v199, %v308
    %v310 = vpop.f32.mrb[0].mxu0
    %v311 = vadd.f32 %v203, %v310
    %312 = vmatprep.mubr.bf16.mxu0 0
    %313 = vmatmul.mubr.bf16.gmra.mrb[0].mxu0 %v242
    %v314 = vpop.f32.mrb[0].mxu0
    %v315 = vadd.f32 %v199, %v314
    %v316 = vpop.f32.mrb[0].mxu0
    %v317 = vadd.f32 %v203, %v316
    %v318 = vpop.f32.mrb[0].mxu0
    %v319 = vadd.f32 %v199, %v318
    %v320 = vpop.f32.mrb[0].mxu0
    %v321 = vadd.f32 %v203, %v320
    %322 = vmatprep.mubr.bf16.mxu0 0
    %323 = vmatmul.mubr.bf16.gmra.mrb[0].mxu0 %v245
    %v324 = vpop.f32.mrb[0].mxu0
    %v325 = vadd.f32 %v199, %v324
    %v326 = vpop.f32.mrb[0].mxu0
    %v327 = vadd.f32 %v203, %v326
    %v328 = vpop.f32.mrb[0].mxu0
    %v329 = vadd.f32 %v199, %v328
    %v330 = vpop.f32.mrb[0].mxu0
    %v331 = vadd.f32 %v203, %v330
    %332 = vdwg.mxu0
    %333 = vmatprep.subr.bf16.mxu0 %v258
    %334 = vmatpush1.bf16.msra.mxu0 %v255
    %335 = vmatprep.subr.bf16.mxu0 0
    %336 = vmatpush1.bf16.msra.mxu0 0
    %337 = vmatprep.subr.bf16.mxu0 0
    %338 = vmatpush1.bf16.msra.mxu0 0
    %339 = vmatprep.subr.bf16.mxu0 0
    %340 = vmatpush1.bf16.msra.mxu0 0
    %341 = vmatprep.subr.bf16.mxu0 0
    %342 = vmatpush1.bf16.msra.mxu0 0
    %343 = vmatprep.subr.bf16.mxu0 0
    %344 = vmatpush1.bf16.msra.mxu0 0
    %345 = vmatprep.subr.bf16.mxu0 0
    %346 = vmatpush1.bf16.msra.mxu0 0
    %347 = vmatprep.subr.bf16.mxu0 0
    %348 = vmatpush1.bf16.msra.mxu0 0
    %349 = vmatprep.subr.bf16.mxu0 0
    %350 = vmatpush1.bf16.msra.mxu0 0
    %351 = vmatprep.subr.bf16.mxu0 0
    %352 = vmatpush1.bf16.msra.mxu0 0
    %353 = vmatprep.subr.bf16.mxu0 0
    %354 = vmatpush1.bf16.msra.mxu0 0
    %355 = vmatprep.subr.bf16.mxu0 0
    %356 = vmatpush1.bf16.msra.mxu0 0
    %357 = vmatprep.subr.bf16.mxu0 0
    %358 = vmatpush1.bf16.msra.mxu0 0
    %359 = vmatprep.subr.bf16.mxu0 0
    %360 = vmatpush1.bf16.msra.mxu0 0
    %361 = vmatprep.subr.bf16.mxu0 0
    %362 = vmatpush1.bf16.msra.mxu0 0
    %363 = vmatprep.subr.bf16.mxu0 0
    %364 = vmatpush1.bf16.msra.mxu0 0
    %365 = vmatprep.mubr.bf16.mxu0 0
    %366 = vmatmul.mubr.bf16.gmra.mrb[0].mxu0 %v236
    %v367 = vpop.f32.mrb[0].mxu0
    %v368 = vadd.f32 %v207, %v367
    %v369 = vpop.f32.mrb[0].mxu0
    %v370 = vadd.f32 %v211, %v369
    %v371 = vpop.f32.mrb[0].mxu0
    %v372 = vadd.f32 %v207, %v371
    %v373 = vpop.f32.mrb[0].mxu0
    %v374 = vadd.f32 %v211, %v373
    %375 = vmatprep.mubr.bf16.mxu0 0
    %376 = vmatmul.mubr.bf16.gmra.mrb[0].mxu0 %v239
    %v377 = vpop.f32.mrb[0].mxu0
    %v378 = vadd.f32 %v207, %v377
    %v379 = vpop.f32.mrb[0].mxu0
    %v380 = vadd.f32 %v211, %v379
    %v381 = vpop.f32.mrb[0].mxu0
    %v382 = vadd.f32 %v207, %v381
    %v383 = vpop.f32.mrb[0].mxu0
    %v384 = vadd.f32 %v211, %v383
    %385 = vmatprep.mubr.bf16.mxu0 0
    %386 = vmatmul.mubr.bf16.gmra.mrb[0].mxu0 %v242
    %v387 = vpop.f32.mrb[0].mxu0
    %v388 = vadd.f32 %v207, %v387
    %v389 = vpop.f32.mrb[0].mxu0
    %v390 = vadd.f32 %v211, %v389
    %v391 = vpop.f32.mrb[0].mxu0
    %v392 = vadd.f32 %v207, %v391
    %v393 = vpop.f32.mrb[0].mxu0
    %v394 = vadd.f32 %v211, %v393
    %395 = vmatprep.mubr.bf16.mxu0 0
    %396 = vmatmul.mubr.bf16.gmra.mrb[0].mxu0 %v245
    %v397 = vpop.f32.mrb[0].mxu0
    %v398 = vadd.f32 %v207, %v397
    %v399 = vpop.f32.mrb[0].mxu0
    %v400 = vadd.f32 %v211, %v399
    %v401 = vpop.f32.mrb[0].mxu0
    %v402 = vadd.f32 %v207, %v401
    %v403 = vpop.f32.mrb[0].mxu0
    %v404 = vadd.f32 %v211, %v403
    %405 = vdwg.mxu0
    %406 = vst [vmem:[#allocation2] sm:$0xff] %v295
    %407 = vst [vmem:[#allocation2 + $0x8] sm:$0xff] %v297
    %408 = vst [vmem:[#allocation2 + $0x10] sm:$0xff] %v368
    %409 = vst [vmem:[#allocation2 + $0x18] sm:$0xff] %v370
    %410 = vst [vmem:[#allocation2 + $0x20] sm:$0xff] %v299
    %411 = vst [vmem:[#allocation2 + $0x28] sm:$0xff] %v301
    %412 = vst [vmem:[#allocation2 + $0x30] sm:$0xff] %v372
    %413 = vst [vmem:[#allocation2 + $0x38] sm:$0xff] %v374
    %414 = vst [vmem:[#allocation2 + $0x40] sm:$0xff] %v305
    %415 = vst [vmem:[#allocation2 + $0x48] sm:$0xff] %v307
    %416 = vst [vmem:[#allocation2 + $0x50] sm:$0xff] %v378
    %417 = vst [vmem:[#allocation2 + $0x58] sm:$0xff] %v380
    %418 = vst [vmem:[#allocation2 + $0x60] sm:$0xff] %v309
    %419 = vst [vmem:[#allocation2 + $0x68] sm:$0xff] %v311
    %420 = vst [vmem:[#allocation2 + $0x70] sm:$0xff] %v382
    %421 = vst [vmem:[#allocation2 + $0x78] sm:$0xff] %v384
    %422 = vst [vmem:[#allocation2 + $0x80] sm:$0xff] %v315
    %423 = vst [vmem:[#allocation2 + $0x88] sm:$0xff] %v317
    %424 = vst [vmem:[#allocation2 + $0x90] sm:$0xff] %v388
    %425 = vst [vmem:[#allocation2 + $0x98] sm:$0xff] %v390
    %426 = vst [vmem:[#allocation2 + $0xa0] sm:$0xff] %v319
    %427 = vst [vmem:[#allocation2 + $0xa8] sm:$0xff] %v321
    %428 = vst [vmem:[#allocation2 + $0xb0] sm:$0xff] %v392
    %429 = vst [vmem:[#allocation2 + $0xb8] sm:$0xff] %v394
    %430 = vst [vmem:[#allocation2 + $0xc0] sm:$0xff] %v325
    %431 = vst [vmem:[#allocation2 + $0xc8] sm:$0xff] %v327
    %432 = vst [vmem:[#allocation2 + $0xd0] sm:$0xff] %v398
    %433 = vst [vmem:[#allocation2 + $0xd8] sm:$0xff] %v400
    %434 = vst [vmem:[#allocation2 + $0xe0] sm:$0xff] %v329
    %435 = vst [vmem:[#allocation2 + $0xe8] sm:$0xff] %v331
    %436 = vst [vmem:[#allocation2 + $0xf0] sm:$0xff] %v402
    %437 = vst [vmem:[#allocation2 + $0xf8] sm:$0xff] %v404
    %v438 = vld [vmem:[#allocation2] sm:$0xff]
    %v439 = vld [vmem:[#allocation2 + $0x8] sm:$0xff]
    %v440 = vld [vmem:[#allocation2 + $0x10] sm:$0xff]
    %v441 = vld [vmem:[#allocation2 + $0x18] sm:$0xff]
    %v442 = vld [vmem:[#allocation4] sm:$0xff]
    %v443 = vld [vmem:[#allocation4 + $0x8] sm:$0xff]
    %v444 = vld [vmem:[#allocation4 + $0x10] sm:$0xff]
    %v445 = vld [vmem:[#allocation4 + $0x18] sm:$0xff]
    %v446 = vld [vmem:[#allocation4 + $0x20] sm:$0xff]
    %v447 = vld [vmem:[#allocation4 + $0x28] sm:$0xff]
    %v448 = vld [vmem:[#allocation4 + $0x30] sm:$0xff]
    %v449 = vld [vmem:[#allocation4 + $0x38] sm:$0xff]
    %v450 = vld [vmem:[#allocation4 + $0x40] sm:$0xff]
    %v451 = vld [vmem:[#allocation4 + $0x48] sm:$0xff]
    %v452 = vld [vmem:[#allocation4 + $0x50] sm:$0xff]
    %v453 = vld [vmem:[#allocation4 + $0x58] sm:$0xff]
    %v454 = vld [vmem:[#allocation4 + $0x60] sm:$0xff]
    %v455 = vld [vmem:[#allocation4 + $0x68] sm:$0xff]
    %v456 = vld [vmem:[#allocation4 + $0x70] sm:$0xff]
    %v457 = vld [vmem:[#allocation4 + $0x78] sm:$0xff]
    %v458 = vld [vmem:[#allocation4 + $0x80] sm:$0xff]
    %v459 = vld [vmem:[#allocation4 + $0x88] sm:$0xff]
    %v460 = vld [vmem:[#allocation4 + $0x90] sm:$0xff]
    %v461 = vld [vmem:[#allocation4 + $0x98] sm:$0xff]
    %v462 = vld [vmem:[#allocation4 + $0xa0] sm:$0xff]
    %v463 = vld [vmem:[#allocation4 + $0xa8] sm:$0xff]
    %v464 = vld [vmem:[#allocation4 + $0xb0] sm:$0xff]
    %v465 = vld [vmem:[#allocation4 + $0xb8] sm:$0xff]
    %v466 = vld [vmem:[#allocation4 + $0xc0] sm:$0xff]
    %v467 = vld [vmem:[#allocation4 + $0xc8] sm:$0xff]
    %v468 = vld [vmem:[#allocation4 + $0xd0] sm:$0xff]
    %v469 = vld [vmem:[#allocation4 + $0xd8] sm:$0xff]
    %v470 = vld [vmem:[#allocation4 + $0xe0] sm:$0xff]
    %v471 = vld [vmem:[#allocation4 + $0xe8] sm:$0xff]
    %v472 = vld [vmem:[#allocation4 + $0xf0] sm:$0xff]
    %v473 = vld [vmem:[#allocation4 + $0xf8] sm:$0xff]
    %v506 = vunpack.c.l.b16 %v442
    %v507 = vunpack.c.h.b16 %v442
    %v508 = vunpack.c.l.b16 %v443
    %v509 = vunpack.c.h.b16 %v443
    %v510 = vunpack.c.l.b16 %v444
    %v511 = vunpack.c.h.b16 %v444
    %v512 = vunpack.c.l.b16 %v445
    %v513 = vunpack.c.h.b16 %v445
    %v514 = vunpack.c.l.b16 %v446
    %v515 = vunpack.c.h.b16 %v446
    %v516 = vunpack.c.l.b16 %v447
    %v517 = vunpack.c.h.b16 %v447
    %v518 = vunpack.c.l.b16 %v448
    %v519 = vunpack.c.h.b16 %v448
    %v520 = vunpack.c.l.b16 %v449
    %v521 = vunpack.c.h.b16 %v449
    %v522 = vunpack.c.l.b16 %v450
    %v523 = vunpack.c.h.b16 %v450
    %v524 = vunpack.c.l.b16 %v451
    %v525 = vunpack.c.h.b16 %v451
    %v526 = vunpack.c.l.b16 %v452
    %v527 = vunpack.c.h.b16 %v452
    %v528 = vunpack.c.l.b16 %v453
    %v529 = vunpack.c.h.b16 %v453
    %v530 = vunpack.c.l.b16 %v454
    %v531 = vunpack.c.h.b16 %v454
    %v532 = vunpack.c.l.b16 %v455
    %v533 = vunpack.c.h.b16 %v455
    %v534 = vunpack.c.l.b16 %v456
    %v535 = vunpack.c.h.b16 %v456
    %v536 = vunpack.c.l.b16 %v457
    %v537 = vunpack.c.h.b16 %v457
    %v538 = vunpack.c.l.b16 %v458
    %v539 = vunpack.c.h.b16 %v458
    %v540 = vunpack.c.l.b16 %v459
    %v541 = vunpack.c.h.b16 %v459
    %v542 = vunpack.c.l.b16 %v460
    %v543 = vunpack.c.h.b16 %v460
    %v544 = vunpack.c.l.b16 %v461
    %v545 = vunpack.c.h.b16 %v461
    %v546 = vunpack.c.l.b16 %v462
    %v547 = vunpack.c.h.b16 %v462
    %v548 = vunpack.c.l.b16 %v463
    %v549 = vunpack.c.h.b16 %v463
    %v550 = vunpack.c.l.b16 %v464
    %v551 = vunpack.c.h.b16 %v464
    %v552 = vunpack.c.l.b16 %v465
    %v553 = vunpack.c.h.b16 %v465
    %v554 = vunpack.c.l.b16 %v466
    %v555 = vunpack.c.h.b16 %v466
    %v556 = vunpack.c.l.b16 %v467
    %v557 = vunpack.c.h.b16 %v467
    %v558 = vunpack.c.l.b16 %v468
    %v559 = vunpack.c.h.b16 %v468
    %v560 = vunpack.c.l.b16 %v469
    %v561 = vunpack.c.h.b16 %v469
    %v562 = vunpack.c.l.b16 %v470
    %v563 = vunpack.c.h.b16 %v470
    %v564 = vunpack.c.l.b16 %v471
    %v565 = vunpack.c.h.b16 %v471
    %v566 = vunpack.c.l.b16 %v472
    %v567 = vunpack.c.h.b16 %v472
    %v568 = vunpack.c.l.b16 %v473
    %v569 = vunpack.c.h.b16 %v473
    %v570 = vpack.c.b16 %v510, %v506
    %v571 = vpack.c.b16 %v511, %v507
    %v572 = vpack.c.b16 %v512, %v508
    %v573 = vpack.c.b16 %v513, %v509
    %v574 = vpack.c.b16 %v518, %v514
    %v575 = vpack.c.b16 %v519, %v515
    %v576 = vpack.c.b16 %v520, %v516
    %v577 = vpack.c.b16 %v521, %v517
    %v578 = vpack.c.b16 %v526, %v522
    %v579 = vpack.c.b16 %v527, %v523
    %v580 = vpack.c.b16 %v528, %v524
    %v581 = vpack.c.b16 %v529, %v525
    %v582 = vpack.c.b16 %v534, %v530
    %v583 = vpack.c.b16 %v535, %v531
    %v584 = vpack.c.b16 %v536, %v532
    %v585 = vpack.c.b16 %v537, %v533
    %v586 = vpack.c.b16 %v542, %v538
    %v587 = vpack.c.b16 %v543, %v539
    %v588 = vpack.c.b16 %v544, %v540
    %v589 = vpack.c.b16 %v545, %v541
    %v590 = vpack.c.b16 %v550, %v546
    %v591 = vpack.c.b16 %v551, %v547
    %v592 = vpack.c.b16 %v552, %v548
    %v593 = vpack.c.b16 %v553, %v549
    %v594 = vpack.c.b16 %v558, %v554
    %v595 = vpack.c.b16 %v559, %v555
    %v596 = vpack.c.b16 %v560, %v556
    %v597 = vpack.c.b16 %v561, %v557
    %v598 = vpack.c.b16 %v566, %v562
    %v599 = vpack.c.b16 %v567, %v563
    %v600 = vpack.c.b16 %v568, %v564
    %v601 = vpack.c.b16 %v569, %v565
    %634 = vmatprep.subr.bf16.mxu0 %v571
    %635 = vmatpush1.bf16.msra.mxu0 %v570
    %636 = vmatprep.subr.bf16.mxu0 %v575
    %637 = vmatpush1.bf16.msra.mxu0 %v574
    %638 = vmatprep.subr.bf16.mxu0 %v579
    %639 = vmatpush1.bf16.msra.mxu0 %v578
    %640 = vmatprep.subr.bf16.mxu0 %v583
    %641 = vmatpush1.bf16.msra.mxu0 %v582
    %642 = vmatprep.subr.bf16.mxu0 %v587
    %643 = vmatpush1.bf16.msra.mxu0 %v586
    %644 = vmatprep.subr.bf16.mxu0 %v591
    %645 = vmatpush1.bf16.msra.mxu0 %v590
    %646 = vmatprep.subr.bf16.mxu0 %v595
    %647 = vmatpush1.bf16.msra.mxu0 %v594
    %648 = vmatprep.subr.bf16.mxu0 %v599
    %649 = vmatpush1.bf16.msra.mxu0 %v598
    %650 = vmatprep.subr.bf16.mxu0 0
    %651 = vmatpush1.bf16.msra.mxu0 0
    %652 = vmatprep.subr.bf16.mxu0 0
    %653 = vmatpush1.bf16.msra.mxu0 0
    %654 = vmatprep.subr.bf16.mxu0 0
    %655 = vmatpush1.bf16.msra.mxu0 0
    %656 = vmatprep.subr.bf16.mxu0 0
    %657 = vmatpush1.bf16.msra.mxu0 0
    %658 = vmatprep.subr.bf16.mxu0 0
    %659 = vmatpush1.bf16.msra.mxu0 0
    %660 = vmatprep.subr.bf16.mxu0 0
    %661 = vmatpush1.bf16.msra.mxu0 0
    %662 = vmatprep.subr.bf16.mxu0 0
    %663 = vmatpush1.bf16.msra.mxu0 0
    %664 = vmatprep.subr.bf16.mxu0 0
    %665 = vmatpush1.bf16.msra.mxu0 0
    %666 = vmatprep.mubr.bf16.mxu0 0
    %667 = vmatmul.mubr.bf16.gmra.mrb[0].mxu0 0
    %v668 = vpop.f32.mrb[0].mxu0
    %v669 = vadd.f32 0.0, %v668
    %v670 = vpop.f32.mrb[0].mxu0
    %v671 = vadd.f32 0.0, %v670
    %v672 = vpop.f32.mrb[0].mxu0
    %v673 = vpop.f32.mrb[0].mxu0
    %674 = vdwg.mxu0
    %675 = vmatprep.subr.bf16.mxu0 %v573
    %676 = vmatpush1.bf16.msra.mxu0 %v572
    %677 = vmatprep.subr.bf16.mxu0 %v577
    %678 = vmatpush1.bf16.msra.mxu0 %v576
    %679 = vmatprep.subr.bf16.mxu0 %v581
    %680 = vmatpush1.bf16.msra.mxu0 %v580
    %681 = vmatprep.subr.bf16.mxu0 %v585
    %682 = vmatpush1.bf16.msra.mxu0 %v584
    %683 = vmatprep.subr.bf16.mxu0 %v589
    %684 = vmatpush1.bf16.msra.mxu0 %v588
    %685 = vmatprep.subr.bf16.mxu0 %v593
    %686 = vmatpush1.bf16.msra.mxu0 %v592
    %687 = vmatprep.subr.bf16.mxu0 %v597
    %688 = vmatpush1.bf16.msra.mxu0 %v596
    %689 = vmatprep.subr.bf16.mxu0 %v601
    %690 = vmatpush1.bf16.msra.mxu0 %v600
    %691 = vmatprep.subr.bf16.mxu0 0
    %692 = vmatpush1.bf16.msra.mxu0 0
    %693 = vmatprep.subr.bf16.mxu0 0
    %694 = vmatpush1.bf16.msra.mxu0 0
    %695 = vmatprep.subr.bf16.mxu0 0
    %696 = vmatpush1.bf16.msra.mxu0 0
    %697 = vmatprep.subr.bf16.mxu0 0
    %698 = vmatpush1.bf16.msra.mxu0 0
    %699 = vmatprep.subr.bf16.mxu0 0
    %700 = vmatpush1.bf16.msra.mxu0 0
    %701 = vmatprep.subr.bf16.mxu0 0
    %702 = vmatpush1.bf16.msra.mxu0 0
    %703 = vmatprep.subr.bf16.mxu0 0
    %704 = vmatpush1.bf16.msra.mxu0 0
    %705 = vmatprep.subr.bf16.mxu0 0
    %706 = vmatpush1.bf16.msra.mxu0 0
    %707 = vmatprep.mubr.bf16.mxu0 0
    %708 = vmatmul.mubr.bf16.gmra.mrb[0].mxu0 0
    %v709 = vpop.f32.mrb[0].mxu0
    %v710 = vadd.f32 0.0, %v709
    %v711 = vpop.f32.mrb[0].mxu0
    %v712 = vadd.f32 0.0, %v711
    %v713 = vpop.f32.mrb[0].mxu0
    %v714 = vpop.f32.mrb[0].mxu0
    %715 = vdwg.mxu0
    %v716 = vadd.f32 %v438, %v669
    %v717 = vadd.f32 %v439, %v671
    %v718 = vadd.f32 %v440, %v710
    %v719 = vadd.f32 %v441, %v712
    %v720 = vxor.u32 %v716, 2147483648
    %v721 = vxor.u32 %v717, 2147483648
    %v722 = vxor.u32 %v718, 2147483648
    %v723 = vmul.f32 %v720, 1.442695
    %v724 = vpow.pop %v723
    %v725 = vmul.f32 %v721, 1.442695
    %v726 = vpow.pop %v725
    %v727 = vmul.f32 %v722, 1.442695
    %v728 = vpow.pop %v727
    %v729 = vadd.f32 %v724, 1.0
    %v730 = vadd.f32 %v726, 1.0
    %v731 = vadd.f32 %v728, 1.0
    %v732 = vrcp.pop %v729
    %v733 = vmul.f32 1.0, %v732
    %v734 = vrcp.pop %v730
    %v735 = vmul.f32 1.0, %v734
    %v736 = vrcp.pop %v731
    %v737 = vmul.f32 1.0, %v736
    %v738 = vtanh.pop %v719
    %v739 = vmul.f32 %v735, 0.0
    %v740 = vmul.f32 %v733, %v738
    %v741 = vadd.f32 %v739, %v740
    %v742 = vtanh.pop %v741
    %v743 = vmul.f32 %v737, %v742
    %v744 = vld [vmem:[#allocation2 + $0x20] sm:$0xff]
    %v745 = vld [vmem:[#allocation2 + $0x28] sm:$0xff]
    %v746 = vld [vmem:[#allocation2 + $0x30] sm:$0xff]
    %v747 = vld [vmem:[#allocation2 + $0x38] sm:$0xff]
    %v748 = vpack.c.bf16 %v743, %v743
    %749 = vmatprep.subr.bf16.mxu0 %v571
    %750 = vmatpush1.bf16.msra.mxu0 %v570
    %751 = vmatprep.subr.bf16.mxu0 %v575
    %752 = vmatpush1.bf16.msra.mxu0 %v574
    %753 = vmatprep.subr.bf16.mxu0 %v579
    %754 = vmatpush1.bf16.msra.mxu0 %v578
    %755 = vmatprep.subr.bf16.mxu0 %v583
    %756 = vmatpush1.bf16.msra.mxu0 %v582
    %757 = vmatprep.subr.bf16.mxu0 %v587
    %758 = vmatpush1.bf16.msra.mxu0 %v586
    %759 = vmatprep.subr.bf16.mxu0 %v591
    %760 = vmatpush1.bf16.msra.mxu0 %v590
    %761 = vmatprep.subr.bf16.mxu0 %v595
    %762 = vmatpush1.bf16.msra.mxu0 %v594
    %763 = vmatprep.subr.bf16.mxu0 %v599
    %764 = vmatpush1.bf16.msra.mxu0 %v598
    %765 = vmatprep.subr.bf16.mxu0 0
    %766 = vmatpush1.bf16.msra.mxu0 0
    %767 = vmatprep.subr.bf16.mxu0 0
    %768 = vmatpush1.bf16.msra.mxu0 0
    %769 = vmatprep.subr.bf16.mxu0 0
    %770 = vmatpush1.bf16.msra.mxu0 0
    %771 = vmatprep.subr.bf16.mxu0 0
    %772 = vmatpush1.bf16.msra.mxu0 0
    %773 = vmatprep.subr.bf16.mxu0 0
    %774 = vmatpush1.bf16.msra.mxu0 0
    %775 = vmatprep.subr.bf16.mxu0 0
    %776 = vmatpush1.bf16.msra.mxu0 0
    %777 = vmatprep.subr.bf16.mxu0 0
    %778 = vmatpush1.bf16.msra.mxu0 0
    %779 = vmatprep.subr.bf16.mxu0 0
    %780 = vmatpush1.bf16.msra.mxu0 0
    %781 = vmatprep.mubr.bf16.mxu0 0
    %782 = vmatmul.mubr.bf16.gmra.mrb[0].mxu0 %v748
    %v783 = vpop.f32.mrb[0].mxu0
    %v784 = vadd.f32 0.0, %v783
    %v785 = vpop.f32.mrb[0].mxu0
    %v786 = vadd.f32 0.0, %v785
    %v787 = vpop.f32.mrb[0].mxu0
    %v788 = vpop.f32.mrb[0].mxu0
    %789 = vdwg.mxu0
    %790 = vmatprep.subr.bf16.mxu0 %v573
    %791 = vmatpush1.bf16.msra.mxu0 %v572
    %792 = vmatprep.subr.bf16.mxu0 %v577
    %793 = vmatpush1.bf16.msra.mxu0 %v576
    %794 = vmatprep.subr.bf16.mxu0 %v581
    %795 = vmatpush1.bf16.msra.mxu0 %v580
    %796 = vmatprep.subr.bf16.mxu0 %v585
    %797 = vmatpush1.bf16.msra.mxu0 %v584
    %798 = vmatprep.subr.bf16.mxu0 %v589
    %799 = vmatpush1.bf16.msra.mxu0 %v588
    %800 = vmatprep.subr.bf16.mxu0 %v593
    %801 = vmatpush1.bf16.msra.mxu0 %v592
    %802 = vmatprep.subr.bf16.mxu0 %v597
    %803 = vmatpush1.bf16.msra.mxu0 %v596
    %804 = vmatprep.subr.bf16.mxu0 %v601
    %805 = vmatpush1.bf16.msra.mxu0 %v600
    %806 = vmatprep.subr.bf16.mxu0 0
    %807 = vmatpush1.bf16.msra.mxu0 0
    %808 = vmatprep.subr.bf16.mxu0 0
    %809 = vmatpush1.bf16.msra.mxu0 0
    %810 = vmatprep.subr.bf16.mxu0 0
    %811 = vmatpush1.bf16.msra.mxu0 0
    %812 = vmatprep.subr.bf16.mxu0 0
    %813 = vmatpush1.bf16.msra.mxu0 0
    %814 = vmatprep.subr.bf16.mxu0 0
    %815 = vmatpush1.bf16.msra.mxu0 0
    %816 = vmatprep.subr.bf16.mxu0 0
    %817 = vmatpush1.bf16.msra.mxu0 0
    %818 = vmatprep.subr.bf16.mxu0 0
    %819 = vmatpush1.bf16.msra.mxu0 0
    %820 = vmatprep.subr.bf16.mxu0 0
    %821 = vmatpush1.bf16.msra.mxu0 0
    %822 = vmatprep.mubr.bf16.mxu0 0
    %823 = vmatmul.mubr.bf16.gmra.mrb[0].mxu0 %v748
    %v824 = vpop.f32.mrb[0].mxu0
    %v825 = vadd.f32 0.0, %v824
    %v826 = vpop.f32.mrb[0].mxu0
    %v827 = vadd.f32 0.0, %v826
    %v828 = vpop.f32.mrb[0].mxu0
    %v829 = vpop.f32.mrb[0].mxu0
    %830 = vdwg.mxu0
    %v831 = vadd.f32 %v744, %v784
    %v832 = vadd.f32 %v745, %v786
    %v833 = vadd.f32 %v746, %v825
    %v834 = vadd.f32 %v747, %v827
    %v835 = vxor.u32 %v831, 2147483648
    %v836 = vxor.u32 %v832, 2147483648
    %v837 = vxor.u32 %v833, 2147483648
    %v838 = vmul.f32 %v835, 1.442695
    %v839 = vpow.pop %v838
    %v840 = vmul.f32 %v836, 1.442695
    %v841 = vpow.pop %v840
    %v842 = vmul.f32 %v837, 1.442695
    %v843 = vpow.pop %v842
    %v844 = vadd.f32 %v839, 1.0
    %v845 = vadd.f32 %v841, 1.0
    %v846 = vadd.f32 %v843, 1.0
    %v847 = vrcp.pop %v844
    %v848 = vmul.f32 1.0, %v847
    %v849 = vrcp.pop %v845
    %v850 = vmul.f32 1.0, %v849
    %v851 = vrcp.pop %v846
    %v852 = vmul.f32 1.0, %v851
    %v853 = vtanh.pop %v834
    %v854 = vmul.f32 %v850, %v741
    %v855 = vmul.f32 %v848, %v853
    %v856 = vadd.f32 %v854, %v855
    %v857 = vtanh.pop %v856
    %v858 = vmul.f32 %v852, %v857
    %v859 = vld [vmem:[#allocation2 + $0x40] sm:$0xff]
    %v860 = vld [vmem:[#allocation2 + $0x48] sm:$0xff]
    %v861 = vld [vmem:[#allocation2 + $0x50] sm:$0xff]
    %v862 = vld [vmem:[#allocation2 + $0x58] sm:$0xff]
    %v863 = vpack.c.bf16 %v858, %v858
    %864 = vmatprep.subr.bf16.mxu0 %v571
    %865 = vmatpush1.bf16.msra.mxu0 %v570
    %866 = vmatprep.subr.bf16.mxu0 %v575
    %867 = vmatpush1.bf16.msra.mxu0 %v574
    %868 = vmatprep.subr.bf16.mxu0 %v579
    %869 = vmatpush1.bf16.msra.mxu0 %v578
    %870 = vmatprep.subr.bf16.mxu0 %v583
    %871 = vmatpush1.bf16.msra.mxu0 %v582
    %872 = vmatprep.subr.bf16.mxu0 %v587
    %873 = vmatpush1.bf16.msra.mxu0 %v586
    %874 = vmatprep.subr.bf16.mxu0 %v591
    %875 = vmatpush1.bf16.msra.mxu0 %v590
    %876 = vmatprep.subr.bf16.mxu0 %v595
    %877 = vmatpush1.bf16.msra.mxu0 %v594
    %878 = vmatprep.subr.bf16.mxu0 %v599
    %879 = vmatpush1.bf16.msra.mxu0 %v598
    %880 = vmatprep.subr.bf16.mxu0 0
    %881 = vmatpush1.bf16.msra.mxu0 0
    %882 = vmatprep.subr.bf16.mxu0 0
    %883 = vmatpush1.bf16.msra.mxu0 0
    %884 = vmatprep.subr.bf16.mxu0 0
    %885 = vmatpush1.bf16.msra.mxu0 0
    %886 = vmatprep.subr.bf16.mxu0 0
    %887 = vmatpush1.bf16.msra.mxu0 0
    %888 = vmatprep.subr.bf16.mxu0 0
    %889 = vmatpush1.bf16.msra.mxu0 0
    %890 = vmatprep.subr.bf16.mxu0 0
    %891 = vmatpush1.bf16.msra.mxu0 0
    %892 = vmatprep.subr.bf16.mxu0 0
    %893 = vmatpush1.bf16.msra.mxu0 0
    %894 = vmatprep.subr.bf16.mxu0 0
    %895 = vmatpush1.bf16.msra.mxu0 0
    %896 = vmatprep.mubr.bf16.mxu0 0
    %897 = vmatmul.mubr.bf16.gmra.mrb[0].mxu0 %v863
    %v898 = vpop.f32.mrb[0].mxu0
    %v899 = vadd.f32 0.0, %v898
    %v900 = vpop.f32.mrb[0].mxu0
    %v901 = vadd.f32 0.0, %v900
    %v902 = vpop.f32.mrb[0].mxu0
    %v903 = vpop.f32.mrb[0].mxu0
    %904 = vdwg.mxu0
    %905 = vmatprep.subr.bf16.mxu0 %v573
    %906 = vmatpush1.bf16.msra.mxu0 %v572
    %907 = vmatprep.subr.bf16.mxu0 %v577
    %908 = vmatpush1.bf16.msra.mxu0 %v576
    %909 = vmatprep.subr.bf16.mxu0 %v581
    %910 = vmatpush1.bf16.msra.mxu0 %v580
    %911 = vmatprep.subr.bf16.mxu0 %v585
    %912 = vmatpush1.bf16.msra.mxu0 %v584
    %913 = vmatprep.subr.bf16.mxu0 %v589
    %914 = vmatpush1.bf16.msra.mxu0 %v588
    %915 = vmatprep.subr.bf16.mxu0 %v593
    %916 = vmatpush1.bf16.msra.mxu0 %v592
    %917 = vmatprep.subr.bf16.mxu0 %v597
    %918 = vmatpush1.bf16.msra.mxu0 %v596
    %919 = vmatprep.subr.bf16.mxu0 %v601
    %920 = vmatpush1.bf16.msra.mxu0 %v600
    %921 = vmatprep.subr.bf16.mxu0 0
    %922 = vmatpush1.bf16.msra.mxu0 0
    %923 = vmatprep.subr.bf16.mxu0 0
    %924 = vmatpush1.bf16.msra.mxu0 0
    %925 = vmatprep.subr.bf16.mxu0 0
    %926 = vmatpush1.bf16.msra.mxu0 0
    %927 = vmatprep.subr.bf16.mxu0 0
    %928 = vmatpush1.bf16.msra.mxu0 0
    %929 = vmatprep.subr.bf16.mxu0 0
    %930 = vmatpush1.bf16.msra.mxu0 0
    %931 = vmatprep.subr.bf16.mxu0 0
    %932 = vmatpush1.bf16.msra.mxu0 0
    %933 = vmatprep.subr.bf16.mxu0 0
    %934 = vmatpush1.bf16.msra.mxu0 0
    %935 = vmatprep.subr.bf16.mxu0 0
    %936 = vmatpush1.bf16.msra.mxu0 0
    %937 = vmatprep.mubr.bf16.mxu0 0
    %938 = vmatmul.mubr.bf16.gmra.mrb[0].mxu0 %v863
    %v939 = vpop.f32.mrb[0].mxu0
    %v940 = vadd.f32 0.0, %v939
    %v941 = vpop.f32.mrb[0].mxu0
    %v942 = vadd.f32 0.0, %v941
    %v943 = vpop.f32.mrb[0].mxu0
    %v944 = vpop.f32.mrb[0].mxu0
    %945 = vdwg.mxu0
    %v946 = vadd.f32 %v859, %v899
    %v947 = vadd.f32 %v860, %v901
    %v948 = vadd.f32 %v861, %v940
    %v949 = vadd.f32 %v862, %v942
    %v950 = vxor.u32 %v946, 2147483648
    %v951 = vxor.u32 %v947, 2147483648
    %v952 = vxor.u32 %v948, 2147483648
    %v953 = vmul.f32 %v950, 1.442695
    %v954 = vpow.pop %v953
    %v955 = vmul.f32 %v951, 1.442695
    %v956 = vpow.pop %v955
    %v957 = vmul.f32 %v952, 1.442695
    %v958 = vpow.pop %v957
    %v959 = vadd.f32 %v954, 1.0
    %v960 = vadd.f32 %v956, 1.0
    %v961 = vadd.f32 %v958, 1.0
    %v962 = vrcp.pop %v959
    %v963 = vmul.f32 1.0, %v962
    %v964 = vrcp.pop %v960
    %v965 = vmul.f32 1.0, %v964
    %v966 = vrcp.pop %v961
    %v967 = vmul.f32 1.0, %v966
    %v968 = vtanh.pop %v949
    %v969 = vmul.f32 %v965, %v856
    %v970 = vmul.f32 %v963, %v968
    %v971 = vadd.f32 %v969, %v970
    %v972 = vtanh.pop %v971
    %v973 = vmul.f32 %v967, %v972
    %v974 = vld [vmem:[#allocation2 + $0x60] sm:$0xff]
    %v975 = vld [vmem:[#allocation2 + $0x68] sm:$0xff]
    %v976 = vld [vmem:[#allocation2 + $0x70] sm:$0xff]
    %v977 = vld [vmem:[#allocation2 + $0x78] sm:$0xff]
    %v978 = vpack.c.bf16 %v973, %v973
    %979 = vmatprep.subr.bf16.mxu0 %v571
    %980 = vmatpush1.bf16.msra.mxu0 %v570
    %981 = vmatprep.subr.bf16.mxu0 %v575
    %982 = vmatpush1.bf16.msra.mxu0 %v574
    %983 = vmatprep.subr.bf16.mxu0 %v579
    %984 = vmatpush1.bf16.msra.mxu0 %v578
    %985 = vmatprep.subr.bf16.mxu0 %v583
    %986 = vmatpush1.bf16.msra.mxu0 %v582
    %987 = vmatprep.subr.bf16.mxu0 %v587
    %988 = vmatpush1.bf16.msra.mxu0 %v586
    %989 = vmatprep.subr.bf16.mxu0 %v591
    %990 = vmatpush1.bf16.msra.mxu0 %v590
    %991 = vmatprep.subr.bf16.mxu0 %v595
    %992 = vmatpush1.bf16.msra.mxu0 %v594
    %993 = vmatprep.subr.bf16.mxu0 %v599
    %994 = vmatpush1.bf16.msra.mxu0 %v598
    %995 = vmatprep.subr.bf16.mxu0 0
    %996 = vmatpush1.bf16.msra.mxu0 0
    %997 = vmatprep.subr.bf16.mxu0 0
    %998 = vmatpush1.bf16.msra.mxu0 0
    %999 = vmatprep.subr.bf16.mxu0 0
    %1000 = vmatpush1.bf16.msra.mxu0 0
    %1001 = vmatprep.subr.bf16.mxu0 0
    %1002 = vmatpush1.bf16.msra.mxu0 0
    %1003 = vmatprep.subr.bf16.mxu0 0
    %1004 = vmatpush1.bf16.msra.mxu0 0
    %1005 = vmatprep.subr.bf16.mxu0 0
    %1006 = vmatpush1.bf16.msra.mxu0 0
    %1007 = vmatprep.subr.bf16.mxu0 0
    %1008 = vmatpush1.bf16.msra.mxu0 0
    %1009 = vmatprep.subr.bf16.mxu0 0
    %1010 = vmatpush1.bf16.msra.mxu0 0
    %1011 = vmatprep.mubr.bf16.mxu0 0
    %1012 = vmatmul.mubr.bf16.gmra.mrb[0].mxu0 %v978
    %v1013 = vpop.f32.mrb[0].mxu0
    %v1014 = vadd.f32 0.0, %v1013
    %v1015 = vpop.f32.mrb[0].mxu0
    %v1016 = vadd.f32 0.0, %v1015
    %v1017 = vpop.f32.mrb[0].mxu0
    %v1018 = vpop.f32.mrb[0].mxu0
    %1019 = vdwg.mxu0
    %1020 = vmatprep.subr.bf16.mxu0 %v573
    %1021 = vmatpush1.bf16.msra.mxu0 %v572
    %1022 = vmatprep.subr.bf16.mxu0 %v577
    %1023 = vmatpush1.bf16.msra.mxu0 %v576
    %1024 = vmatprep.subr.bf16.mxu0 %v581
    %1025 = vmatpush1.bf16.msra.mxu0 %v580
    %1026 = vmatprep.subr.bf16.mxu0 %v585
    %1027 = vmatpush1.bf16.msra.mxu0 %v584
    %1028 = vmatprep.subr.bf16.mxu0 %v589
    %1029 = vmatpush1.bf16.msra.mxu0 %v588
    %1030 = vmatprep.subr.bf16.mxu0 %v593
    %1031 = vmatpush1.bf16.msra.mxu0 %v592
    %1032 = vmatprep.subr.bf16.mxu0 %v597
    %1033 = vmatpush1.bf16.msra.mxu0 %v596
    %1034 = vmatprep.subr.bf16.mxu0 %v601
    %1035 = vmatpush1.bf16.msra.mxu0 %v600
    %1036 = vmatprep.subr.bf16.mxu0 0
    %1037 = vmatpush1.bf16.msra.mxu0 0
    %1038 = vmatprep.subr.bf16.mxu0 0
    %1039 = vmatpush1.bf16.msra.mxu0 0
    %1040 = vmatprep.subr.bf16.mxu0 0
    %1041 = vmatpush1.bf16.msra.mxu0 0
    %1042 = vmatprep.subr.bf16.mxu0 0
    %1043 = vmatpush1.bf16.msra.mxu0 0
    %1044 = vmatprep.subr.bf16.mxu0 0
    %1045 = vmatpush1.bf16.msra.mxu0 0
    %1046 = vmatprep.subr.bf16.mxu0 0
    %1047 = vmatpush1.bf16.msra.mxu0 0
    %1048 = vmatprep.subr.bf16.mxu0 0
    %1049 = vmatpush1.bf16.msra.mxu0 0
    %1050 = vmatprep.subr.bf16.mxu0 0
    %1051 = vmatpush1.bf16.msra.mxu0 0
    %1052 = vmatprep.mubr.bf16.mxu0 0
    %1053 = vmatmul.mubr.bf16.gmra.mrb[0].mxu0 %v978
    %v1054 = vpop.f32.mrb[0].mxu0
    %v1055 = vadd.f32 0.0, %v1054
    %v1056 = vpop.f32.mrb[0].mxu0
    %v1057 = vadd.f32 0.0, %v1056
    %v1058 = vpop.f32.mrb[0].mxu0
    %v1059 = vpop.f32.mrb[0].mxu0
    %1060 = vdwg.mxu0
    %v1061 = vadd.f32 %v974, %v1014
    %v1062 = vadd.f32 %v975, %v1016
    %v1063 = vadd.f32 %v976, %v1055
    %v1064 = vadd.f32 %v977, %v1057
    %v1065 = vxor.u32 %v1061, 2147483648
    %v1066 = vxor.u32 %v1062, 2147483648
    %v1067 = vxor.u32 %v1063, 2147483648
    %v1068 = vmul.f32 %v1065, 1.442695
    %v1069 = vpow.pop %v1068
    %v1070 = vmul.f32 %v1066, 1.442695
    %v1071 = vpow.pop %v1070
    %v1072 = vmul.f32 %v1067, 1.442695
    %v1073 = vpow.pop %v1072
    %v1074 = vadd.f32 %v1069, 1.0
    %v1075 = vadd.f32 %v1071, 1.0
    %v1076 = vadd.f32 %v1073, 1.0
    %v1077 = vrcp.pop %v1074
    %v1078 = vmul.f32 1.0, %v1077
    %v1079 = vrcp.pop %v1075
    %v1080 = vmul.f32 1.0, %v1079
    %v1081 = vrcp.pop %v1076
    %v1082 = vmul.f32 1.0, %v1081
    %v1083 = vtanh.pop %v1064
    %v1084 = vmul.f32 %v1080, %v971
    %v1085 = vmul.f32 %v1078, %v1083
    %v1086 = vadd.f32 %v1084, %v1085
    %v1087 = vtanh.pop %v1086
    %v1088 = vmul.f32 %v1082, %v1087
    %v1089 = vld [vmem:[#allocation2 + $0x80] sm:$0xff]
    %v1090 = vld [vmem:[#allocation2 + $0x88] sm:$0xff]
    %v1091 = vld [vmem:[#allocation2 + $0x90] sm:$0xff]
    %v1092 = vld [vmem:[#allocation2 + $0x98] sm:$0xff]
    %v1093 = vpack.c.bf16 %v1088, %v1088
    %1094 = vmatprep.subr.bf16.mxu0 %v571
    %1095 = vmatpush1.bf16.msra.mxu0 %v570
    %1096 = vmatprep.subr.bf16.mxu0 %v575
    %1097 = vmatpush1.bf16.msra.mxu0 %v574
    %1098 = vmatprep.subr.bf16.mxu0 %v579
    %1099 = vmatpush1.bf16.msra.mxu0 %v578
    %1100 = vmatprep.subr.bf16.mxu0 %v583
    %1101 = vmatpush1.bf16.msra.mxu0 %v582
    %1102 = vmatprep.subr.bf16.mxu0 %v587
    %1103 = vmatpush1.bf16.msra.mxu0 %v586
    %1104 = vmatprep.subr.bf16.mxu0 %v591
    %1105 = vmatpush1.bf16.msra.mxu0 %v590
    %1106 = vmatprep.subr.bf16.mxu0 %v595
    %1107 = vmatpush1.bf16.msra.mxu0 %v594
    %1108 = vmatprep.subr.bf16.mxu0 %v599
    %1109 = vmatpush1.bf16.msra.mxu0 %v598
    %1110 = vmatprep.subr.bf16.mxu0 0
    %1111 = vmatpush1.bf16.msra.mxu0 0
    %1112 = vmatprep.subr.bf16.mxu0 0
    %1113 = vmatpush1.bf16.msra.mxu0 0
    %1114 = vmatprep.subr.bf16.mxu0 0
    %1115 = vmatpush1.bf16.msra.mxu0 0
    %1116 = vmatprep.subr.bf16.mxu0 0
    %1117 = vmatpush1.bf16.msra.mxu0 0
    %1118 = vmatprep.subr.bf16.mxu0 0
    %1119 = vmatpush1.bf16.msra.mxu0 0
    %1120 = vmatprep.subr.bf16.mxu0 0
    %1121 = vmatpush1.bf16.msra.mxu0 0
    %1122 = vmatprep.subr.bf16.mxu0 0
    %1123 = vmatpush1.bf16.msra.mxu0 0
    %1124 = vmatprep.subr.bf16.mxu0 0
    %1125 = vmatpush1.bf16.msra.mxu0 0
    %1126 = vmatprep.mubr.bf16.mxu0 0
    %1127 = vmatmul.mubr.bf16.gmra.mrb[0].mxu0 %v1093
    %v1128 = vpop.f32.mrb[0].mxu0
    %v1129 = vadd.f32 0.0, %v1128
    %v1130 = vpop.f32.mrb[0].mxu0
    %v1131 = vadd.f32 0.0, %v1130
    %v1132 = vpop.f32.mrb[0].mxu0
    %v1133 = vpop.f32.mrb[0].mxu0
    %1134 = vdwg.mxu0
    %1135 = vmatprep.subr.bf16.mxu0 %v573
    %1136 = vmatpush1.bf16.msra.mxu0 %v572
    %1137 = vmatprep.subr.bf16.mxu0 %v577
    %1138 = vmatpush1.bf16.msra.mxu0 %v576
    %1139 = vmatprep.subr.bf16.mxu0 %v581
    %1140 = vmatpush1.bf16.msra.mxu0 %v580
    %1141 = vmatprep.subr.bf16.mxu0 %v585
    %1142 = vmatpush1.bf16.msra.mxu0 %v584
    %1143 = vmatprep.subr.bf16.mxu0 %v589
    %1144 = vmatpush1.bf16.msra.mxu0 %v588
    %1145 = vmatprep.subr.bf16.mxu0 %v593
    %1146 = vmatpush1.bf16.msra.mxu0 %v592
    %1147 = vmatprep.subr.bf16.mxu0 %v597
    %1148 = vmatpush1.bf16.msra.mxu0 %v596
    %1149 = vmatprep.subr.bf16.mxu0 %v601
    %1150 = vmatpush1.bf16.msra.mxu0 %v600
    %1151 = vmatprep.subr.bf16.mxu0 0
    %1152 = vmatpush1.bf16.msra.mxu0 0
    %1153 = vmatprep.subr.bf16.mxu0 0
    %1154 = vmatpush1.bf16.msra.mxu0 0
    %1155 = vmatprep.subr.bf16.mxu0 0
    %1156 = vmatpush1.bf16.msra.mxu0 0
    %1157 = vmatprep.subr.bf16.mxu0 0
    %1158 = vmatpush1.bf16.msra.mxu0 0
    %1159 = vmatprep.subr.bf16.mxu0 0
    %1160 = vmatpush1.bf16.msra.mxu0 0
    %1161 = vmatprep.subr.bf16.mxu0 0
    %1162 = vmatpush1.bf16.msra.mxu0 0
    %1163 = vmatprep.subr.bf16.mxu0 0
    %1164 = vmatpush1.bf16.msra.mxu0 0
    %1165 = vmatprep.subr.bf16.mxu0 0
    %1166 = vmatpush1.bf16.msra.mxu0 0
    %1167 = vmatprep.mubr.bf16.mxu0 0
    %1168 = vmatmul.mubr.bf16.gmra.mrb[0].mxu0 %v1093
    %v1169 = vpop.f32.mrb[0].mxu0
    %v1170 = vadd.f32 0.0, %v1169
    %v1171 = vpop.f32.mrb[0].mxu0
    %v1172 = vadd.f32 0.0, %v1171
    %v1173 = vpop.f32.mrb[0].mxu0
    %v1174 = vpop.f32.mrb[0].mxu0
    %1175 = vdwg.mxu0
    %v1176 = vadd.f32 %v1089, %v1129
    %v1177 = vadd.f32 %v1090, %v1131
    %v1178 = vadd.f32 %v1091, %v1170
    %v1179 = vadd.f32 %v1092, %v1172
    %v1180 = vxor.u32 %v1176, 2147483648
    %v1181 = vxor.u32 %v1177, 2147483648
    %v1182 = vxor.u32 %v1178, 2147483648
    %v1183 = vmul.f32 %v1180, 1.442695
    %v1184 = vpow.pop %v1183
    %v1185 = vmul.f32 %v1181, 1.442695
    %v1186 = vpow.pop %v1185
    %v1187 = vmul.f32 %v1182, 1.442695
    %v1188 = vpow.pop %v1187
    %v1189 = vadd.f32 %v1184, 1.0
    %v1190 = vadd.f32 %v1186, 1.0
    %v1191 = vadd.f32 %v1188, 1.0
    %v1192 = vrcp.pop %v1189
    %v1193 = vmul.f32 1.0, %v1192
    %v1194 = vrcp.pop %v1190
    %v1195 = vmul.f32 1.0, %v1194
    %v1196 = vrcp.pop %v1191
    %v1197 = vmul.f32 1.0, %v1196
    %v1198 = vtanh.pop %v1179
    %v1199 = vmul.f32 %v1195, %v1086
    %v1200 = vmul.f32 %v1193, %v1198
    %v1201 = vadd.f32 %v1199, %v1200
    %v1202 = vtanh.pop %v1201
    %v1203 = vmul.f32 %v1197, %v1202
    %v1204 = vld [vmem:[#allocation2 + $0xa0] sm:$0xff]
    %v1205 = vld [vmem:[#allocation2 + $0xa8] sm:$0xff]
    %v1206 = vld [vmem:[#allocation2 + $0xb0] sm:$0xff]
    %v1207 = vld [vmem:[#allocation2 + $0xb8] sm:$0xff]
    %v1208 = vpack.c.bf16 %v1203, %v1203
    %1209 = vmatprep.subr.bf16.mxu0 %v571
    %1210 = vmatpush1.bf16.msra.mxu0 %v570
    %1211 = vmatprep.subr.bf16.mxu0 %v575
    %1212 = vmatpush1.bf16.msra.mxu0 %v574
    %1213 = vmatprep.subr.bf16.mxu0 %v579
    %1214 = vmatpush1.bf16.msra.mxu0 %v578
    %1215 = vmatprep.subr.bf16.mxu0 %v583
    %1216 = vmatpush1.bf16.msra.mxu0 %v582
    %1217 = vmatprep.subr.bf16.mxu0 %v587
    %1218 = vmatpush1.bf16.msra.mxu0 %v586
    %1219 = vmatprep.subr.bf16.mxu0 %v591
    %1220 = vmatpush1.bf16.msra.mxu0 %v590
    %1221 = vmatprep.subr.bf16.mxu0 %v595
    %1222 = vmatpush1.bf16.msra.mxu0 %v594
    %1223 = vmatprep.subr.bf16.mxu0 %v599
    %1224 = vmatpush1.bf16.msra.mxu0 %v598
    %1225 = vmatprep.subr.bf16.mxu0 0
    %1226 = vmatpush1.bf16.msra.mxu0 0
    %1227 = vmatprep.subr.bf16.mxu0 0
    %1228 = vmatpush1.bf16.msra.mxu0 0
    %1229 = vmatprep.subr.bf16.mxu0 0
    %1230 = vmatpush1.bf16.msra.mxu0 0
    %1231 = vmatprep.subr.bf16.mxu0 0
    %1232 = vmatpush1.bf16.msra.mxu0 0
    %1233 = vmatprep.subr.bf16.mxu0 0
    %1234 = vmatpush1.bf16.msra.mxu0 0
    %1235 = vmatprep.subr.bf16.mxu0 0
    %1236 = vmatpush1.bf16.msra.mxu0 0
    %1237 = vmatprep.subr.bf16.mxu0 0
    %1238 = vmatpush1.bf16.msra.mxu0 0
    %1239 = vmatprep.subr.bf16.mxu0 0
    %1240 = vmatpush1.bf16.msra.mxu0 0
    %1241 = vmatprep.mubr.bf16.mxu0 0
    %1242 = vmatmul.mubr.bf16.gmra.mrb[0].mxu0 %v1208
    %v1243 = vpop.f32.mrb[0].mxu0
    %v1244 = vadd.f32 0.0, %v1243
    %v1245 = vpop.f32.mrb[0].mxu0
    %v1246 = vadd.f32 0.0, %v1245
    %v1247 = vpop.f32.mrb[0].mxu0
    %v1248 = vpop.f32.mrb[0].mxu0
    %1249 = vdwg.mxu0
    %1250 = vmatprep.subr.bf16.mxu0 %v573
    %1251 = vmatpush1.bf16.msra.mxu0 %v572
    %1252 = vmatprep.subr.bf16.mxu0 %v577
    %1253 = vmatpush1.bf16.msra.mxu0 %v576
    %1254 = vmatprep.subr.bf16.mxu0 %v581
    %1255 = vmatpush1.bf16.msra.mxu0 %v580
    %1256 = vmatprep.subr.bf16.mxu0 %v585
    %1257 = vmatpush1.bf16.msra.mxu0 %v584
    %1258 = vmatprep.subr.bf16.mxu0 %v589
    %1259 = vmatpush1.bf16.msra.mxu0 %v588
    %1260 = vmatprep.subr.bf16.mxu0 %v593
    %1261 = vmatpush1.bf16.msra.mxu0 %v592
    %1262 = vmatprep.subr.bf16.mxu0 %v597
    %1263 = vmatpush1.bf16.msra.mxu0 %v596
    %1264 = vmatprep.subr.bf16.mxu0 %v601
    %1265 = vmatpush1.bf16.msra.mxu0 %v600
    %1266 = vmatprep.subr.bf16.mxu0 0
    %1267 = vmatpush1.bf16.msra.mxu0 0
    %1268 = vmatprep.subr.bf16.mxu0 0
    %1269 = vmatpush1.bf16.msra.mxu0 0
    %1270 = vmatprep.subr.bf16.mxu0 0
    %1271 = vmatpush1.bf16.msra.mxu0 0
    %1272 = vmatprep.subr.bf16.mxu0 0
    %1273 = vmatpush1.bf16.msra.mxu0 0
    %1274 = vmatprep.subr.bf16.mxu0 0
    %1275 = vmatpush1.bf16.msra.mxu0 0
    %1276 = vmatprep.subr.bf16.mxu0 0
    %1277 = vmatpush1.bf16.msra.mxu0 0
    %1278 = vmatprep.subr.bf16.mxu0 0
    %1279 = vmatpush1.bf16.msra.mxu0 0
    %1280 = vmatprep.subr.bf16.mxu0 0
    %1281 = vmatpush1.bf16.msra.mxu0 0
    %1282 = vmatprep.mubr.bf16.mxu0 0
    %1283 = vmatmul.mubr.bf16.gmra.mrb[0].mxu0 %v1208
    %v1284 = vpop.f32.mrb[0].mxu0
    %v1285 = vadd.f32 0.0, %v1284
    %v1286 = vpop.f32.mrb[0].mxu0
    %v1287 = vadd.f32 0.0, %v1286
    %v1288 = vpop.f32.mrb[0].mxu0
    %v1289 = vpop.f32.mrb[0].mxu0
    %1290 = vdwg.mxu0
    %v1291 = vadd.f32 %v1204, %v1244
    %v1292 = vadd.f32 %v1205, %v1246
    %v1293 = vadd.f32 %v1206, %v1285
    %v1294 = vadd.f32 %v1207, %v1287
    %v1295 = vxor.u32 %v1291, 2147483648
    %v1296 = vxor.u32 %v1292, 2147483648
    %v1297 = vxor.u32 %v1293, 2147483648
    %v1298 = vmul.f32 %v1295, 1.442695
    %v1299 = vpow.pop %v1298
    %v1300 = vmul.f32 %v1296, 1.442695
    %v1301 = vpow.pop %v1300
    %v1302 = vmul.f32 %v1297, 1.442695
    %v1303 = vpow.pop %v1302
    %v1304 = vadd.f32 %v1299, 1.0
    %v1305 = vadd.f32 %v1301, 1.0
    %v1306 = vadd.f32 %v1303, 1.0
    %v1307 = vrcp.pop %v1304
    %v1308 = vmul.f32 1.0, %v1307
    %v1309 = vrcp.pop %v1305
    %v1310 = vmul.f32 1.0, %v1309
    %v1311 = vrcp.pop %v1306
    %v1312 = vmul.f32 1.0, %v1311
    %v1313 = vtanh.pop %v1294
    %v1314 = vmul.f32 %v1310, %v1201
    %v1315 = vmul.f32 %v1308, %v1313
    %v1316 = vadd.f32 %v1314, %v1315
    %v1317 = vtanh.pop %v1316
    %v1318 = vmul.f32 %v1312, %v1317
    %v1319 = vld [vmem:[#allocation2 + $0xc0] sm:$0xff]
    %v1320 = vld [vmem:[#allocation2 + $0xc8] sm:$0xff]
    %v1321 = vld [vmem:[#allocation2 + $0xd0] sm:$0xff]
    %v1322 = vld [vmem:[#allocation2 + $0xd8] sm:$0xff]
    %v1323 = vpack.c.bf16 %v1318, %v1318
    %1324 = vmatprep.subr.bf16.mxu0 %v571
    %1325 = vmatpush1.bf16.msra.mxu0 %v570
    %1326 = vmatprep.subr.bf16.mxu0 %v575
    %1327 = vmatpush1.bf16.msra.mxu0 %v574
    %1328 = vmatprep.subr.bf16.mxu0 %v579
    %1329 = vmatpush1.bf16.msra.mxu0 %v578
    %1330 = vmatprep.subr.bf16.mxu0 %v583
    %1331 = vmatpush1.bf16.msra.mxu0 %v582
    %1332 = vmatprep.subr.bf16.mxu0 %v587
    %1333 = vmatpush1.bf16.msra.mxu0 %v586
    %1334 = vmatprep.subr.bf16.mxu0 %v591
    %1335 = vmatpush1.bf16.msra.mxu0 %v590
    %1336 = vmatprep.subr.bf16.mxu0 %v595
    %1337 = vmatpush1.bf16.msra.mxu0 %v594
    %1338 = vmatprep.subr.bf16.mxu0 %v599
    %1339 = vmatpush1.bf16.msra.mxu0 %v598
    %1340 = vmatprep.subr.bf16.mxu0 0
    %1341 = vmatpush1.bf16.msra.mxu0 0
    %1342 = vmatprep.subr.bf16.mxu0 0
    %1343 = vmatpush1.bf16.msra.mxu0 0
    %1344 = vmatprep.subr.bf16.mxu0 0
    %1345 = vmatpush1.bf16.msra.mxu0 0
    %1346 = vmatprep.subr.bf16.mxu0 0
    %1347 = vmatpush1.bf16.msra.mxu0 0
    %1348 = vmatprep.subr.bf16.mxu0 0
    %1349 = vmatpush1.bf16.msra.mxu0 0
    %1350 = vmatprep.subr.bf16.mxu0 0
    %1351 = vmatpush1.bf16.msra.mxu0 0
    %1352 = vmatprep.subr.bf16.mxu0 0
    %1353 = vmatpush1.bf16.msra.mxu0 0
    %1354 = vmatprep.subr.bf16.mxu0 0
    %1355 = vmatpush1.bf16.msra.mxu0 0
    %1356 = vmatprep.mubr.bf16.mxu0 0
    %1357 = vmatmul.mubr.bf16.gmra.mrb[0].mxu0 %v1323
    %v1358 = vpop.f32.mrb[0].mxu0
    %v1359 = vadd.f32 0.0, %v1358
    %v1360 = vpop.f32.mrb[0].mxu0
    %v1361 = vadd.f32 0.0, %v1360
    %v1362 = vpop.f32.mrb[0].mxu0
    %v1363 = vpop.f32.mrb[0].mxu0
    %1364 = vdwg.mxu0
    %1365 = vmatprep.subr.bf16.mxu0 %v573
    %1366 = vmatpush1.bf16.msra.mxu0 %v572
    %1367 = vmatprep.subr.bf16.mxu0 %v577
    %1368 = vmatpush1.bf16.msra.mxu0 %v576
    %1369 = vmatprep.subr.bf16.mxu0 %v581
    %1370 = vmatpush1.bf16.msra.mxu0 %v580
    %1371 = vmatprep.subr.bf16.mxu0 %v585
    %1372 = vmatpush1.bf16.msra.mxu0 %v584
    %1373 = vmatprep.subr.bf16.mxu0 %v589
    %1374 = vmatpush1.bf16.msra.mxu0 %v588
    %1375 = vmatprep.subr.bf16.mxu0 %v593
    %1376 = vmatpush1.bf16.msra.mxu0 %v592
    %1377 = vmatprep.subr.bf16.mxu0 %v597
    %1378 = vmatpush1.bf16.msra.mxu0 %v596
    %1379 = vmatprep.subr.bf16.mxu0 %v601
    %1380 = vmatpush1.bf16.msra.mxu0 %v600
    %1381 = vmatprep.subr.bf16.mxu0 0
    %1382 = vmatpush1.bf16.msra.mxu0 0
    %1383 = vmatprep.subr.bf16.mxu0 0
    %1384 = vmatpush1.bf16.msra.mxu0 0
    %1385 = vmatprep.subr.bf16.mxu0 0
    %1386 = vmatpush1.bf16.msra.mxu0 0
    %1387 = vmatprep.subr.bf16.mxu0 0
    %1388 = vmatpush1.bf16.msra.mxu0 0
    %1389 = vmatprep.subr.bf16.mxu0 0
    %1390 = vmatpush1.bf16.msra.mxu0 0
    %1391 = vmatprep.subr.bf16.mxu0 0
    %1392 = vmatpush1.bf16.msra.mxu0 0
    %1393 = vmatprep.subr.bf16.mxu0 0
    %1394 = vmatpush1.bf16.msra.mxu0 0
    %1395 = vmatprep.subr.bf16.mxu0 0
    %1396 = vmatpush1.bf16.msra.mxu0 0
    %1397 = vmatprep.mubr.bf16.mxu0 0
    %1398 = vmatmul.mubr.bf16.gmra.mrb[0].mxu0 %v1323
    %v1399 = vpop.f32.mrb[0].mxu0
    %v1400 = vadd.f32 0.0, %v1399
    %v1401 = vpop.f32.mrb[0].mxu0
    %v1402 = vadd.f32 0.0, %v1401
    %v1403 = vpop.f32.mrb[0].mxu0
    %v1404 = vpop.f32.mrb[0].mxu0
    %1405 = vdwg.mxu0
    %v1406 = vadd.f32 %v1319, %v1359
    %v1407 = vadd.f32 %v1320, %v1361
    %v1408 = vadd.f32 %v1321, %v1400
    %v1409 = vadd.f32 %v1322, %v1402
    %v1410 = vxor.u32 %v1406, 2147483648
    %v1411 = vxor.u32 %v1407, 2147483648
    %v1412 = vxor.u32 %v1408, 2147483648
    %v1413 = vmul.f32 %v1410, 1.442695
    %v1414 = vpow.pop %v1413
    %v1415 = vmul.f32 %v1411, 1.442695
    %v1416 = vpow.pop %v1415
    %v1417 = vmul.f32 %v1412, 1.442695
    %v1418 = vpow.pop %v1417
    %v1419 = vadd.f32 %v1414, 1.0
    %v1420 = vadd.f32 %v1416, 1.0
    %v1421 = vadd.f32 %v1418, 1.0
    %v1422 = vrcp.pop %v1419
    %v1423 = vmul.f32 1.0, %v1422
    %v1424 = vrcp.pop %v1420
    %v1425 = vmul.f32 1.0, %v1424
    %v1426 = vrcp.pop %v1421
    %v1427 = vmul.f32 1.0, %v1426
    %v1428 = vtanh.pop %v1409
    %v1429 = vmul.f32 %v1425, %v1316
    %v1430 = vmul.f32 %v1423, %v1428
    %v1431 = vadd.f32 %v1429, %v1430
    %v1432 = vtanh.pop %v1431
    %v1433 = vmul.f32 %v1427, %v1432
    %v1434 = vld [vmem:[#allocation2 + $0xe0] sm:$0xff]
    %v1435 = vld [vmem:[#allocation2 + $0xe8] sm:$0xff]
    %v1436 = vld [vmem:[#allocation2 + $0xf0] sm:$0xff]
    %v1437 = vld [vmem:[#allocation2 + $0xf8] sm:$0xff]
    %v1438 = vpack.c.bf16 %v1433, %v1433
    %1439 = vmatprep.subr.bf16.mxu0 %v571
    %1440 = vmatpush1.bf16.msra.mxu0 %v570
    %1441 = vmatprep.subr.bf16.mxu0 %v575
    %1442 = vmatpush1.bf16.msra.mxu0 %v574
    %1443 = vmatprep.subr.bf16.mxu0 %v579
    %1444 = vmatpush1.bf16.msra.mxu0 %v578
    %1445 = vmatprep.subr.bf16.mxu0 %v583
    %1446 = vmatpush1.bf16.msra.mxu0 %v582
    %1447 = vmatprep.subr.bf16.mxu0 %v587
    %1448 = vmatpush1.bf16.msra.mxu0 %v586
    %1449 = vmatprep.subr.bf16.mxu0 %v591
    %1450 = vmatpush1.bf16.msra.mxu0 %v590
    %1451 = vmatprep.subr.bf16.mxu0 %v595
    %1452 = vmatpush1.bf16.msra.mxu0 %v594
    %1453 = vmatprep.subr.bf16.mxu0 %v599
    %1454 = vmatpush1.bf16.msra.mxu0 %v598
    %1455 = vmatprep.subr.bf16.mxu0 0
    %1456 = vmatpush1.bf16.msra.mxu0 0
    %1457 = vmatprep.subr.bf16.mxu0 0
    %1458 = vmatpush1.bf16.msra.mxu0 0
    %1459 = vmatprep.subr.bf16.mxu0 0
    %1460 = vmatpush1.bf16.msra.mxu0 0
    %1461 = vmatprep.subr.bf16.mxu0 0
    %1462 = vmatpush1.bf16.msra.mxu0 0
    %1463 = vmatprep.subr.bf16.mxu0 0
    %1464 = vmatpush1.bf16.msra.mxu0 0
    %1465 = vmatprep.subr.bf16.mxu0 0
    %1466 = vmatpush1.bf16.msra.mxu0 0
    %1467 = vmatprep.subr.bf16.mxu0 0
    %1468 = vmatpush1.bf16.msra.mxu0 0
    %1469 = vmatprep.subr.bf16.mxu0 0
    %1470 = vmatpush1.bf16.msra.mxu0 0
    %1471 = vmatprep.mubr.bf16.mxu0 0
    %1472 = vmatmul.mubr.bf16.gmra.mrb[0].mxu0 %v1438
    %v1473 = vpop.f32.mrb[0].mxu0
    %v1474 = vadd.f32 0.0, %v1473
    %v1475 = vpop.f32.mrb[0].mxu0
    %v1476 = vadd.f32 0.0, %v1475
    %v1477 = vpop.f32.mrb[0].mxu0
    %v1478 = vpop.f32.mrb[0].mxu0
    %1479 = vdwg.mxu0
    %1480 = vmatprep.subr.bf16.mxu0 %v573
    %1481 = vmatpush1.bf16.msra.mxu0 %v572
    %1482 = vmatprep.subr.bf16.mxu0 %v577
    %1483 = vmatpush1.bf16.msra.mxu0 %v576
    %1484 = vmatprep.subr.bf16.mxu0 %v581
    %1485 = vmatpush1.bf16.msra.mxu0 %v580
    %1486 = vmatprep.subr.bf16.mxu0 %v585
    %1487 = vmatpush1.bf16.msra.mxu0 %v584
    %1488 = vmatprep.subr.bf16.mxu0 %v589
    %1489 = vmatpush1.bf16.msra.mxu0 %v588
    %1490 = vmatprep.subr.bf16.mxu0 %v593
    %1491 = vmatpush1.bf16.msra.mxu0 %v592
    %1492 = vmatprep.subr.bf16.mxu0 %v597
    %1493 = vmatpush1.bf16.msra.mxu0 %v596
    %1494 = vmatprep.subr.bf16.mxu0 %v601
    %1495 = vmatpush1.bf16.msra.mxu0 %v600
    %1496 = vmatprep.subr.bf16.mxu0 0
    %1497 = vmatpush1.bf16.msra.mxu0 0
    %1498 = vmatprep.subr.bf16.mxu0 0
    %1499 = vmatpush1.bf16.msra.mxu0 0
    %1500 = vmatprep.subr.bf16.mxu0 0
    %1501 = vmatpush1.bf16.msra.mxu0 0
    %1502 = vmatprep.subr.bf16.mxu0 0
    %1503 = vmatpush1.bf16.msra.mxu0 0
    %1504 = vmatprep.subr.bf16.mxu0 0
    %1505 = vmatpush1.bf16.msra.mxu0 0
    %1506 = vmatprep.subr.bf16.mxu0 0
    %1507 = vmatpush1.bf16.msra.mxu0 0
    %1508 = vmatprep.subr.bf16.mxu0 0
    %1509 = vmatpush1.bf16.msra.mxu0 0
    %1510 = vmatprep.subr.bf16.mxu0 0
    %1511 = vmatpush1.bf16.msra.mxu0 0
    %1512 = vmatprep.mubr.bf16.mxu0 0
    %1513 = vmatmul.mubr.bf16.gmra.mrb[0].mxu0 %v1438
    %v1514 = vpop.f32.mrb[0].mxu0
    %v1515 = vadd.f32 0.0, %v1514
    %v1516 = vpop.f32.mrb[0].mxu0
    %v1517 = vadd.f32 0.0, %v1516
    %v1518 = vpop.f32.mrb[0].mxu0
    %v1519 = vpop.f32.mrb[0].mxu0
    %1520 = vdwg.mxu0
    %v1521 = vadd.f32 %v1434, %v1474
    %v1522 = vadd.f32 %v1435, %v1476
    %v1523 = vadd.f32 %v1436, %v1515
    %v1524 = vadd.f32 %v1437, %v1517
    %v1525 = vxor.u32 %v1521, 2147483648
    %v1526 = vxor.u32 %v1522, 2147483648
    %v1527 = vxor.u32 %v1523, 2147483648
    %v1528 = vmul.f32 %v1525, 1.442695
    %v1529 = vpow.pop %v1528
    %v1530 = vmul.f32 %v1526, 1.442695
    %v1531 = vpow.pop %v1530
    %v1532 = vmul.f32 %v1527, 1.442695
    %v1533 = vpow.pop %v1532
    %v1534 = vadd.f32 %v1529, 1.0
    %v1535 = vadd.f32 %v1531, 1.0
    %v1536 = vadd.f32 %v1533, 1.0
    %v1537 = vrcp.pop %v1534
    %v1538 = vmul.f32 1.0, %v1537
    %v1539 = vrcp.pop %v1535
    %v1540 = vmul.f32 1.0, %v1539
    %v1541 = vrcp.pop %v1536
    %v1542 = vmul.f32 1.0, %v1541
    %v1543 = vtanh.pop %v1524
    %v1544 = vmul.f32 %v1540, %v1431
    %v1545 = vmul.f32 %v1538, %v1543
    %v1546 = vadd.f32 %v1544, %v1545
    %v1547 = vtanh.pop %v1546
    %v1548 = vmul.f32 %v1542, %v1547
    %v1549 = vmax.f32 %v1548, 0.0
    %v1550 = vpack.c.bf16 %v1549, %v1549
    %v1551 = vld [vmem:[#allocation6] sm:$0xff]
    %v1552 = vld [vmem:[#allocation6 + $0x8] sm:$0xff]
    %v1553 = vld [vmem:[#allocation6 + $0x10] sm:$0xff]
    %v1554 = vld [vmem:[#allocation6 + $0x18] sm:$0xff]
    %v1555 = vld [vmem:[#allocation6 + $0x20] sm:$0xff]
    %v1556 = vld [vmem:[#allocation6 + $0x28] sm:$0xff]
    %v1557 = vld [vmem:[#allocation6 + $0x30] sm:$0xff]
    %v1558 = vld [vmem:[#allocation6 + $0x38] sm:$0xff]
    %v1559 = vld [vmem:[#allocation6 + $0x40] sm:$0xff]
    %v1560 = vld [vmem:[#allocation6 + $0x48] sm:$0xff]
    %v1561 = vld [vmem:[#allocation6 + $0x50] sm:$0xff]
    %v1562 = vld [vmem:[#allocation6 + $0x58] sm:$0xff]
    %v1563 = vld [vmem:[#allocation6 + $0x60] sm:$0xff]
    %v1564 = vld [vmem:[#allocation6 + $0x68] sm:$0xff]
    %v1565 = vld [vmem:[#allocation6 + $0x70] sm:$0xff]
    %v1566 = vld [vmem:[#allocation6 + $0x78] sm:$0xff]
    %v1567 = vld [vmem:[#allocation6 + $0x80] sm:$0xff]
    %v1568 = vld [vmem:[#allocation6 + $0x88] sm:$0xff]
    %v1569 = vld [vmem:[#allocation6 + $0x90] sm:$0xff]
    %v1570 = vld [vmem:[#allocation6 + $0x98] sm:$0xff]
    %v1571 = vld [vmem:[#allocation6 + $0xa0] sm:$0xff]
    %v1572 = vld [vmem:[#allocation6 + $0xa8] sm:$0xff]
    %v1573 = vld [vmem:[#allocation6 + $0xb0] sm:$0xff]
    %v1574 = vld [vmem:[#allocation6 + $0xb8] sm:$0xff]
    %v1575 = vld [vmem:[#allocation6 + $0xc0] sm:$0xff]
    %v1576 = vld [vmem:[#allocation6 + $0xc8] sm:$0xff]
    %v1577 = vld [vmem:[#allocation6 + $0xd0] sm:$0xff]
    %v1578 = vld [vmem:[#allocation6 + $0xd8] sm:$0xff]
    %v1579 = vld [vmem:[#allocation6 + $0xe0] sm:$0xff]
    %v1580 = vld [vmem:[#allocation6 + $0xe8] sm:$0xff]
    %v1581 = vld [vmem:[#allocation6 + $0xf0] sm:$0xff]
    %v1582 = vld [vmem:[#allocation6 + $0xf8] sm:$0xff]
    %v1583 = vld [vmem:[%s8] sm:$0xf]
    %v1585 = vlaneseq
    %v1586 = vshrl.u32 %v1585, 7
    %v1587 = vsub.s32 0, %v1586
    %v1588 = vrot.slane %v1583, %v1587
    %v1589 = vlaneseq
    %v1590 = vshrl.u32 %v1589, 7
    %v1591 = vsub.s32 1, %v1590
    %v1592 = vrot.slane %v1583, %v1591
    %v1593 = vlaneseq
    %v1594 = vshrl.u32 %v1593, 7
    %v1595 = vsub.s32 2, %v1594
    %v1596 = vrot.slane %v1583, %v1595
    %v1597 = vlaneseq
    %v1598 = vshrl.u32 %v1597, 7
    %v1599 = vsub.s32 3, %v1598
    %v1600 = vrot.slane %v1583, %v1599
    %v1637 = vunpack.c.l.b16 %v1551
    %v1638 = vunpack.c.h.b16 %v1551
    %v1639 = vunpack.c.l.b16 %v1552
    %v1640 = vunpack.c.h.b16 %v1552
    %v1641 = vunpack.c.l.b16 %v1553
    %v1642 = vunpack.c.h.b16 %v1553
    %v1643 = vunpack.c.l.b16 %v1554
    %v1644 = vunpack.c.h.b16 %v1554
    %v1645 = vunpack.c.l.b16 %v1555
    %v1646 = vunpack.c.h.b16 %v1555
    %v1647 = vunpack.c.l.b16 %v1556
    %v1648 = vunpack.c.h.b16 %v1556
    %v1649 = vunpack.c.l.b16 %v1557
    %v1650 = vunpack.c.h.b16 %v1557
    %v1651 = vunpack.c.l.b16 %v1558
    %v1652 = vunpack.c.h.b16 %v1558
    %v1653 = vunpack.c.l.b16 %v1559
    %v1654 = vunpack.c.h.b16 %v1559
    %v1655 = vunpack.c.l.b16 %v1560
    %v1656 = vunpack.c.h.b16 %v1560
    %v1657 = vunpack.c.l.b16 %v1561
    %v1658 = vunpack.c.h.b16 %v1561
    %v1659 = vunpack.c.l.b16 %v1562
    %v1660 = vunpack.c.h.b16 %v1562
    %v1661 = vunpack.c.l.b16 %v1563
    %v1662 = vunpack.c.h.b16 %v1563
    %v1663 = vunpack.c.l.b16 %v1564
    %v1664 = vunpack.c.h.b16 %v1564
    %v1665 = vunpack.c.l.b16 %v1565
    %v1666 = vunpack.c.h.b16 %v1565
    %v1667 = vunpack.c.l.b16 %v1566
    %v1668 = vunpack.c.h.b16 %v1566
    %v1669 = vunpack.c.l.b16 %v1567
    %v1670 = vunpack.c.h.b16 %v1567
    %v1671 = vunpack.c.l.b16 %v1568
    %v1672 = vunpack.c.h.b16 %v1568
    %v1673 = vunpack.c.l.b16 %v1569
    %v1674 = vunpack.c.h.b16 %v1569
    %v1675 = vunpack.c.l.b16 %v1570
    %v1676 = vunpack.c.h.b16 %v1570
    %v1677 = vunpack.c.l.b16 %v1571
    %v1678 = vunpack.c.h.b16 %v1571
    %v1679 = vunpack.c.l.b16 %v1572
    %v1680 = vunpack.c.h.b16 %v1572
    %v1681 = vunpack.c.l.b16 %v1573
    %v1682 = vunpack.c.h.b16 %v1573
    %v1683 = vunpack.c.l.b16 %v1574
    %v1684 = vunpack.c.h.b16 %v1574
    %v1685 = vunpack.c.l.b16 %v1575
    %v1686 = vunpack.c.h.b16 %v1575
    %v1687 = vunpack.c.l.b16 %v1576
    %v1688 = vunpack.c.h.b16 %v1576
    %v1689 = vunpack.c.l.b16 %v1577
    %v1690 = vunpack.c.h.b16 %v1577
    %v1691 = vunpack.c.l.b16 %v1578
    %v1692 = vunpack.c.h.b16 %v1578
    %v1693 = vunpack.c.l.b16 %v1579
    %v1694 = vunpack.c.h.b16 %v1579
    %v1695 = vunpack.c.l.b16 %v1580
    %v1696 = vunpack.c.h.b16 %v1580
    %v1697 = vunpack.c.l.b16 %v1581
    %v1698 = vunpack.c.h.b16 %v1581
    %v1699 = vunpack.c.l.b16 %v1582
    %v1700 = vunpack.c.h.b16 %v1582
    %v1701 = vpack.c.b16 %v1641, %v1637
    %v1702 = vpack.c.b16 %v1642, %v1638
    %v1703 = vpack.c.b16 %v1643, %v1639
    %v1704 = vpack.c.b16 %v1644, %v1640
    %v1705 = vpack.c.b16 %v1649, %v1645
    %v1706 = vpack.c.b16 %v1650, %v1646
    %v1707 = vpack.c.b16 %v1651, %v1647
    %v1708 = vpack.c.b16 %v1652, %v1648
    %v1709 = vpack.c.b16 %v1657, %v1653
    %v1710 = vpack.c.b16 %v1658, %v1654
    %v1711 = vpack.c.b16 %v1659, %v1655
    %v1712 = vpack.c.b16 %v1660, %v1656
    %v1713 = vpack.c.b16 %v1665, %v1661
    %v1714 = vpack.c.b16 %v1666, %v1662
    %v1715 = vpack.c.b16 %v1667, %v1663
    %v1716 = vpack.c.b16 %v1668, %v1664
    %v1717 = vpack.c.b16 %v1673, %v1669
    %v1718 = vpack.c.b16 %v1674, %v1670
    %v1719 = vpack.c.b16 %v1675, %v1671
    %v1720 = vpack.c.b16 %v1676, %v1672
    %v1721 = vpack.c.b16 %v1681, %v1677
    %v1722 = vpack.c.b16 %v1682, %v1678
    %v1723 = vpack.c.b16 %v1683, %v1679
    %v1724 = vpack.c.b16 %v1684, %v1680
    %v1725 = vpack.c.b16 %v1689, %v1685
    %v1726 = vpack.c.b16 %v1690, %v1686
    %v1727 = vpack.c.b16 %v1691, %v1687
    %v1728 = vpack.c.b16 %v1692, %v1688
    %v1729 = vpack.c.b16 %v1697, %v1693
    %v1730 = vpack.c.b16 %v1698, %v1694
    %v1731 = vpack.c.b16 %v1699, %v1695
    %v1732 = vpack.c.b16 %v1700, %v1696
    %1765 = vmatprep.subr.bf16.mxu0 %v1702
    %1766 = vmatpush1.bf16.msra.mxu0 %v1701
    %1767 = vmatprep.subr.bf16.mxu0 %v1706
    %1768 = vmatpush1.bf16.msra.mxu0 %v1705
    %1769 = vmatprep.subr.bf16.mxu0 %v1710
    %1770 = vmatpush1.bf16.msra.mxu0 %v1709
    %1771 = vmatprep.subr.bf16.mxu0 %v1714
    %1772 = vmatpush1.bf16.msra.mxu0 %v1713
    %1773 = vmatprep.subr.bf16.mxu0 %v1718
    %1774 = vmatpush1.bf16.msra.mxu0 %v1717
    %1775 = vmatprep.subr.bf16.mxu0 %v1722
    %1776 = vmatpush1.bf16.msra.mxu0 %v1721
    %1777 = vmatprep.subr.bf16.mxu0 %v1726
    %1778 = vmatpush1.bf16.msra.mxu0 %v1725
    %1779 = vmatprep.subr.bf16.mxu0 %v1730
    %1780 = vmatpush1.bf16.msra.mxu0 %v1729
    %1781 = vmatprep.subr.bf16.mxu0 0
    %1782 = vmatpush1.bf16.msra.mxu0 0
    %1783 = vmatprep.subr.bf16.mxu0 0
    %1784 = vmatpush1.bf16.msra.mxu0 0
    %1785 = vmatprep.subr.bf16.mxu0 0
    %1786 = vmatpush1.bf16.msra.mxu0 0
    %1787 = vmatprep.subr.bf16.mxu0 0
    %1788 = vmatpush1.bf16.msra.mxu0 0
    %1789 = vmatprep.subr.bf16.mxu0 0
    %1790 = vmatpush1.bf16.msra.mxu0 0
    %1791 = vmatprep.subr.bf16.mxu0 0
    %1792 = vmatpush1.bf16.msra.mxu0 0
    %1793 = vmatprep.subr.bf16.mxu0 0
    %1794 = vmatpush1.bf16.msra.mxu0 0
    %1795 = vmatprep.subr.bf16.mxu0 0
    %1796 = vmatpush1.bf16.msra.mxu0 0
    %1797 = vmatprep.mubr.bf16.mxu0 0
    %1798 = vmatmul.mubr.bf16.gmra.mrb[0].mxu0 %v1550
    %v1799 = vpop.f32.mrb[0].mxu0
    %v1800 = vadd.f32 %v1588, %v1799
    %v1801 = vpop.f32.mrb[0].mxu0
    %v1802 = vadd.f32 %v1592, %v1801
    %v1803 = vpop.f32.mrb[0].mxu0
    %v1804 = vpop.f32.mrb[0].mxu0
    %1805 = vdwg.mxu0
    %1806 = vmatprep.subr.bf16.mxu0 %v1704
    %1807 = vmatpush1.bf16.msra.mxu0 %v1703
    %1808 = vmatprep.subr.bf16.mxu0 %v1708
    %1809 = vmatpush1.bf16.msra.mxu0 %v1707
    %1810 = vmatprep.subr.bf16.mxu0 %v1712
    %1811 = vmatpush1.bf16.msra.mxu0 %v1711
    %1812 = vmatprep.subr.bf16.mxu0 %v1716
    %1813 = vmatpush1.bf16.msra.mxu0 %v1715
    %1814 = vmatprep.subr.bf16.mxu0 %v1720
    %1815 = vmatpush1.bf16.msra.mxu0 %v1719
    %1816 = vmatprep.subr.bf16.mxu0 %v1724
    %1817 = vmatpush1.bf16.msra.mxu0 %v1723
    %1818 = vmatprep.subr.bf16.mxu0 %v1728
    %1819 = vmatpush1.bf16.msra.mxu0 %v1727
    %1820 = vmatprep.subr.bf16.mxu0 %v1732
    %1821 = vmatpush1.bf16.msra.mxu0 %v1731
    %1822 = vmatprep.subr.bf16.mxu0 0
    %1823 = vmatpush1.bf16.msra.mxu0 0
    %1824 = vmatprep.subr.bf16.mxu0 0
    %1825 = vmatpush1.bf16.msra.mxu0 0
    %1826 = vmatprep.subr.bf16.mxu0 0
    %1827 = vmatpush1.bf16.msra.mxu0 0
    %1828 = vmatprep.subr.bf16.mxu0 0
    %1829 = vmatpush1.bf16.msra.mxu0 0
    %1830 = vmatprep.subr.bf16.mxu0 0
    %1831 = vmatpush1.bf16.msra.mxu0 0
    %1832 = vmatprep.subr.bf16.mxu0 0
    %1833 = vmatpush1.bf16.msra.mxu0 0
    %1834 = vmatprep.subr.bf16.mxu0 0
    %1835 = vmatpush1.bf16.msra.mxu0 0
    %1836 = vmatprep.subr.bf16.mxu0 0
    %1837 = vmatpush1.bf16.msra.mxu0 0
    %1838 = vmatprep.mubr.bf16.mxu0 0
    %1839 = vmatmul.mubr.bf16.gmra.mrb[0].mxu0 %v1550
    %v1840 = vpop.f32.mrb[0].mxu0
    %v1841 = vadd.f32 %v1596, %v1840
    %v1842 = vpop.f32.mrb[0].mxu0
    %v1843 = vadd.f32 %v1600, %v1842
    %v1844 = vpop.f32.mrb[0].mxu0
    %v1845 = vpop.f32.mrb[0].mxu0
    %1846 = vdwg.mxu0
    %v1847 = vld [vmem:[#allocation8] sm:$0xff]
    %v1848 = vld [vmem:[#allocation8 + $0x8] sm:$0xff]
    %v1849 = vld [vmem:[#allocation8 + $0x10] sm:$0xff]
    %v1850 = vld [vmem:[#allocation8 + $0x18] sm:$0xff]
    %v1851 = vld [vmem:[#allocation8 + $0x20] sm:$0xff]
    %v1852 = vld [vmem:[#allocation8 + $0x28] sm:$0xff]
    %v1853 = vld [vmem:[#allocation8 + $0x30] sm:$0xff]
    %v1854 = vld [vmem:[#allocation8 + $0x38] sm:$0xff]
    %v1855 = vld [vmem:[#allocation8 + $0x40] sm:$0xff]
    %v1856 = vld [vmem:[#allocation8 + $0x48] sm:$0xff]
    %v1857 = vld [vmem:[#allocation8 + $0x50] sm:$0xff]
    %v1858 = vld [vmem:[#allocation8 + $0x58] sm:$0xff]
    %v1859 = vld [vmem:[#allocation8 + $0x60] sm:$0xff]
    %v1860 = vld [vmem:[#allocation8 + $0x68] sm:$0xff]
    %v1861 = vld [vmem:[#allocation8 + $0x70] sm:$0xff]
    %v1862 = vld [vmem:[#allocation8 + $0x78] sm:$0xff]
    %v1863 = vld [vmem:[#allocation8 + $0x80] sm:$0xff]
    %v1864 = vld [vmem:[#allocation8 + $0x88] sm:$0xff]
    %v1865 = vld [vmem:[#allocation8 + $0x90] sm:$0xff]
    %v1866 = vld [vmem:[#allocation8 + $0x98] sm:$0xff]
    %v1867 = vld [vmem:[#allocation8 + $0xa0] sm:$0xff]
    %v1868 = vld [vmem:[#allocation8 + $0xa8] sm:$0xff]
    %v1869 = vld [vmem:[#allocation8 + $0xb0] sm:$0xff]
    %v1870 = vld [vmem:[#allocation8 + $0xb8] sm:$0xff]
    %v1871 = vld [vmem:[#allocation8 + $0xc0] sm:$0xff]
    %v1872 = vld [vmem:[#allocation8 + $0xc8] sm:$0xff]
    %v1873 = vld [vmem:[#allocation8 + $0xd0] sm:$0xff]
    %v1874 = vld [vmem:[#allocation8 + $0xd8] sm:$0xff]
    %v1875 = vld [vmem:[#allocation8 + $0xe0] sm:$0xff]
    %v1876 = vld [vmem:[#allocation8 + $0xe8] sm:$0xff]
    %v1877 = vld [vmem:[#allocation8 + $0xf0] sm:$0xff]
    %v1878 = vld [vmem:[#allocation8 + $0xf8] sm:$0xff]
    %v1911 = vunpack.c.l.b16 %v1847
    %v1912 = vunpack.c.h.b16 %v1847
    %v1913 = vunpack.c.l.b16 %v1848
    %v1914 = vunpack.c.h.b16 %v1848
    %v1915 = vunpack.c.l.b16 %v1849
    %v1916 = vunpack.c.h.b16 %v1849
    %v1917 = vunpack.c.l.b16 %v1850
    %v1918 = vunpack.c.h.b16 %v1850
    %v1919 = vunpack.c.l.b16 %v1851
    %v1920 = vunpack.c.h.b16 %v1851
    %v1921 = vunpack.c.l.b16 %v1852
    %v1922 = vunpack.c.h.b16 %v1852
    %v1923 = vunpack.c.l.b16 %v1853
    %v1924 = vunpack.c.h.b16 %v1853
    %v1925 = vunpack.c.l.b16 %v1854
    %v1926 = vunpack.c.h.b16 %v1854
    %v1927 = vunpack.c.l.b16 %v1855
    %v1928 = vunpack.c.h.b16 %v1855
    %v1929 = vunpack.c.l.b16 %v1856
    %v1930 = vunpack.c.h.b16 %v1856
    %v1931 = vunpack.c.l.b16 %v1857
    %v1932 = vunpack.c.h.b16 %v1857
    %v1933 = vunpack.c.l.b16 %v1858
    %v1934 = vunpack.c.h.b16 %v1858
    %v1935 = vunpack.c.l.b16 %v1859
    %v1936 = vunpack.c.h.b16 %v1859
    %v1937 = vunpack.c.l.b16 %v1860
    %v1938 = vunpack.c.h.b16 %v1860
    %v1939 = vunpack.c.l.b16 %v1861
    %v1940 = vunpack.c.h.b16 %v1861
    %v1941 = vunpack.c.l.b16 %v1862
    %v1942 = vunpack.c.h.b16 %v1862
    %v1943 = vunpack.c.l.b16 %v1863
    %v1944 = vunpack.c.h.b16 %v1863
    %v1945 = vunpack.c.l.b16 %v1864
    %v1946 = vunpack.c.h.b16 %v1864
    %v1947 = vunpack.c.l.b16 %v1865
    %v1948 = vunpack.c.h.b16 %v1865
    %v1949 = vunpack.c.l.b16 %v1866
    %v1950 = vunpack.c.h.b16 %v1866
    %v1951 = vunpack.c.l.b16 %v1867
    %v1952 = vunpack.c.h.b16 %v1867
    %v1953 = vunpack.c.l.b16 %v1868
    %v1954 = vunpack.c.h.b16 %v1868
    %v1955 = vunpack.c.l.b16 %v1869
    %v1956 = vunpack.c.h.b16 %v1869
    %v1957 = vunpack.c.l.b16 %v1870
    %v1958 = vunpack.c.h.b16 %v1870
    %v1959 = vunpack.c.l.b16 %v1871
    %v1960 = vunpack.c.h.b16 %v1871
    %v1961 = vunpack.c.l.b16 %v1872
    %v1962 = vunpack.c.h.b16 %v1872
    %v1963 = vunpack.c.l.b16 %v1873
    %v1964 = vunpack.c.h.b16 %v1873
    %v1965 = vunpack.c.l.b16 %v1874
    %v1966 = vunpack.c.h.b16 %v1874
    %v1967 = vunpack.c.l.b16 %v1875
    %v1968 = vunpack.c.h.b16 %v1875
    %v1969 = vunpack.c.l.b16 %v1876
    %v1970 = vunpack.c.h.b16 %v1876
    %v1971 = vunpack.c.l.b16 %v1877
    %v1972 = vunpack.c.h.b16 %v1877
    %v1973 = vunpack.c.l.b16 %v1878
    %v1974 = vunpack.c.h.b16 %v1878
    %v1975 = vpack.c.b16 %v1915, %v1911
    %v1976 = vpack.c.b16 %v1916, %v1912
    %v1977 = vpack.c.b16 %v1917, %v1913
    %v1978 = vpack.c.b16 %v1918, %v1914
    %v1979 = vpack.c.b16 %v1923, %v1919
    %v1980 = vpack.c.b16 %v1924, %v1920
    %v1981 = vpack.c.b16 %v1925, %v1921
    %v1982 = vpack.c.b16 %v1926, %v1922
    %v1983 = vpack.c.b16 %v1931, %v1927
    %v1984 = vpack.c.b16 %v1932, %v1928
    %v1985 = vpack.c.b16 %v1933, %v1929
    %v1986 = vpack.c.b16 %v1934, %v1930
    %v1987 = vpack.c.b16 %v1939, %v1935
    %v1988 = vpack.c.b16 %v1940, %v1936
    %v1989 = vpack.c.b16 %v1941, %v1937
    %v1990 = vpack.c.b16 %v1942, %v1938
    %v1991 = vpack.c.b16 %v1947, %v1943
    %v1992 = vpack.c.b16 %v1948, %v1944
    %v1993 = vpack.c.b16 %v1949, %v1945
    %v1994 = vpack.c.b16 %v1950, %v1946
    %v1995 = vpack.c.b16 %v1955, %v1951
    %v1996 = vpack.c.b16 %v1956, %v1952
    %v1997 = vpack.c.b16 %v1957, %v1953
    %v1998 = vpack.c.b16 %v1958, %v1954
    %v1999 = vpack.c.b16 %v1963, %v1959
    %v2000 = vpack.c.b16 %v1964, %v1960
    %v2001 = vpack.c.b16 %v1965, %v1961
    %v2002 = vpack.c.b16 %v1966, %v1962
    %v2003 = vpack.c.b16 %v1971, %v1967
    %v2004 = vpack.c.b16 %v1972, %v1968
    %v2005 = vpack.c.b16 %v1973, %v1969
    %v2006 = vpack.c.b16 %v1974, %v1970
    %2039 = vmatprep.subr.bf16.mxu0 %v1976
    %2040 = vmatpush1.bf16.msra.mxu0 %v1975
    %2041 = vmatprep.subr.bf16.mxu0 %v1980
    %2042 = vmatpush1.bf16.msra.mxu0 %v1979
    %2043 = vmatprep.subr.bf16.mxu0 %v1984
    %2044 = vmatpush1.bf16.msra.mxu0 %v1983
    %2045 = vmatprep.subr.bf16.mxu0 %v1988
    %2046 = vmatpush1.bf16.msra.mxu0 %v1987
    %2047 = vmatprep.subr.bf16.mxu0 %v1992
    %2048 = vmatpush1.bf16.msra.mxu0 %v1991
    %2049 = vmatprep.subr.bf16.mxu0 %v1996
    %2050 = vmatpush1.bf16.msra.mxu0 %v1995
    %2051 = vmatprep.subr.bf16.mxu0 %v2000
    %2052 = vmatpush1.bf16.msra.mxu0 %v1999
    %2053 = vmatprep.subr.bf16.mxu0 %v2004
    %2054 = vmatpush1.bf16.msra.mxu0 %v2003
    %2055 = vmatprep.subr.bf16.mxu0 0
    %2056 = vmatpush1.bf16.msra.mxu0 0
    %2057 = vmatprep.subr.bf16.mxu0 0
    %2058 = vmatpush1.bf16.msra.mxu0 0
    %2059 = vmatprep.subr.bf16.mxu0 0
    %2060 = vmatpush1.bf16.msra.mxu0 0
    %2061 = vmatprep.subr.bf16.mxu0 0
    %2062 = vmatpush1.bf16.msra.mxu0 0
    %2063 = vmatprep.subr.bf16.mxu0 0
    %2064 = vmatpush1.bf16.msra.mxu0 0
    %2065 = vmatprep.subr.bf16.mxu0 0
    %2066 = vmatpush1.bf16.msra.mxu0 0
    %2067 = vmatprep.subr.bf16.mxu0 0
    %2068 = vmatpush1.bf16.msra.mxu0 0
    %2069 = vmatprep.subr.bf16.mxu0 0
    %2070 = vmatpush1.bf16.msra.mxu0 0
    %2071 = vmatprep.mubr.bf16.mxu0 0
    %2072 = vmatmul.mubr.bf16.gmra.mrb[0].mxu0 0
    %v2073 = vpop.f32.mrb[0].mxu0
    %v2074 = vadd.f32 0.0, %v2073
    %v2075 = vpop.f32.mrb[0].mxu0
    %v2076 = vadd.f32 0.0, %v2075
    %v2077 = vpop.f32.mrb[0].mxu0
    %v2078 = vpop.f32.mrb[0].mxu0
    %2079 = vdwg.mxu0
    %2080 = vmatprep.subr.bf16.mxu0 %v1978
    %2081 = vmatpush1.bf16.msra.mxu0 %v1977
    %2082 = vmatprep.subr.bf16.mxu0 %v1982
    %2083 = vmatpush1.bf16.msra.mxu0 %v1981
    %2084 = vmatprep.subr.bf16.mxu0 %v1986
    %2085 = vmatpush1.bf16.msra.mxu0 %v1985
    %2086 = vmatprep.subr.bf16.mxu0 %v1990
    %2087 = vmatpush1.bf16.msra.mxu0 %v1989
    %2088 = vmatprep.subr.bf16.mxu0 %v1994
    %2089 = vmatpush1.bf16.msra.mxu0 %v1993
    %2090 = vmatprep.subr.bf16.mxu0 %v1998
    %2091 = vmatpush1.bf16.msra.mxu0 %v1997
    %2092 = vmatprep.subr.bf16.mxu0 %v2002
    %2093 = vmatpush1.bf16.msra.mxu0 %v2001
    %2094 = vmatprep.subr.bf16.mxu0 %v2006
    %2095 = vmatpush1.bf16.msra.mxu0 %v2005
    %2096 = vmatprep.subr.bf16.mxu0 0
    %2097 = vmatpush1.bf16.msra.mxu0 0
    %2098 = vmatprep.subr.bf16.mxu0 0
    %2099 = vmatpush1.bf16.msra.mxu0 0
    %2100 = vmatprep.subr.bf16.mxu0 0
    %2101 = vmatpush1.bf16.msra.mxu0 0
    %2102 = vmatprep.subr.bf16.mxu0 0
    %2103 = vmatpush1.bf16.msra.mxu0 0
    %2104 = vmatprep.subr.bf16.mxu0 0
    %2105 = vmatpush1.bf16.msra.mxu0 0
    %2106 = vmatprep.subr.bf16.mxu0 0
    %2107 = vmatpush1.bf16.msra.mxu0 0
    %2108 = vmatprep.subr.bf16.mxu0 0
    %2109 = vmatpush1.bf16.msra.mxu0 0
    %2110 = vmatprep.subr.bf16.mxu0 0
    %2111 = vmatpush1.bf16.msra.mxu0 0
    %2112 = vmatprep.mubr.bf16.mxu0 0
    %2113 = vmatmul.mubr.bf16.gmra.mrb[0].mxu0 0
    %v2114 = vpop.f32.mrb[0].mxu0
    %v2115 = vadd.f32 0.0, %v2114
    %v2116 = vpop.f32.mrb[0].mxu0
    %v2117 = vadd.f32 0.0, %v2116
    %v2118 = vpop.f32.mrb[0].mxu0
    %v2119 = vpop.f32.mrb[0].mxu0
    %2120 = vdwg.mxu0
    %v2121 = vadd.f32 %v1800, %v2074
    %v2122 = vadd.f32 %v1802, %v2076
    %v2123 = vadd.f32 %v1841, %v2115
    %v2124 = vadd.f32 %v1843, %v2117
    %v2125 = vxor.u32 %v2121, 2147483648
    %v2126 = vxor.u32 %v2122, 2147483648
    %v2127 = vxor.u32 %v2123, 2147483648
    %v2128 = vmul.f32 %v2125, 1.442695
    %v2129 = vpow.pop %v2128
    %v2130 = vmul.f32 %v2126, 1.442695
    %v2131 = vpow.pop %v2130
    %v2132 = vmul.f32 %v2127, 1.442695
    %v2133 = vpow.pop %v2132
    %v2134 = vadd.f32 %v2129, 1.0
    %v2135 = vadd.f32 %v2131, 1.0
    %v2136 = vadd.f32 %v2133, 1.0
    %v2137 = vrcp.pop %v2134
    %v2138 = vmul.f32 1.0, %v2137
    %v2139 = vrcp.pop %v2135
    %v2140 = vmul.f32 1.0, %v2139
    %v2141 = vrcp.pop %v2136
    %v2142 = vmul.f32 1.0, %v2141
    %v2143 = vtanh.pop %v2124
    %v2144 = vmul.f32 %v2140, 0.0
    %v2145 = vmul.f32 %v2138, %v2143
    %v2146 = vadd.f32 %v2144, %v2145
    %v2147 = vtanh.pop %v2146
    %v2148 = vmul.f32 %v2142, %v2147
    %v2149 = vmax.f32 %v2148, 0.0
    %2150 = vst [vmem:[#allocation3] sm:$0xff] %v2149
    %v2151 = vpack.c.bf16 %v2148, %v2148
    %v2152 = vld [vmem:[#allocation8] sm:$0xff]
    %v2153 = vld [vmem:[#allocation8 + $0x8] sm:$0xff]
    %v2154 = vld [vmem:[#allocation8 + $0x10] sm:$0xff]
    %v2155 = vld [vmem:[#allocation8 + $0x18] sm:$0xff]
    %v2156 = vld [vmem:[#allocation8 + $0x20] sm:$0xff]
    %v2157 = vld [vmem:[#allocation8 + $0x28] sm:$0xff]
    %v2158 = vld [vmem:[#allocation8 + $0x30] sm:$0xff]
    %v2159 = vld [vmem:[#allocation8 + $0x38] sm:$0xff]
    %v2160 = vld [vmem:[#allocation8 + $0x40] sm:$0xff]
    %v2161 = vld [vmem:[#allocation8 + $0x48] sm:$0xff]
    %v2162 = vld [vmem:[#allocation8 + $0x50] sm:$0xff]
    %v2163 = vld [vmem:[#allocation8 + $0x58] sm:$0xff]
    %v2164 = vld [vmem:[#allocation8 + $0x60] sm:$0xff]
    %v2165 = vld [vmem:[#allocation8 + $0x68] sm:$0xff]
    %v2166 = vld [vmem:[#allocation8 + $0x70] sm:$0xff]
    %v2167 = vld [vmem:[#allocation8 + $0x78] sm:$0xff]
    %v2168 = vld [vmem:[#allocation8 + $0x80] sm:$0xff]
    %v2169 = vld [vmem:[#allocation8 + $0x88] sm:$0xff]
    %v2170 = vld [vmem:[#allocation8 + $0x90] sm:$0xff]
    %v2171 = vld [vmem:[#allocation8 + $0x98] sm:$0xff]
    %v2172 = vld [vmem:[#allocation8 + $0xa0] sm:$0xff]
    %v2173 = vld [vmem:[#allocation8 + $0xa8] sm:$0xff]
    %v2174 = vld [vmem:[#allocation8 + $0xb0] sm:$0xff]
    %v2175 = vld [vmem:[#allocation8 + $0xb8] sm:$0xff]
    %v2176 = vld [vmem:[#allocation8 + $0xc0] sm:$0xff]
    %v2177 = vld [vmem:[#allocation8 + $0xc8] sm:$0xff]
    %v2178 = vld [vmem:[#allocation8 + $0xd0] sm:$0xff]
    %v2179 = vld [vmem:[#allocation8 + $0xd8] sm:$0xff]
    %v2180 = vld [vmem:[#allocation8 + $0xe0] sm:$0xff]
    %v2181 = vld [vmem:[#allocation8 + $0xe8] sm:$0xff]
    %v2182 = vld [vmem:[#allocation8 + $0xf0] sm:$0xff]
    %v2183 = vld [vmem:[#allocation8 + $0xf8] sm:$0xff]
    %v2216 = vunpack.c.l.b16 %v2152
    %v2217 = vunpack.c.h.b16 %v2152
    %v2218 = vunpack.c.l.b16 %v2153
    %v2219 = vunpack.c.h.b16 %v2153
    %v2220 = vunpack.c.l.b16 %v2154
    %v2221 = vunpack.c.h.b16 %v2154
    %v2222 = vunpack.c.l.b16 %v2155
    %v2223 = vunpack.c.h.b16 %v2155
    %v2224 = vunpack.c.l.b16 %v2156
    %v2225 = vunpack.c.h.b16 %v2156
    %v2226 = vunpack.c.l.b16 %v2157
    %v2227 = vunpack.c.h.b16 %v2157
    %v2228 = vunpack.c.l.b16 %v2158
    %v2229 = vunpack.c.h.b16 %v2158
    %v2230 = vunpack.c.l.b16 %v2159
    %v2231 = vunpack.c.h.b16 %v2159
    %v2232 = vunpack.c.l.b16 %v2160
    %v2233 = vunpack.c.h.b16 %v2160
    %v2234 = vunpack.c.l.b16 %v2161
    %v2235 = vunpack.c.h.b16 %v2161
    %v2236 = vunpack.c.l.b16 %v2162
    %v2237 = vunpack.c.h.b16 %v2162
    %v2238 = vunpack.c.l.b16 %v2163
    %v2239 = vunpack.c.h.b16 %v2163
    %v2240 = vunpack.c.l.b16 %v2164
    %v2241 = vunpack.c.h.b16 %v2164
    %v2242 = vunpack.c.l.b16 %v2165
    %v2243 = vunpack.c.h.b16 %v2165
    %v2244 = vunpack.c.l.b16 %v2166
    %v2245 = vunpack.c.h.b16 %v2166
    %v2246 = vunpack.c.l.b16 %v2167
    %v2247 = vunpack.c.h.b16 %v2167
    %v2248 = vunpack.c.l.b16 %v2168
    %v2249 = vunpack.c.h.b16 %v2168
    %v2250 = vunpack.c.l.b16 %v2169
    %v2251 = vunpack.c.h.b16 %v2169
    %v2252 = vunpack.c.l.b16 %v2170
    %v2253 = vunpack.c.h.b16 %v2170
    %v2254 = vunpack.c.l.b16 %v2171
    %v2255 = vunpack.c.h.b16 %v2171
    %v2256 = vunpack.c.l.b16 %v2172
    %v2257 = vunpack.c.h.b16 %v2172
    %v2258 = vunpack.c.l.b16 %v2173
    %v2259 = vunpack.c.h.b16 %v2173
    %v2260 = vunpack.c.l.b16 %v2174
    %v2261 = vunpack.c.h.b16 %v2174
    %v2262 = vunpack.c.l.b16 %v2175
    %v2263 = vunpack.c.h.b16 %v2175
    %v2264 = vunpack.c.l.b16 %v2176
    %v2265 = vunpack.c.h.b16 %v2176
    %v2266 = vunpack.c.l.b16 %v2177
    %v2267 = vunpack.c.h.b16 %v2177
    %v2268 = vunpack.c.l.b16 %v2178
    %v2269 = vunpack.c.h.b16 %v2178
    %v2270 = vunpack.c.l.b16 %v2179
    %v2271 = vunpack.c.h.b16 %v2179
    %v2272 = vunpack.c.l.b16 %v2180
    %v2273 = vunpack.c.h.b16 %v2180
    %v2274 = vunpack.c.l.b16 %v2181
    %v2275 = vunpack.c.h.b16 %v2181
    %v2276 = vunpack.c.l.b16 %v2182
    %v2277 = vunpack.c.h.b16 %v2182
    %v2278 = vunpack.c.l.b16 %v2183
    %v2279 = vunpack.c.h.b16 %v2183
    %v2280 = vpack.c.b16 %v2220, %v2216
    %v2281 = vpack.c.b16 %v2221, %v2217
    %v2282 = vpack.c.b16 %v2222, %v2218
    %v2283 = vpack.c.b16 %v2223, %v2219
    %v2284 = vpack.c.b16 %v2228, %v2224
    %v2285 = vpack.c.b16 %v2229, %v2225
    %v2286 = vpack.c.b16 %v2230, %v2226
    %v2287 = vpack.c.b16 %v2231, %v2227
    %v2288 = vpack.c.b16 %v2236, %v2232
    %v2289 = vpack.c.b16 %v2237, %v2233
    %v2290 = vpack.c.b16 %v2238, %v2234
    %v2291 = vpack.c.b16 %v2239, %v2235
    %v2292 = vpack.c.b16 %v2244, %v2240
    %v2293 = vpack.c.b16 %v2245, %v2241
    %v2294 = vpack.c.b16 %v2246, %v2242
    %v2295 = vpack.c.b16 %v2247, %v2243
    %v2296 = vpack.c.b16 %v2252, %v2248
    %v2297 = vpack.c.b16 %v2253, %v2249
    %v2298 = vpack.c.b16 %v2254, %v2250
    %v2299 = vpack.c.b16 %v2255, %v2251
    %v2300 = vpack.c.b16 %v2260, %v2256
    %v2301 = vpack.c.b16 %v2261, %v2257
    %v2302 = vpack.c.b16 %v2262, %v2258
    %v2303 = vpack.c.b16 %v2263, %v2259
    %v2304 = vpack.c.b16 %v2268, %v2264
    %v2305 = vpack.c.b16 %v2269, %v2265
    %v2306 = vpack.c.b16 %v2270, %v2266
    %v2307 = vpack.c.b16 %v2271, %v2267
    %v2308 = vpack.c.b16 %v2276, %v2272
    %v2309 = vpack.c.b16 %v2277, %v2273
    %v2310 = vpack.c.b16 %v2278, %v2274
    %v2311 = vpack.c.b16 %v2279, %v2275
    %2344 = vmatprep.subr.bf16.mxu0 %v2281
    %2345 = vmatpush1.bf16.msra.mxu0 %v2280
    %2346 = vmatprep.subr.bf16.mxu0 %v2285
    %2347 = vmatpush1.bf16.msra.mxu0 %v2284
    %2348 = vmatprep.subr.bf16.mxu0 %v2289
    %2349 = vmatpush1.bf16.msra.mxu0 %v2288
    %2350 = vmatprep.subr.bf16.mxu0 %v2293
    %2351 = vmatpush1.bf16.msra.mxu0 %v2292
    %2352 = vmatprep.subr.bf16.mxu0 %v2297
    %2353 = vmatpush1.bf16.msra.mxu0 %v2296
    %2354 = vmatprep.subr.bf16.mxu0 %v2301
    %2355 = vmatpush1.bf16.msra.mxu0 %v2300
    %2356 = vmatprep.subr.bf16.mxu0 %v2305
    %2357 = vmatpush1.bf16.msra.mxu0 %v2304
    %2358 = vmatprep.subr.bf16.mxu0 %v2309
    %2359 = vmatpush1.bf16.msra.mxu0 %v2308
    %2360 = vmatprep.subr.bf16.mxu0 0
    %2361 = vmatpush1.bf16.msra.mxu0 0
    %2362 = vmatprep.subr.bf16.mxu0 0
    %2363 = vmatpush1.bf16.msra.mxu0 0
    %2364 = vmatprep.subr.bf16.mxu0 0
    %2365 = vmatpush1.bf16.msra.mxu0 0
    %2366 = vmatprep.subr.bf16.mxu0 0
    %2367 = vmatpush1.bf16.msra.mxu0 0
    %2368 = vmatprep.subr.bf16.mxu0 0
    %2369 = vmatpush1.bf16.msra.mxu0 0
    %2370 = vmatprep.subr.bf16.mxu0 0
    %2371 = vmatpush1.bf16.msra.mxu0 0
    %2372 = vmatprep.subr.bf16.mxu0 0
    %2373 = vmatpush1.bf16.msra.mxu0 0
    %2374 = vmatprep.subr.bf16.mxu0 0
    %2375 = vmatpush1.bf16.msra.mxu0 0
    %2376 = vmatprep.mubr.bf16.mxu0 0
    %2377 = vmatmul.mubr.bf16.gmra.mrb[0].mxu0 %v2151
    %v2378 = vpop.f32.mrb[0].mxu0
    %v2379 = vadd.f32 0.0, %v2378
    %v2380 = vpop.f32.mrb[0].mxu0
    %v2381 = vadd.f32 0.0, %v2380
    %v2382 = vpop.f32.mrb[0].mxu0
    %v2383 = vpop.f32.mrb[0].mxu0
    %2384 = vdwg.mxu0
    %2385 = vmatprep.subr.bf16.mxu0 %v2283
    %2386 = vmatpush1.bf16.msra.mxu0 %v2282
    %2387 = vmatprep.subr.bf16.mxu0 %v2287
    %2388 = vmatpush1.bf16.msra.mxu0 %v2286
    %2389 = vmatprep.subr.bf16.mxu0 %v2291
    %2390 = vmatpush1.bf16.msra.mxu0 %v2290
    %2391 = vmatprep.subr.bf16.mxu0 %v2295
    %2392 = vmatpush1.bf16.msra.mxu0 %v2294
    %2393 = vmatprep.subr.bf16.mxu0 %v2299
    %2394 = vmatpush1.bf16.msra.mxu0 %v2298
    %2395 = vmatprep.subr.bf16.mxu0 %v2303
    %2396 = vmatpush1.bf16.msra.mxu0 %v2302
    %2397 = vmatprep.subr.bf16.mxu0 %v2307
    %2398 = vmatpush1.bf16.msra.mxu0 %v2306
    %2399 = vmatprep.subr.bf16.mxu0 %v2311
    %2400 = vmatpush1.bf16.msra.mxu0 %v2310
    %2401 = vmatprep.subr.bf16.mxu0 0
    %2402 = vmatpush1.bf16.msra.mxu0 0
    %2403 = vmatprep.subr.bf16.mxu0 0
    %2404 = vmatpush1.bf16.msra.mxu0 0
    %2405 = vmatprep.subr.bf16.mxu0 0
    %2406 = vmatpush1.bf16.msra.mxu0 0
    %2407 = vmatprep.subr.bf16.mxu0 0
    %2408 = vmatpush1.bf16.msra.mxu0 0
    %2409 = vmatprep.subr.bf16.mxu0 0
    %2410 = vmatpush1.bf16.msra.mxu0 0
    %2411 = vmatprep.subr.bf16.mxu0 0
    %2412 = vmatpush1.bf16.msra.mxu0 0
    %2413 = vmatprep.subr.bf16.mxu0 0
    %2414 = vmatpush1.bf16.msra.mxu0 0
    %2415 = vmatprep.subr.bf16.mxu0 0
    %2416 = vmatpush1.bf16.msra.mxu0 0
    %2417 = vmatprep.mubr.bf16.mxu0 0
    %2418 = vmatmul.mubr.bf16.gmra.mrb[0].mxu0 %v2151
    %v2419 = vpop.f32.mrb[0].mxu0
    %v2420 = vadd.f32 0.0, %v2419
    %v2421 = vpop.f32.mrb[0].mxu0
    %v2422 = vadd.f32 0.0, %v2421
    %v2423 = vpop.f32.mrb[0].mxu0
    %v2424 = vpop.f32.mrb[0].mxu0
    %2425 = vdwg.mxu0
    %v2426 = vadd.f32 %v1800, %v2379
    %v2427 = vadd.f32 %v1802, %v2381
    %v2428 = vadd.f32 %v1841, %v2420
    %v2429 = vadd.f32 %v1843, %v2422
    %v2430 = vxor.u32 %v2426, 2147483648
    %v2431 = vxor.u32 %v2427, 2147483648
    %v2432 = vxor.u32 %v2428, 2147483648
    %v2433 = vmul.f32 %v2430, 1.442695
    %v2434 = vpow.pop %v2433
    %v2435 = vmul.f32 %v2431, 1.442695
    %v2436 = vpow.pop %v2435
    %v2437 = vmul.f32 %v2432, 1.442695
    %v2438 = vpow.pop %v2437
    %v2439 = vadd.f32 %v2434, 1.0
    %v2440 = vadd.f32 %v2436, 1.0
    %v2441 = vadd.f32 %v2438, 1.0
    %v2442 = vrcp.pop %v2439
    %v2443 = vmul.f32 1.0, %v2442
    %v2444 = vrcp.pop %v2440
    %v2445 = vmul.f32 1.0, %v2444
    %v2446 = vrcp.pop %v2441
    %v2447 = vmul.f32 1.0, %v2446
    %v2448 = vtanh.pop %v2429
    %v2449 = vmul.f32 %v2445, %v2146
    %v2450 = vmul.f32 %v2443, %v2448
    %v2451 = vadd.f32 %v2449, %v2450
    %v2452 = vtanh.pop %v2451
    %v2453 = vmul.f32 %v2447, %v2452
    %v2454 = vmax.f32 %v2453, 0.0
    %2455 = vst [vmem:[#allocation3 + $0x8] sm:$0xff] %v2454
    %v2456 = vpack.c.bf16 %v2453, %v2453
    %v2457 = vld [vmem:[#allocation8] sm:$0xff]
    %v2458 = vld [vmem:[#allocation8 + $0x8] sm:$0xff]
    %v2459 = vld [vmem:[#allocation8 + $0x10] sm:$0xff]
    %v2460 = vld [vmem:[#allocation8 + $0x18] sm:$0xff]
    %v2461 = vld [vmem:[#allocation8 + $0x20] sm:$0xff]
    %v2462 = vld [vmem:[#allocation8 + $0x28] sm:$0xff]
    %v2463 = vld [vmem:[#allocation8 + $0x30] sm:$0xff]
    %v2464 = vld [vmem:[#allocation8 + $0x38] sm:$0xff]
    %v2465 = vld [vmem:[#allocation8 + $0x40] sm:$0xff]
    %v2466 = vld [vmem:[#allocation8 + $0x48] sm:$0xff]
    %v2467 = vld [vmem:[#allocation8 + $0x50] sm:$0xff]
    %v2468 = vld [vmem:[#allocation8 + $0x58] sm:$0xff]
    %v2469 = vld [vmem:[#allocation8 + $0x60] sm:$0xff]
    %v2470 = vld [vmem:[#allocation8 + $0x68] sm:$0xff]
    %v2471 = vld [vmem:[#allocation8 + $0x70] sm:$0xff]
    %v2472 = vld [vmem:[#allocation8 + $0x78] sm:$0xff]
    %v2473 = vld [vmem:[#allocation8 + $0x80] sm:$0xff]
    %v2474 = vld [vmem:[#allocation8 + $0x88] sm:$0xff]
    %v2475 = vld [vmem:[#allocation8 + $0x90] sm:$0xff]
    %v2476 = vld [vmem:[#allocation8 + $0x98] sm:$0xff]
    %v2477 = vld [vmem:[#allocation8 + $0xa0] sm:$0xff]
    %v2478 = vld [vmem:[#allocation8 + $0xa8] sm:$0xff]
    %v2479 = vld [vmem:[#allocation8 + $0xb0] sm:$0xff]
    %v2480 = vld [vmem:[#allocation8 + $0xb8] sm:$0xff]
    %v2481 = vld [vmem:[#allocation8 + $0xc0] sm:$0xff]
    %v2482 = vld [vmem:[#allocation8 + $0xc8] sm:$0xff]
    %v2483 = vld [vmem:[#allocation8 + $0xd0] sm:$0xff]
    %v2484 = vld [vmem:[#allocation8 + $0xd8] sm:$0xff]
    %v2485 = vld [vmem:[#allocation8 + $0xe0] sm:$0xff]
    %v2486 = vld [vmem:[#allocation8 + $0xe8] sm:$0xff]
    %v2487 = vld [vmem:[#allocation8 + $0xf0] sm:$0xff]
    %v2488 = vld [vmem:[#allocation8 + $0xf8] sm:$0xff]
    %v2521 = vunpack.c.l.b16 %v2457
    %v2522 = vunpack.c.h.b16 %v2457
    %v2523 = vunpack.c.l.b16 %v2458
    %v2524 = vunpack.c.h.b16 %v2458
    %v2525 = vunpack.c.l.b16 %v2459
    %v2526 = vunpack.c.h.b16 %v2459
    %v2527 = vunpack.c.l.b16 %v2460
    %v2528 = vunpack.c.h.b16 %v2460
    %v2529 = vunpack.c.l.b16 %v2461
    %v2530 = vunpack.c.h.b16 %v2461
    %v2531 = vunpack.c.l.b16 %v2462
    %v2532 = vunpack.c.h.b16 %v2462
    %v2533 = vunpack.c.l.b16 %v2463
    %v2534 = vunpack.c.h.b16 %v2463
    %v2535 = vunpack.c.l.b16 %v2464
    %v2536 = vunpack.c.h.b16 %v2464
    %v2537 = vunpack.c.l.b16 %v2465
    %v2538 = vunpack.c.h.b16 %v2465
    %v2539 = vunpack.c.l.b16 %v2466
    %v2540 = vunpack.c.h.b16 %v2466
    %v2541 = vunpack.c.l.b16 %v2467
    %v2542 = vunpack.c.h.b16 %v2467
    %v2543 = vunpack.c.l.b16 %v2468
    %v2544 = vunpack.c.h.b16 %v2468
    %v2545 = vunpack.c.l.b16 %v2469
    %v2546 = vunpack.c.h.b16 %v2469
    %v2547 = vunpack.c.l.b16 %v2470
    %v2548 = vunpack.c.h.b16 %v2470
    %v2549 = vunpack.c.l.b16 %v2471
    %v2550 = vunpack.c.h.b16 %v2471
    %v2551 = vunpack.c.l.b16 %v2472
    %v2552 = vunpack.c.h.b16 %v2472
    %v2553 = vunpack.c.l.b16 %v2473
    %v2554 = vunpack.c.h.b16 %v2473
    %v2555 = vunpack.c.l.b16 %v2474
    %v2556 = vunpack.c.h.b16 %v2474
    %v2557 = vunpack.c.l.b16 %v2475
    %v2558 = vunpack.c.h.b16 %v2475
    %v2559 = vunpack.c.l.b16 %v2476
    %v2560 = vunpack.c.h.b16 %v2476
    %v2561 = vunpack.c.l.b16 %v2477
    %v2562 = vunpack.c.h.b16 %v2477
    %v2563 = vunpack.c.l.b16 %v2478
    %v2564 = vunpack.c.h.b16 %v2478
    %v2565 = vunpack.c.l.b16 %v2479
    %v2566 = vunpack.c.h.b16 %v2479
    %v2567 = vunpack.c.l.b16 %v2480
    %v2568 = vunpack.c.h.b16 %v2480
    %v2569 = vunpack.c.l.b16 %v2481
    %v2570 = vunpack.c.h.b16 %v2481
    %v2571 = vunpack.c.l.b16 %v2482
    %v2572 = vunpack.c.h.b16 %v2482
    %v2573 = vunpack.c.l.b16 %v2483
    %v2574 = vunpack.c.h.b16 %v2483
    %v2575 = vunpack.c.l.b16 %v2484
    %v2576 = vunpack.c.h.b16 %v2484
    %v2577 = vunpack.c.l.b16 %v2485
    %v2578 = vunpack.c.h.b16 %v2485
    %v2579 = vunpack.c.l.b16 %v2486
    %v2580 = vunpack.c.h.b16 %v2486
    %v2581 = vunpack.c.l.b16 %v2487
    %v2582 = vunpack.c.h.b16 %v2487
    %v2583 = vunpack.c.l.b16 %v2488
    %v2584 = vunpack.c.h.b16 %v2488
    %v2585 = vpack.c.b16 %v2525, %v2521
    %v2586 = vpack.c.b16 %v2526, %v2522
    %v2587 = vpack.c.b16 %v2527, %v2523
    %v2588 = vpack.c.b16 %v2528, %v2524
    %v2589 = vpack.c.b16 %v2533, %v2529
    %v2590 = vpack.c.b16 %v2534, %v2530
    %v2591 = vpack.c.b16 %v2535, %v2531
    %v2592 = vpack.c.b16 %v2536, %v2532
    %v2593 = vpack.c.b16 %v2541, %v2537
    %v2594 = vpack.c.b16 %v2542, %v2538
    %v2595 = vpack.c.b16 %v2543, %v2539
    %v2596 = vpack.c.b16 %v2544, %v2540
    %v2597 = vpack.c.b16 %v2549, %v2545
    %v2598 = vpack.c.b16 %v2550, %v2546
    %v2599 = vpack.c.b16 %v2551, %v2547
    %v2600 = vpack.c.b16 %v2552, %v2548
    %v2601 = vpack.c.b16 %v2557, %v2553
    %v2602 = vpack.c.b16 %v2558, %v2554
    %v2603 = vpack.c.b16 %v2559, %v2555
    %v2604 = vpack.c.b16 %v2560, %v2556
    %v2605 = vpack.c.b16 %v2565, %v2561
    %v2606 = vpack.c.b16 %v2566, %v2562
    %v2607 = vpack.c.b16 %v2567, %v2563
    %v2608 = vpack.c.b16 %v2568, %v2564
    %v2609 = vpack.c.b16 %v2573, %v2569
    %v2610 = vpack.c.b16 %v2574, %v2570
    %v2611 = vpack.c.b16 %v2575, %v2571
    %v2612 = vpack.c.b16 %v2576, %v2572
    %v2613 = vpack.c.b16 %v2581, %v2577
    %v2614 = vpack.c.b16 %v2582, %v2578
    %v2615 = vpack.c.b16 %v2583, %v2579
    %v2616 = vpack.c.b16 %v2584, %v2580
    %2649 = vmatprep.subr.bf16.mxu0 %v2586
    %2650 = vmatpush1.bf16.msra.mxu0 %v2585
    %2651 = vmatprep.subr.bf16.mxu0 %v2590
    %2652 = vmatpush1.bf16.msra.mxu0 %v2589
    %2653 = vmatprep.subr.bf16.mxu0 %v2594
    %2654 = vmatpush1.bf16.msra.mxu0 %v2593
    %2655 = vmatprep.subr.bf16.mxu0 %v2598
    %2656 = vmatpush1.bf16.msra.mxu0 %v2597
    %2657 = vmatprep.subr.bf16.mxu0 %v2602
    %2658 = vmatpush1.bf16.msra.mxu0 %v2601
    %2659 = vmatprep.subr.bf16.mxu0 %v2606
    %2660 = vmatpush1.bf16.msra.mxu0 %v2605
    %2661 = vmatprep.subr.bf16.mxu0 %v2610
    %2662 = vmatpush1.bf16.msra.mxu0 %v2609
    %2663 = vmatprep.subr.bf16.mxu0 %v2614
    %2664 = vmatpush1.bf16.msra.mxu0 %v2613
    %2665 = vmatprep.subr.bf16.mxu0 0
    %2666 = vmatpush1.bf16.msra.mxu0 0
    %2667 = vmatprep.subr.bf16.mxu0 0
    %2668 = vmatpush1.bf16.msra.mxu0 0
    %2669 = vmatprep.subr.bf16.mxu0 0
    %2670 = vmatpush1.bf16.msra.mxu0 0
    %2671 = vmatprep.subr.bf16.mxu0 0
    %2672 = vmatpush1.bf16.msra.mxu0 0
    %2673 = vmatprep.subr.bf16.mxu0 0
    %2674 = vmatpush1.bf16.msra.mxu0 0
    %2675 = vmatprep.subr.bf16.mxu0 0
    %2676 = vmatpush1.bf16.msra.mxu0 0
    %2677 = vmatprep.subr.bf16.mxu0 0
    %2678 = vmatpush1.bf16.msra.mxu0 0
    %2679 = vmatprep.subr.bf16.mxu0 0
    %2680 = vmatpush1.bf16.msra.mxu0 0
    %2681 = vmatprep.mubr.bf16.mxu0 0
    %2682 = vmatmul.mubr.bf16.gmra.mrb[0].mxu0 %v2456
    %v2683 = vpop.f32.mrb[0].mxu0
    %v2684 = vadd.f32 0.0, %v2683
    %v2685 = vpop.f32.mrb[0].mxu0
    %v2686 = vadd.f32 0.0, %v2685
    %v2687 = vpop.f32.mrb[0].mxu0
    %v2688 = vpop.f32.mrb[0].mxu0
    %2689 = vdwg.mxu0
    %2690 = vmatprep.subr.bf16.mxu0 %v2588
    %2691 = vmatpush1.bf16.msra.mxu0 %v2587
    %2692 = vmatprep.subr.bf16.mxu0 %v2592
    %2693 = vmatpush1.bf16.msra.mxu0 %v2591
    %2694 = vmatprep.subr.bf16.mxu0 %v2596
    %2695 = vmatpush1.bf16.msra.mxu0 %v2595
    %2696 = vmatprep.subr.bf16.mxu0 %v2600
    %2697 = vmatpush1.bf16.msra.mxu0 %v2599
    %2698 = vmatprep.subr.bf16.mxu0 %v2604
    %2699 = vmatpush1.bf16.msra.mxu0 %v2603
    %2700 = vmatprep.subr.bf16.mxu0 %v2608
    %2701 = vmatpush1.bf16.msra.mxu0 %v2607
    %2702 = vmatprep.subr.bf16.mxu0 %v2612
    %2703 = vmatpush1.bf16.msra.mxu0 %v2611
    %2704 = vmatprep.subr.bf16.mxu0 %v2616
    %2705 = vmatpush1.bf16.msra.mxu0 %v2615
    %2706 = vmatprep.subr.bf16.mxu0 0
    %2707 = vmatpush1.bf16.msra.mxu0 0
    %2708 = vmatprep.subr.bf16.mxu0 0
    %2709 = vmatpush1.bf16.msra.mxu0 0
    %2710 = vmatprep.subr.bf16.mxu0 0
    %2711 = vmatpush1.bf16.msra.mxu0 0
    %2712 = vmatprep.subr.bf16.mxu0 0
    %2713 = vmatpush1.bf16.msra.mxu0 0
    %2714 = vmatprep.subr.bf16.mxu0 0
    %2715 = vmatpush1.bf16.msra.mxu0 0
    %2716 = vmatprep.subr.bf16.mxu0 0
    %2717 = vmatpush1.bf16.msra.mxu0 0
    %2718 = vmatprep.subr.bf16.mxu0 0
    %2719 = vmatpush1.bf16.msra.mxu0 0
    %2720 = vmatprep.subr.bf16.mxu0 0
    %2721 = vmatpush1.bf16.msra.mxu0 0
    %2722 = vmatprep.mubr.bf16.mxu0 0
    %2723 = vmatmul.mubr.bf16.gmra.mrb[0].mxu0 %v2456
    %v2724 = vpop.f32.mrb[0].mxu0
    %v2725 = vadd.f32 0.0, %v2724
    %v2726 = vpop.f32.mrb[0].mxu0
    %v2727 = vadd.f32 0.0, %v2726
    %v2728 = vpop.f32.mrb[0].mxu0
    %v2729 = vpop.f32.mrb[0].mxu0
    %2730 = vdwg.mxu0
    %v2731 = vadd.f32 %v1800, %v2684
    %v2732 = vadd.f32 %v1802, %v2686
    %v2733 = vadd.f32 %v1841, %v2725
    %v2734 = vadd.f32 %v1843, %v2727
    %v2735 = vxor.u32 %v2731, 2147483648
    %v2736 = vxor.u32 %v2732, 2147483648
    %v2737 = vxor.u32 %v2733, 2147483648
    %v2738 = vmul.f32 %v2735, 1.442695
    %v2739 = vpow.pop %v2738
    %v2740 = vmul.f32 %v2736, 1.442695
    %v2741 = vpow.pop %v2740
    %v2742 = vmul.f32 %v2737, 1.442695
    %v2743 = vpow.pop %v2742
    %v2744 = vadd.f32 %v2739, 1.0
    %v2745 = vadd.f32 %v2741, 1.0
    %v2746 = vadd.f32 %v2743, 1.0
    %v2747 = vrcp.pop %v2744
    %v2748 = vmul.f32 1.0, %v2747
    %v2749 = vrcp.pop %v2745
    %v2750 = vmul.f32 1.0, %v2749
    %v2751 = vrcp.pop %v2746
    %v2752 = vmul.f32 1.0, %v2751
    %v2753 = vtanh.pop %v2734
    %v2754 = vmul.f32 %v2750, %v2451
    %v2755 = vmul.f32 %v2748, %v2753
    %v2756 = vadd.f32 %v2754, %v2755
    %v2757 = vtanh.pop %v2756
    %v2758 = vmul.f32 %v2752, %v2757
    %v2759 = vmax.f32 %v2758, 0.0
    %2760 = vst [vmem:[#allocation3 + $0x10] sm:$0xff] %v2759
    %v2761 = vpack.c.bf16 %v2758, %v2758
    %v2762 = vld [vmem:[#allocation8] sm:$0xff]
    %v2763 = vld [vmem:[#allocation8 + $0x8] sm:$0xff]
    %v2764 = vld [vmem:[#allocation8 + $0x10] sm:$0xff]
    %v2765 = vld [vmem:[#allocation8 + $0x18] sm:$0xff]
    %v2766 = vld [vmem:[#allocation8 + $0x20] sm:$0xff]
    %v2767 = vld [vmem:[#allocation8 + $0x28] sm:$0xff]
    %v2768 = vld [vmem:[#allocation8 + $0x30] sm:$0xff]
    %v2769 = vld [vmem:[#allocation8 + $0x38] sm:$0xff]
    %v2770 = vld [vmem:[#allocation8 + $0x40] sm:$0xff]
    %v2771 = vld [vmem:[#allocation8 + $0x48] sm:$0xff]
    %v2772 = vld [vmem:[#allocation8 + $0x50] sm:$0xff]
    %v2773 = vld [vmem:[#allocation8 + $0x58] sm:$0xff]
    %v2774 = vld [vmem:[#allocation8 + $0x60] sm:$0xff]
    %v2775 = vld [vmem:[#allocation8 + $0x68] sm:$0xff]
    %v2776 = vld [vmem:[#allocation8 + $0x70] sm:$0xff]
    %v2777 = vld [vmem:[#allocation8 + $0x78] sm:$0xff]
    %v2778 = vld [vmem:[#allocation8 + $0x80] sm:$0xff]
    %v2779 = vld [vmem:[#allocation8 + $0x88] sm:$0xff]
    %v2780 = vld [vmem:[#allocation8 + $0x90] sm:$0xff]
    %v2781 = vld [vmem:[#allocation8 + $0x98] sm:$0xff]
    %v2782 = vld [vmem:[#allocation8 + $0xa0] sm:$0xff]
    %v2783 = vld [vmem:[#allocation8 + $0xa8] sm:$0xff]
    %v2784 = vld [vmem:[#allocation8 + $0xb0] sm:$0xff]
    %v2785 = vld [vmem:[#allocation8 + $0xb8] sm:$0xff]
    %v2786 = vld [vmem:[#allocation8 + $0xc0] sm:$0xff]
    %v2787 = vld [vmem:[#allocation8 + $0xc8] sm:$0xff]
    %v2788 = vld [vmem:[#allocation8 + $0xd0] sm:$0xff]
    %v2789 = vld [vmem:[#allocation8 + $0xd8] sm:$0xff]
    %v2790 = vld [vmem:[#allocation8 + $0xe0] sm:$0xff]
    %v2791 = vld [vmem:[#allocation8 + $0xe8] sm:$0xff]
    %v2792 = vld [vmem:[#allocation8 + $0xf0] sm:$0xff]
    %v2793 = vld [vmem:[#allocation8 + $0xf8] sm:$0xff]
    %v2826 = vunpack.c.l.b16 %v2762
    %v2827 = vunpack.c.h.b16 %v2762
    %v2828 = vunpack.c.l.b16 %v2763
    %v2829 = vunpack.c.h.b16 %v2763
    %v2830 = vunpack.c.l.b16 %v2764
    %v2831 = vunpack.c.h.b16 %v2764
    %v2832 = vunpack.c.l.b16 %v2765
    %v2833 = vunpack.c.h.b16 %v2765
    %v2834 = vunpack.c.l.b16 %v2766
    %v2835 = vunpack.c.h.b16 %v2766
    %v2836 = vunpack.c.l.b16 %v2767
    %v2837 = vunpack.c.h.b16 %v2767
    %v2838 = vunpack.c.l.b16 %v2768
    %v2839 = vunpack.c.h.b16 %v2768
    %v2840 = vunpack.c.l.b16 %v2769
    %v2841 = vunpack.c.h.b16 %v2769
    %v2842 = vunpack.c.l.b16 %v2770
    %v2843 = vunpack.c.h.b16 %v2770
    %v2844 = vunpack.c.l.b16 %v2771
    %v2845 = vunpack.c.h.b16 %v2771
    %v2846 = vunpack.c.l.b16 %v2772
    %v2847 = vunpack.c.h.b16 %v2772
    %v2848 = vunpack.c.l.b16 %v2773
    %v2849 = vunpack.c.h.b16 %v2773
    %v2850 = vunpack.c.l.b16 %v2774
    %v2851 = vunpack.c.h.b16 %v2774
    %v2852 = vunpack.c.l.b16 %v2775
    %v2853 = vunpack.c.h.b16 %v2775
    %v2854 = vunpack.c.l.b16 %v2776
    %v2855 = vunpack.c.h.b16 %v2776
    %v2856 = vunpack.c.l.b16 %v2777
    %v2857 = vunpack.c.h.b16 %v2777
    %v2858 = vunpack.c.l.b16 %v2778
    %v2859 = vunpack.c.h.b16 %v2778
    %v2860 = vunpack.c.l.b16 %v2779
    %v2861 = vunpack.c.h.b16 %v2779
    %v2862 = vunpack.c.l.b16 %v2780
    %v2863 = vunpack.c.h.b16 %v2780
    %v2864 = vunpack.c.l.b16 %v2781
    %v2865 = vunpack.c.h.b16 %v2781
    %v2866 = vunpack.c.l.b16 %v2782
    %v2867 = vunpack.c.h.b16 %v2782
    %v2868 = vunpack.c.l.b16 %v2783
    %v2869 = vunpack.c.h.b16 %v2783
    %v2870 = vunpack.c.l.b16 %v2784
    %v2871 = vunpack.c.h.b16 %v2784
    %v2872 = vunpack.c.l.b16 %v2785
    %v2873 = vunpack.c.h.b16 %v2785
    %v2874 = vunpack.c.l.b16 %v2786
    %v2875 = vunpack.c.h.b16 %v2786
    %v2876 = vunpack.c.l.b16 %v2787
    %v2877 = vunpack.c.h.b16 %v2787
    %v2878 = vunpack.c.l.b16 %v2788
    %v2879 = vunpack.c.h.b16 %v2788
    %v2880 = vunpack.c.l.b16 %v2789
    %v2881 = vunpack.c.h.b16 %v2789
    %v2882 = vunpack.c.l.b16 %v2790
    %v2883 = vunpack.c.h.b16 %v2790
    %v2884 = vunpack.c.l.b16 %v2791
    %v2885 = vunpack.c.h.b16 %v2791
    %v2886 = vunpack.c.l.b16 %v2792
    %v2887 = vunpack.c.h.b16 %v2792
    %v2888 = vunpack.c.l.b16 %v2793
    %v2889 = vunpack.c.h.b16 %v2793
    %v2890 = vpack.c.b16 %v2830, %v2826
    %v2891 = vpack.c.b16 %v2831, %v2827
    %v2892 = vpack.c.b16 %v2832, %v2828
    %v2893 = vpack.c.b16 %v2833, %v2829
    %v2894 = vpack.c.b16 %v2838, %v2834
    %v2895 = vpack.c.b16 %v2839, %v2835
    %v2896 = vpack.c.b16 %v2840, %v2836
    %v2897 = vpack.c.b16 %v2841, %v2837
    %v2898 = vpack.c.b16 %v2846, %v2842
    %v2899 = vpack.c.b16 %v2847, %v2843
    %v2900 = vpack.c.b16 %v2848, %v2844
    %v2901 = vpack.c.b16 %v2849, %v2845
    %v2902 = vpack.c.b16 %v2854, %v2850
    %v2903 = vpack.c.b16 %v2855, %v2851
    %v2904 = vpack.c.b16 %v2856, %v2852
    %v2905 = vpack.c.b16 %v2857, %v2853
    %v2906 = vpack.c.b16 %v2862, %v2858
    %v2907 = vpack.c.b16 %v2863, %v2859
    %v2908 = vpack.c.b16 %v2864, %v2860
    %v2909 = vpack.c.b16 %v2865, %v2861
    %v2910 = vpack.c.b16 %v2870, %v2866
    %v2911 = vpack.c.b16 %v2871, %v2867
    %v2912 = vpack.c.b16 %v2872, %v2868
    %v2913 = vpack.c.b16 %v2873, %v2869
    %v2914 = vpack.c.b16 %v2878, %v2874
    %v2915 = vpack.c.b16 %v2879, %v2875
    %v2916 = vpack.c.b16 %v2880, %v2876
    %v2917 = vpack.c.b16 %v2881, %v2877
    %v2918 = vpack.c.b16 %v2886, %v2882
    %v2919 = vpack.c.b16 %v2887, %v2883
    %v2920 = vpack.c.b16 %v2888, %v2884
    %v2921 = vpack.c.b16 %v2889, %v2885
    %2954 = vmatprep.subr.bf16.mxu0 %v2891
    %2955 = vmatpush1.bf16.msra.mxu0 %v2890
    %2956 = vmatprep.subr.bf16.mxu0 %v2895
    %2957 = vmatpush1.bf16.msra.mxu0 %v2894
    %2958 = vmatprep.subr.bf16.mxu0 %v2899
    %2959 = vmatpush1.bf16.msra.mxu0 %v2898
    %2960 = vmatprep.subr.bf16.mxu0 %v2903
    %2961 = vmatpush1.bf16.msra.mxu0 %v2902
    %2962 = vmatprep.subr.bf16.mxu0 %v2907
    %2963 = vmatpush1.bf16.msra.mxu0 %v2906
    %2964 = vmatprep.subr.bf16.mxu0 %v2911
    %2965 = vmatpush1.bf16.msra.mxu0 %v2910
    %2966 = vmatprep.subr.bf16.mxu0 %v2915
    %2967 = vmatpush1.bf16.msra.mxu0 %v2914
    %2968 = vmatprep.subr.bf16.mxu0 %v2919
    %2969 = vmatpush1.bf16.msra.mxu0 %v2918
    %2970 = vmatprep.subr.bf16.mxu0 0
    %2971 = vmatpush1.bf16.msra.mxu0 0
    %2972 = vmatprep.subr.bf16.mxu0 0
    %2973 = vmatpush1.bf16.msra.mxu0 0
    %2974 = vmatprep.subr.bf16.mxu0 0
    %2975 = vmatpush1.bf16.msra.mxu0 0
    %2976 = vmatprep.subr.bf16.mxu0 0
    %2977 = vmatpush1.bf16.msra.mxu0 0
    %2978 = vmatprep.subr.bf16.mxu0 0
    %2979 = vmatpush1.bf16.msra.mxu0 0
    %2980 = vmatprep.subr.bf16.mxu0 0
    %2981 = vmatpush1.bf16.msra.mxu0 0
    %2982 = vmatprep.subr.bf16.mxu0 0
    %2983 = vmatpush1.bf16.msra.mxu0 0
    %2984 = vmatprep.subr.bf16.mxu0 0
    %2985 = vmatpush1.bf16.msra.mxu0 0
    %2986 = vmatprep.mubr.bf16.mxu0 0
    %2987 = vmatmul.mubr.bf16.gmra.mrb[0].mxu0 %v2761
    %v2988 = vpop.f32.mrb[0].mxu0
    %v2989 = vadd.f32 0.0, %v2988
    %v2990 = vpop.f32.mrb[0].mxu0
    %v2991 = vadd.f32 0.0, %v2990
    %v2992 = vpop.f32.mrb[0].mxu0
    %v2993 = vpop.f32.mrb[0].mxu0
    %2994 = vdwg.mxu0
    %2995 = vmatprep.subr.bf16.mxu0 %v2893
    %2996 = vmatpush1.bf16.msra.mxu0 %v2892
    %2997 = vmatprep.subr.bf16.mxu0 %v2897
    %2998 = vmatpush1.bf16.msra.mxu0 %v2896
    %2999 = vmatprep.subr.bf16.mxu0 %v2901
    %3000 = vmatpush1.bf16.msra.mxu0 %v2900
    %3001 = vmatprep.subr.bf16.mxu0 %v2905
    %3002 = vmatpush1.bf16.msra.mxu0 %v2904
    %3003 = vmatprep.subr.bf16.mxu0 %v2909
    %3004 = vmatpush1.bf16.msra.mxu0 %v2908
    %3005 = vmatprep.subr.bf16.mxu0 %v2913
    %3006 = vmatpush1.bf16.msra.mxu0 %v2912
    %3007 = vmatprep.subr.bf16.mxu0 %v2917
    %3008 = vmatpush1.bf16.msra.mxu0 %v2916
    %3009 = vmatprep.subr.bf16.mxu0 %v2921
    %3010 = vmatpush1.bf16.msra.mxu0 %v2920
    %3011 = vmatprep.subr.bf16.mxu0 0
    %3012 = vmatpush1.bf16.msra.mxu0 0
    %3013 = vmatprep.subr.bf16.mxu0 0
    %3014 = vmatpush1.bf16.msra.mxu0 0
    %3015 = vmatprep.subr.bf16.mxu0 0
    %3016 = vmatpush1.bf16.msra.mxu0 0
    %3017 = vmatprep.subr.bf16.mxu0 0
    %3018 = vmatpush1.bf16.msra.mxu0 0
    %3019 = vmatprep.subr.bf16.mxu0 0
    %3020 = vmatpush1.bf16.msra.mxu0 0
    %3021 = vmatprep.subr.bf16.mxu0 0
    %3022 = vmatpush1.bf16.msra.mxu0 0
    %3023 = vmatprep.subr.bf16.mxu0 0
    %3024 = vmatpush1.bf16.msra.mxu0 0
    %3025 = vmatprep.subr.bf16.mxu0 0
    %3026 = vmatpush1.bf16.msra.mxu0 0
    %3027 = vmatprep.mubr.bf16.mxu0 0
    %3028 = vmatmul.mubr.bf16.gmra.mrb[0].mxu0 %v2761
    %v3029 = vpop.f32.mrb[0].mxu0
    %v3030 = vadd.f32 0.0, %v3029
    %v3031 = vpop.f32.mrb[0].mxu0
    %v3032 = vadd.f32 0.0, %v3031
    %v3033 = vpop.f32.mrb[0].mxu0
    %v3034 = vpop.f32.mrb[0].mxu0
    %3035 = vdwg.mxu0
    %v3036 = vadd.f32 %v1800, %v2989
    %v3037 = vadd.f32 %v1802, %v2991
    %v3038 = vadd.f32 %v1841, %v3030
    %v3039 = vadd.f32 %v1843, %v3032
    %v3040 = vxor.u32 %v3036, 2147483648
    %v3041 = vxor.u32 %v3037, 2147483648
    %v3042 = vxor.u32 %v3038, 2147483648
    %v3043 = vmul.f32 %v3040, 1.442695
    %v3044 = vpow.pop %v3043
    %v3045 = vmul.f32 %v3041, 1.442695
    %v3046 = vpow.pop %v3045
    %v3047 = vmul.f32 %v3042, 1.442695
    %v3048 = vpow.pop %v3047
    %v3049 = vadd.f32 %v3044, 1.0
    %v3050 = vadd.f32 %v3046, 1.0
    %v3051 = vadd.f32 %v3048, 1.0
    %v3052 = vrcp.pop %v3049
    %v3053 = vmul.f32 1.0, %v3052
    %v3054 = vrcp.pop %v3050
    %v3055 = vmul.f32 1.0, %v3054
    %v3056 = vrcp.pop %v3051
    %v3057 = vmul.f32 1.0, %v3056
    %v3058 = vtanh.pop %v3039
    %v3059 = vmul.f32 %v3055, %v2756
    %v3060 = vmul.f32 %v3053, %v3058
    %v3061 = vadd.f32 %v3059, %v3060
    %v3062 = vtanh.pop %v3061
    %v3063 = vmul.f32 %v3057, %v3062
    %v3064 = vmax.f32 %v3063, 0.0
    %3065 = vst [vmem:[#allocation3 + $0x18] sm:$0xff] %v3064
    %v3066 = vpack.c.bf16 %v3063, %v3063
    %v3067 = vld [vmem:[#allocation8] sm:$0xff]
    %v3068 = vld [vmem:[#allocation8 + $0x8] sm:$0xff]
    %v3069 = vld [vmem:[#allocation8 + $0x10] sm:$0xff]
    %v3070 = vld [vmem:[#allocation8 + $0x18] sm:$0xff]
    %v3071 = vld [vmem:[#allocation8 + $0x20] sm:$0xff]
    %v3072 = vld [vmem:[#allocation8 + $0x28] sm:$0xff]
    %v3073 = vld [vmem:[#allocation8 + $0x30] sm:$0xff]
    %v3074 = vld [vmem:[#allocation8 + $0x38] sm:$0xff]
    %v3075 = vld [vmem:[#allocation8 + $0x40] sm:$0xff]
    %v3076 = vld [vmem:[#allocation8 + $0x48] sm:$0xff]
    %v3077 = vld [vmem:[#allocation8 + $0x50] sm:$0xff]
    %v3078 = vld [vmem:[#allocation8 + $0x58] sm:$0xff]
    %v3079 = vld [vmem:[#allocation8 + $0x60] sm:$0xff]
    %v3080 = vld [vmem:[#allocation8 + $0x68] sm:$0xff]
    %v3081 = vld [vmem:[#allocation8 + $0x70] sm:$0xff]
    %v3082 = vld [vmem:[#allocation8 + $0x78] sm:$0xff]
    %v3083 = vld [vmem:[#allocation8 + $0x80] sm:$0xff]
    %v3084 = vld [vmem:[#allocation8 + $0x88] sm:$0xff]
    %v3085 = vld [vmem:[#allocation8 + $0x90] sm:$0xff]
    %v3086 = vld [vmem:[#allocation8 + $0x98] sm:$0xff]
    %v3087 = vld [vmem:[#allocation8 + $0xa0] sm:$0xff]
    %v3088 = vld [vmem:[#allocation8 + $0xa8] sm:$0xff]
    %v3089 = vld [vmem:[#allocation8 + $0xb0] sm:$0xff]
    %v3090 = vld [vmem:[#allocation8 + $0xb8] sm:$0xff]
    %v3091 = vld [vmem:[#allocation8 + $0xc0] sm:$0xff]
    %v3092 = vld [vmem:[#allocation8 + $0xc8] sm:$0xff]
    %v3093 = vld [vmem:[#allocation8 + $0xd0] sm:$0xff]
    %v3094 = vld [vmem:[#allocation8 + $0xd8] sm:$0xff]
    %v3095 = vld [vmem:[#allocation8 + $0xe0] sm:$0xff]
    %v3096 = vld [vmem:[#allocation8 + $0xe8] sm:$0xff]
    %v3097 = vld [vmem:[#allocation8 + $0xf0] sm:$0xff]
    %v3098 = vld [vmem:[#allocation8 + $0xf8] sm:$0xff]
    %v3131 = vunpack.c.l.b16 %v3067
    %v3132 = vunpack.c.h.b16 %v3067
    %v3133 = vunpack.c.l.b16 %v3068
    %v3134 = vunpack.c.h.b16 %v3068
    %v3135 = vunpack.c.l.b16 %v3069
    %v3136 = vunpack.c.h.b16 %v3069
    %v3137 = vunpack.c.l.b16 %v3070
    %v3138 = vunpack.c.h.b16 %v3070
    %v3139 = vunpack.c.l.b16 %v3071
    %v3140 = vunpack.c.h.b16 %v3071
    %v3141 = vunpack.c.l.b16 %v3072
    %v3142 = vunpack.c.h.b16 %v3072
    %v3143 = vunpack.c.l.b16 %v3073
    %v3144 = vunpack.c.h.b16 %v3073
    %v3145 = vunpack.c.l.b16 %v3074
    %v3146 = vunpack.c.h.b16 %v3074
    %v3147 = vunpack.c.l.b16 %v3075
    %v3148 = vunpack.c.h.b16 %v3075
    %v3149 = vunpack.c.l.b16 %v3076
    %v3150 = vunpack.c.h.b16 %v3076
    %v3151 = vunpack.c.l.b16 %v3077
    %v3152 = vunpack.c.h.b16 %v3077
    %v3153 = vunpack.c.l.b16 %v3078
    %v3154 = vunpack.c.h.b16 %v3078
    %v3155 = vunpack.c.l.b16 %v3079
    %v3156 = vunpack.c.h.b16 %v3079
    %v3157 = vunpack.c.l.b16 %v3080
    %v3158 = vunpack.c.h.b16 %v3080
    %v3159 = vunpack.c.l.b16 %v3081
    %v3160 = vunpack.c.h.b16 %v3081
    %v3161 = vunpack.c.l.b16 %v3082
    %v3162 = vunpack.c.h.b16 %v3082
    %v3163 = vunpack.c.l.b16 %v3083
    %v3164 = vunpack.c.h.b16 %v3083
    %v3165 = vunpack.c.l.b16 %v3084
    %v3166 = vunpack.c.h.b16 %v3084
    %v3167 = vunpack.c.l.b16 %v3085
    %v3168 = vunpack.c.h.b16 %v3085
    %v3169 = vunpack.c.l.b16 %v3086
    %v3170 = vunpack.c.h.b16 %v3086
    %v3171 = vunpack.c.l.b16 %v3087
    %v3172 = vunpack.c.h.b16 %v3087
    %v3173 = vunpack.c.l.b16 %v3088
    %v3174 = vunpack.c.h.b16 %v3088
    %v3175 = vunpack.c.l.b16 %v3089
    %v3176 = vunpack.c.h.b16 %v3089
    %v3177 = vunpack.c.l.b16 %v3090
    %v3178 = vunpack.c.h.b16 %v3090
    %v3179 = vunpack.c.l.b16 %v3091
    %v3180 = vunpack.c.h.b16 %v3091
    %v3181 = vunpack.c.l.b16 %v3092
    %v3182 = vunpack.c.h.b16 %v3092
    %v3183 = vunpack.c.l.b16 %v3093
    %v3184 = vunpack.c.h.b16 %v3093
    %v3185 = vunpack.c.l.b16 %v3094
    %v3186 = vunpack.c.h.b16 %v3094
    %v3187 = vunpack.c.l.b16 %v3095
    %v3188 = vunpack.c.h.b16 %v3095
    %v3189 = vunpack.c.l.b16 %v3096
    %v3190 = vunpack.c.h.b16 %v3096
    %v3191 = vunpack.c.l.b16 %v3097
    %v3192 = vunpack.c.h.b16 %v3097
    %v3193 = vunpack.c.l.b16 %v3098
    %v3194 = vunpack.c.h.b16 %v3098
    %v3195 = vpack.c.b16 %v3135, %v3131
    %v3196 = vpack.c.b16 %v3136, %v3132
    %v3197 = vpack.c.b16 %v3137, %v3133
    %v3198 = vpack.c.b16 %v3138, %v3134
    %v3199 = vpack.c.b16 %v3143, %v3139
    %v3200 = vpack.c.b16 %v3144, %v3140
    %v3201 = vpack.c.b16 %v3145, %v3141
    %v3202 = vpack.c.b16 %v3146, %v3142
    %v3203 = vpack.c.b16 %v3151, %v3147
    %v3204 = vpack.c.b16 %v3152, %v3148
    %v3205 = vpack.c.b16 %v3153, %v3149
    %v3206 = vpack.c.b16 %v3154, %v3150
    %v3207 = vpack.c.b16 %v3159, %v3155
    %v3208 = vpack.c.b16 %v3160, %v3156
    %v3209 = vpack.c.b16 %v3161, %v3157
    %v3210 = vpack.c.b16 %v3162, %v3158
    %v3211 = vpack.c.b16 %v3167, %v3163
    %v3212 = vpack.c.b16 %v3168, %v3164
    %v3213 = vpack.c.b16 %v3169, %v3165
    %v3214 = vpack.c.b16 %v3170, %v3166
    %v3215 = vpack.c.b16 %v3175, %v3171
    %v3216 = vpack.c.b16 %v3176, %v3172
    %v3217 = vpack.c.b16 %v3177, %v3173
    %v3218 = vpack.c.b16 %v3178, %v3174
    %v3219 = vpack.c.b16 %v3183, %v3179
    %v3220 = vpack.c.b16 %v3184, %v3180
    %v3221 = vpack.c.b16 %v3185, %v3181
    %v3222 = vpack.c.b16 %v3186, %v3182
    %v3223 = vpack.c.b16 %v3191, %v3187
    %v3224 = vpack.c.b16 %v3192, %v3188
    %v3225 = vpack.c.b16 %v3193, %v3189
    %v3226 = vpack.c.b16 %v3194, %v3190
    %3259 = vmatprep.subr.bf16.mxu0 %v3196
    %3260 = vmatpush1.bf16.msra.mxu0 %v3195
    %3261 = vmatprep.subr.bf16.mxu0 %v3200
    %3262 = vmatpush1.bf16.msra.mxu0 %v3199
    %3263 = vmatprep.subr.bf16.mxu0 %v3204
    %3264 = vmatpush1.bf16.msra.mxu0 %v3203
    %3265 = vmatprep.subr.bf16.mxu0 %v3208
    %3266 = vmatpush1.bf16.msra.mxu0 %v3207
    %3267 = vmatprep.subr.bf16.mxu0 %v3212
    %3268 = vmatpush1.bf16.msra.mxu0 %v3211
    %3269 = vmatprep.subr.bf16.mxu0 %v3216
    %3270 = vmatpush1.bf16.msra.mxu0 %v3215
    %3271 = vmatprep.subr.bf16.mxu0 %v3220
    %3272 = vmatpush1.bf16.msra.mxu0 %v3219
    %3273 = vmatprep.subr.bf16.mxu0 %v3224
    %3274 = vmatpush1.bf16.msra.mxu0 %v3223
    %3275 = vmatprep.subr.bf16.mxu0 0
    %3276 = vmatpush1.bf16.msra.mxu0 0
    %3277 = vmatprep.subr.bf16.mxu0 0
    %3278 = vmatpush1.bf16.msra.mxu0 0
    %3279 = vmatprep.subr.bf16.mxu0 0
    %3280 = vmatpush1.bf16.msra.mxu0 0
    %3281 = vmatprep.subr.bf16.mxu0 0
    %3282 = vmatpush1.bf16.msra.mxu0 0
    %3283 = vmatprep.subr.bf16.mxu0 0
    %3284 = vmatpush1.bf16.msra.mxu0 0
    %3285 = vmatprep.subr.bf16.mxu0 0
    %3286 = vmatpush1.bf16.msra.mxu0 0
    %3287 = vmatprep.subr.bf16.mxu0 0
    %3288 = vmatpush1.bf16.msra.mxu0 0
    %3289 = vmatprep.subr.bf16.mxu0 0
    %3290 = vmatpush1.bf16.msra.mxu0 0
    %3291 = vmatprep.mubr.bf16.mxu0 0
    %3292 = vmatmul.mubr.bf16.gmra.mrb[0].mxu0 %v3066
    %v3293 = vpop.f32.mrb[0].mxu0
    %v3294 = vadd.f32 0.0, %v3293
    %v3295 = vpop.f32.mrb[0].mxu0
    %v3296 = vadd.f32 0.0, %v3295
    %v3297 = vpop.f32.mrb[0].mxu0
    %v3298 = vpop.f32.mrb[0].mxu0
    %3299 = vdwg.mxu0
    %3300 = vmatprep.subr.bf16.mxu0 %v3198
    %3301 = vmatpush1.bf16.msra.mxu0 %v3197
    %3302 = vmatprep.subr.bf16.mxu0 %v3202
    %3303 = vmatpush1.bf16.msra.mxu0 %v3201
    %3304 = vmatprep.subr.bf16.mxu0 %v3206
    %3305 = vmatpush1.bf16.msra.mxu0 %v3205
    %3306 = vmatprep.subr.bf16.mxu0 %v3210
    %3307 = vmatpush1.bf16.msra.mxu0 %v3209
    %3308 = vmatprep.subr.bf16.mxu0 %v3214
    %3309 = vmatpush1.bf16.msra.mxu0 %v3213
    %3310 = vmatprep.subr.bf16.mxu0 %v3218
    %3311 = vmatpush1.bf16.msra.mxu0 %v3217
    %3312 = vmatprep.subr.bf16.mxu0 %v3222
    %3313 = vmatpush1.bf16.msra.mxu0 %v3221
    %3314 = vmatprep.subr.bf16.mxu0 %v3226
    %3315 = vmatpush1.bf16.msra.mxu0 %v3225
    %3316 = vmatprep.subr.bf16.mxu0 0
    %3317 = vmatpush1.bf16.msra.mxu0 0
    %3318 = vmatprep.subr.bf16.mxu0 0
    %3319 = vmatpush1.bf16.msra.mxu0 0
    %3320 = vmatprep.subr.bf16.mxu0 0
    %3321 = vmatpush1.bf16.msra.mxu0 0
    %3322 = vmatprep.subr.bf16.mxu0 0
    %3323 = vmatpush1.bf16.msra.mxu0 0
    %3324 = vmatprep.subr.bf16.mxu0 0
    %3325 = vmatpush1.bf16.msra.mxu0 0
    %3326 = vmatprep.subr.bf16.mxu0 0
    %3327 = vmatpush1.bf16.msra.mxu0 0
    %3328 = vmatprep.subr.bf16.mxu0 0
    %3329 = vmatpush1.bf16.msra.mxu0 0
    %3330 = vmatprep.subr.bf16.mxu0 0
    %3331 = vmatpush1.bf16.msra.mxu0 0
    %3332 = vmatprep.mubr.bf16.mxu0 0
    %3333 = vmatmul.mubr.bf16.gmra.mrb[0].mxu0 %v3066
    %v3334 = vpop.f32.mrb[0].mxu0
    %v3335 = vadd.f32 0.0, %v3334
    %v3336 = vpop.f32.mrb[0].mxu0
    %v3337 = vadd.f32 0.0, %v3336
    %v3338 = vpop.f32.mrb[0].mxu0
    %v3339 = vpop.f32.mrb[0].mxu0
    %3340 = vdwg.mxu0
    %v3341 = vadd.f32 %v1800, %v3294
    %v3342 = vadd.f32 %v1802, %v3296
    %v3343 = vadd.f32 %v1841, %v3335
    %v3344 = vadd.f32 %v1843, %v3337
    %v3345 = vxor.u32 %v3341, 2147483648
    %v3346 = vxor.u32 %v3342, 2147483648
    %v3347 = vxor.u32 %v3343, 2147483648
    %v3348 = vmul.f32 %v3345, 1.442695
    %v3349 = vpow.pop %v3348
    %v3350 = vmul.f32 %v3346, 1.442695
    %v3351 = vpow.pop %v3350
    %v3352 = vmul.f32 %v3347, 1.442695
    %v3353 = vpow.pop %v3352
    %v3354 = vadd.f32 %v3349, 1.0
    %v3355 = vadd.f32 %v3351, 1.0
    %v3356 = vadd.f32 %v3353, 1.0
    %v3357 = vrcp.pop %v3354
    %v3358 = vmul.f32 1.0, %v3357
    %v3359 = vrcp.pop %v3355
    %v3360 = vmul.f32 1.0, %v3359
    %v3361 = vrcp.pop %v3356
    %v3362 = vmul.f32 1.0, %v3361
    %v3363 = vtanh.pop %v3344
    %v3364 = vmul.f32 %v3360, %v3061
    %v3365 = vmul.f32 %v3358, %v3363
    %v3366 = vadd.f32 %v3364, %v3365
    %v3367 = vtanh.pop %v3366
    %v3368 = vmul.f32 %v3362, %v3367
    %v3369 = vmax.f32 %v3368, 0.0
    %3370 = vst [vmem:[#allocation3 + $0x20] sm:$0xff] %v3369
    %v3371 = vpack.c.bf16 %v3368, %v3368
    %v3372 = vld [vmem:[#allocation8] sm:$0xff]
    %v3373 = vld [vmem:[#allocation8 + $0x8] sm:$0xff]
    %v3374 = vld [vmem:[#allocation8 + $0x10] sm:$0xff]
    %v3375 = vld [vmem:[#allocation8 + $0x18] sm:$0xff]
    %v3376 = vld [vmem:[#allocation8 + $0x20] sm:$0xff]
    %v3377 = vld [vmem:[#allocation8 + $0x28] sm:$0xff]
    %v3378 = vld [vmem:[#allocation8 + $0x30] sm:$0xff]
    %v3379 = vld [vmem:[#allocation8 + $0x38] sm:$0xff]
    %v3380 = vld [vmem:[#allocation8 + $0x40] sm:$0xff]
    %v3381 = vld [vmem:[#allocation8 + $0x48] sm:$0xff]
    %v3382 = vld [vmem:[#allocation8 + $0x50] sm:$0xff]
    %v3383 = vld [vmem:[#allocation8 + $0x58] sm:$0xff]
    %v3384 = vld [vmem:[#allocation8 + $0x60] sm:$0xff]
    %v3385 = vld [vmem:[#allocation8 + $0x68] sm:$0xff]
    %v3386 = vld [vmem:[#allocation8 + $0x70] sm:$0xff]
    %v3387 = vld [vmem:[#allocation8 + $0x78] sm:$0xff]
    %v3388 = vld [vmem:[#allocation8 + $0x80] sm:$0xff]
    %v3389 = vld [vmem:[#allocation8 + $0x88] sm:$0xff]
    %v3390 = vld [vmem:[#allocation8 + $0x90] sm:$0xff]
    %v3391 = vld [vmem:[#allocation8 + $0x98] sm:$0xff]
    %v3392 = vld [vmem:[#allocation8 + $0xa0] sm:$0xff]
    %v3393 = vld [vmem:[#allocation8 + $0xa8] sm:$0xff]
    %v3394 = vld [vmem:[#allocation8 + $0xb0] sm:$0xff]
    %v3395 = vld [vmem:[#allocation8 + $0xb8] sm:$0xff]
    %v3396 = vld [vmem:[#allocation8 + $0xc0] sm:$0xff]
    %v3397 = vld [vmem:[#allocation8 + $0xc8] sm:$0xff]
    %v3398 = vld [vmem:[#allocation8 + $0xd0] sm:$0xff]
    %v3399 = vld [vmem:[#allocation8 + $0xd8] sm:$0xff]
    %v3400 = vld [vmem:[#allocation8 + $0xe0] sm:$0xff]
    %v3401 = vld [vmem:[#allocation8 + $0xe8] sm:$0xff]
    %v3402 = vld [vmem:[#allocation8 + $0xf0] sm:$0xff]
    %v3403 = vld [vmem:[#allocation8 + $0xf8] sm:$0xff]
    %v3436 = vunpack.c.l.b16 %v3372
    %v3437 = vunpack.c.h.b16 %v3372
    %v3438 = vunpack.c.l.b16 %v3373
    %v3439 = vunpack.c.h.b16 %v3373
    %v3440 = vunpack.c.l.b16 %v3374
    %v3441 = vunpack.c.h.b16 %v3374
    %v3442 = vunpack.c.l.b16 %v3375
    %v3443 = vunpack.c.h.b16 %v3375
    %v3444 = vunpack.c.l.b16 %v3376
    %v3445 = vunpack.c.h.b16 %v3376
    %v3446 = vunpack.c.l.b16 %v3377
    %v3447 = vunpack.c.h.b16 %v3377
    %v3448 = vunpack.c.l.b16 %v3378
    %v3449 = vunpack.c.h.b16 %v3378
    %v3450 = vunpack.c.l.b16 %v3379
    %v3451 = vunpack.c.h.b16 %v3379
    %v3452 = vunpack.c.l.b16 %v3380
    %v3453 = vunpack.c.h.b16 %v3380
    %v3454 = vunpack.c.l.b16 %v3381
    %v3455 = vunpack.c.h.b16 %v3381
    %v3456 = vunpack.c.l.b16 %v3382
    %v3457 = vunpack.c.h.b16 %v3382
    %v3458 = vunpack.c.l.b16 %v3383
    %v3459 = vunpack.c.h.b16 %v3383
    %v3460 = vunpack.c.l.b16 %v3384
    %v3461 = vunpack.c.h.b16 %v3384
    %v3462 = vunpack.c.l.b16 %v3385
    %v3463 = vunpack.c.h.b16 %v3385
    %v3464 = vunpack.c.l.b16 %v3386
    %v3465 = vunpack.c.h.b16 %v3386
    %v3466 = vunpack.c.l.b16 %v3387
    %v3467 = vunpack.c.h.b16 %v3387
    %v3468 = vunpack.c.l.b16 %v3388
    %v3469 = vunpack.c.h.b16 %v3388
    %v3470 = vunpack.c.l.b16 %v3389
    %v3471 = vunpack.c.h.b16 %v3389
    %v3472 = vunpack.c.l.b16 %v3390
    %v3473 = vunpack.c.h.b16 %v3390
    %v3474 = vunpack.c.l.b16 %v3391
    %v3475 = vunpack.c.h.b16 %v3391
    %v3476 = vunpack.c.l.b16 %v3392
    %v3477 = vunpack.c.h.b16 %v3392
    %v3478 = vunpack.c.l.b16 %v3393
    %v3479 = vunpack.c.h.b16 %v3393
    %v3480 = vunpack.c.l.b16 %v3394
    %v3481 = vunpack.c.h.b16 %v3394
    %v3482 = vunpack.c.l.b16 %v3395
    %v3483 = vunpack.c.h.b16 %v3395
    %v3484 = vunpack.c.l.b16 %v3396
    %v3485 = vunpack.c.h.b16 %v3396
    %v3486 = vunpack.c.l.b16 %v3397
    %v3487 = vunpack.c.h.b16 %v3397
    %v3488 = vunpack.c.l.b16 %v3398
    %v3489 = vunpack.c.h.b16 %v3398
    %v3490 = vunpack.c.l.b16 %v3399
    %v3491 = vunpack.c.h.b16 %v3399
    %v3492 = vunpack.c.l.b16 %v3400
    %v3493 = vunpack.c.h.b16 %v3400
    %v3494 = vunpack.c.l.b16 %v3401
    %v3495 = vunpack.c.h.b16 %v3401
    %v3496 = vunpack.c.l.b16 %v3402
    %v3497 = vunpack.c.h.b16 %v3402
    %v3498 = vunpack.c.l.b16 %v3403
    %v3499 = vunpack.c.h.b16 %v3403
    %v3500 = vpack.c.b16 %v3440, %v3436
    %v3501 = vpack.c.b16 %v3441, %v3437
    %v3502 = vpack.c.b16 %v3442, %v3438
    %v3503 = vpack.c.b16 %v3443, %v3439
    %v3504 = vpack.c.b16 %v3448, %v3444
    %v3505 = vpack.c.b16 %v3449, %v3445
    %v3506 = vpack.c.b16 %v3450, %v3446
    %v3507 = vpack.c.b16 %v3451, %v3447
    %v3508 = vpack.c.b16 %v3456, %v3452
    %v3509 = vpack.c.b16 %v3457, %v3453
    %v3510 = vpack.c.b16 %v3458, %v3454
    %v3511 = vpack.c.b16 %v3459, %v3455
    %v3512 = vpack.c.b16 %v3464, %v3460
    %v3513 = vpack.c.b16 %v3465, %v3461
    %v3514 = vpack.c.b16 %v3466, %v3462
    %v3515 = vpack.c.b16 %v3467, %v3463
    %v3516 = vpack.c.b16 %v3472, %v3468
    %v3517 = vpack.c.b16 %v3473, %v3469
    %v3518 = vpack.c.b16 %v3474, %v3470
    %v3519 = vpack.c.b16 %v3475, %v3471
    %v3520 = vpack.c.b16 %v3480, %v3476
    %v3521 = vpack.c.b16 %v3481, %v3477
    %v3522 = vpack.c.b16 %v3482, %v3478
    %v3523 = vpack.c.b16 %v3483, %v3479
    %v3524 = vpack.c.b16 %v3488, %v3484
    %v3525 = vpack.c.b16 %v3489, %v3485
    %v3526 = vpack.c.b16 %v3490, %v3486
    %v3527 = vpack.c.b16 %v3491, %v3487
    %v3528 = vpack.c.b16 %v3496, %v3492
    %v3529 = vpack.c.b16 %v3497, %v3493
    %v3530 = vpack.c.b16 %v3498, %v3494
    %v3531 = vpack.c.b16 %v3499, %v3495
    %3564 = vmatprep.subr.bf16.mxu0 %v3501
    %3565 = vmatpush1.bf16.msra.mxu0 %v3500
    %3566 = vmatprep.subr.bf16.mxu0 %v3505
    %3567 = vmatpush1.bf16.msra.mxu0 %v3504
    %3568 = vmatprep.subr.bf16.mxu0 %v3509
    %3569 = vmatpush1.bf16.msra.mxu0 %v3508
    %3570 = vmatprep.subr.bf16.mxu0 %v3513
    %3571 = vmatpush1.bf16.msra.mxu0 %v3512
    %3572 = vmatprep.subr.bf16.mxu0 %v3517
    %3573 = vmatpush1.bf16.msra.mxu0 %v3516
    %3574 = vmatprep.subr.bf16.mxu0 %v3521
    %3575 = vmatpush1.bf16.msra.mxu0 %v3520
    %3576 = vmatprep.subr.bf16.mxu0 %v3525
    %3577 = vmatpush1.bf16.msra.mxu0 %v3524
    %3578 = vmatprep.subr.bf16.mxu0 %v3529
    %3579 = vmatpush1.bf16.msra.mxu0 %v3528
    %3580 = vmatprep.subr.bf16.mxu0 0
    %3581 = vmatpush1.bf16.msra.mxu0 0
    %3582 = vmatprep.subr.bf16.mxu0 0
    %3583 = vmatpush1.bf16.msra.mxu0 0
    %3584 = vmatprep.subr.bf16.mxu0 0
    %3585 = vmatpush1.bf16.msra.mxu0 0
    %3586 = vmatprep.subr.bf16.mxu0 0
    %3587 = vmatpush1.bf16.msra.mxu0 0
    %3588 = vmatprep.subr.bf16.mxu0 0
    %3589 = vmatpush1.bf16.msra.mxu0 0
    %3590 = vmatprep.subr.bf16.mxu0 0
    %3591 = vmatpush1.bf16.msra.mxu0 0
    %3592 = vmatprep.subr.bf16.mxu0 0
    %3593 = vmatpush1.bf16.msra.mxu0 0
    %3594 = vmatprep.subr.bf16.mxu0 0
    %3595 = vmatpush1.bf16.msra.mxu0 0
    %3596 = vmatprep.mubr.bf16.mxu0 0
    %3597 = vmatmul.mubr.bf16.gmra.mrb[0].mxu0 %v3371
    %v3598 = vpop.f32.mrb[0].mxu0
    %v3599 = vadd.f32 0.0, %v3598
    %v3600 = vpop.f32.mrb[0].mxu0
    %v3601 = vadd.f32 0.0, %v3600
    %v3602 = vpop.f32.mrb[0].mxu0
    %v3603 = vpop.f32.mrb[0].mxu0
    %3604 = vdwg.mxu0
    %3605 = vmatprep.subr.bf16.mxu0 %v3503
    %3606 = vmatpush1.bf16.msra.mxu0 %v3502
    %3607 = vmatprep.subr.bf16.mxu0 %v3507
    %3608 = vmatpush1.bf16.msra.mxu0 %v3506
    %3609 = vmatprep.subr.bf16.mxu0 %v3511
    %3610 = vmatpush1.bf16.msra.mxu0 %v3510
    %3611 = vmatprep.subr.bf16.mxu0 %v3515
    %3612 = vmatpush1.bf16.msra.mxu0 %v3514
    %3613 = vmatprep.subr.bf16.mxu0 %v3519
    %3614 = vmatpush1.bf16.msra.mxu0 %v3518
    %3615 = vmatprep.subr.bf16.mxu0 %v3523
    %3616 = vmatpush1.bf16.msra.mxu0 %v3522
    %3617 = vmatprep.subr.bf16.mxu0 %v3527
    %3618 = vmatpush1.bf16.msra.mxu0 %v3526
    %3619 = vmatprep.subr.bf16.mxu0 %v3531
    %3620 = vmatpush1.bf16.msra.mxu0 %v3530
    %3621 = vmatprep.subr.bf16.mxu0 0
    %3622 = vmatpush1.bf16.msra.mxu0 0
    %3623 = vmatprep.subr.bf16.mxu0 0
    %3624 = vmatpush1.bf16.msra.mxu0 0
    %3625 = vmatprep.subr.bf16.mxu0 0
    %3626 = vmatpush1.bf16.msra.mxu0 0
    %3627 = vmatprep.subr.bf16.mxu0 0
    %3628 = vmatpush1.bf16.msra.mxu0 0
    %3629 = vmatprep.subr.bf16.mxu0 0
    %3630 = vmatpush1.bf16.msra.mxu0 0
    %3631 = vmatprep.subr.bf16.mxu0 0
    %3632 = vmatpush1.bf16.msra.mxu0 0
    %3633 = vmatprep.subr.bf16.mxu0 0
    %3634 = vmatpush1.bf16.msra.mxu0 0
    %3635 = vmatprep.subr.bf16.mxu0 0
    %3636 = vmatpush1.bf16.msra.mxu0 0
    %3637 = vmatprep.mubr.bf16.mxu0 0
    %3638 = vmatmul.mubr.bf16.gmra.mrb[0].mxu0 %v3371
    %v3639 = vpop.f32.mrb[0].mxu0
    %v3640 = vadd.f32 0.0, %v3639
    %v3641 = vpop.f32.mrb[0].mxu0
    %v3642 = vadd.f32 0.0, %v3641
    %v3643 = vpop.f32.mrb[0].mxu0
    %v3644 = vpop.f32.mrb[0].mxu0
    %3645 = vdwg.mxu0
    %v3646 = vadd.f32 %v1800, %v3599
    %v3647 = vadd.f32 %v1802, %v3601
    %v3648 = vadd.f32 %v1841, %v3640
    %v3649 = vadd.f32 %v1843, %v3642
    %v3650 = vxor.u32 %v3646, 2147483648
    %v3651 = vxor.u32 %v3647, 2147483648
    %v3652 = vxor.u32 %v3648, 2147483648
    %v3653 = vmul.f32 %v3650, 1.442695
    %v3654 = vpow.pop %v3653
    %v3655 = vmul.f32 %v3651, 1.442695
    %v3656 = vpow.pop %v3655
    %v3657 = vmul.f32 %v3652, 1.442695
    %v3658 = vpow.pop %v3657
    %v3659 = vadd.f32 %v3654, 1.0
    %v3660 = vadd.f32 %v3656, 1.0
    %v3661 = vadd.f32 %v3658, 1.0
    %v3662 = vrcp.pop %v3659
    %v3663 = vmul.f32 1.0, %v3662
    %v3664 = vrcp.pop %v3660
    %v3665 = vmul.f32 1.0, %v3664
    %v3666 = vrcp.pop %v3661
    %v3667 = vmul.f32 1.0, %v3666
    %v3668 = vtanh.pop %v3649
    %v3669 = vmul.f32 %v3665, %v3366
    %v3670 = vmul.f32 %v3663, %v3668
    %v3671 = vadd.f32 %v3669, %v3670
    %v3672 = vtanh.pop %v3671
    %v3673 = vmul.f32 %v3667, %v3672
    %v3674 = vmax.f32 %v3673, 0.0
    %3675 = vst [vmem:[#allocation3 + $0x28] sm:$0xff] %v3674
    %v3676 = vpack.c.bf16 %v3673, %v3673
    %v3677 = vld [vmem:[#allocation8] sm:$0xff]
    %v3678 = vld [vmem:[#allocation8 + $0x8] sm:$0xff]
    %v3679 = vld [vmem:[#allocation8 + $0x10] sm:$0xff]
    %v3680 = vld [vmem:[#allocation8 + $0x18] sm:$0xff]
    %v3681 = vld [vmem:[#allocation8 + $0x20] sm:$0xff]
    %v3682 = vld [vmem:[#allocation8 + $0x28] sm:$0xff]
    %v3683 = vld [vmem:[#allocation8 + $0x30] sm:$0xff]
    %v3684 = vld [vmem:[#allocation8 + $0x38] sm:$0xff]
    %v3685 = vld [vmem:[#allocation8 + $0x40] sm:$0xff]
    %v3686 = vld [vmem:[#allocation8 + $0x48] sm:$0xff]
    %v3687 = vld [vmem:[#allocation8 + $0x50] sm:$0xff]
    %v3688 = vld [vmem:[#allocation8 + $0x58] sm:$0xff]
    %v3689 = vld [vmem:[#allocation8 + $0x60] sm:$0xff]
    %v3690 = vld [vmem:[#allocation8 + $0x68] sm:$0xff]
    %v3691 = vld [vmem:[#allocation8 + $0x70] sm:$0xff]
    %v3692 = vld [vmem:[#allocation8 + $0x78] sm:$0xff]
    %v3693 = vld [vmem:[#allocation8 + $0x80] sm:$0xff]
    %v3694 = vld [vmem:[#allocation8 + $0x88] sm:$0xff]
    %v3695 = vld [vmem:[#allocation8 + $0x90] sm:$0xff]
    %v3696 = vld [vmem:[#allocation8 + $0x98] sm:$0xff]
    %v3697 = vld [vmem:[#allocation8 + $0xa0] sm:$0xff]
    %v3698 = vld [vmem:[#allocation8 + $0xa8] sm:$0xff]
    %v3699 = vld [vmem:[#allocation8 + $0xb0] sm:$0xff]
    %v3700 = vld [vmem:[#allocation8 + $0xb8] sm:$0xff]
    %v3701 = vld [vmem:[#allocation8 + $0xc0] sm:$0xff]
    %v3702 = vld [vmem:[#allocation8 + $0xc8] sm:$0xff]
    %v3703 = vld [vmem:[#allocation8 + $0xd0] sm:$0xff]
    %v3704 = vld [vmem:[#allocation8 + $0xd8] sm:$0xff]
    %v3705 = vld [vmem:[#allocation8 + $0xe0] sm:$0xff]
    %v3706 = vld [vmem:[#allocation8 + $0xe8] sm:$0xff]
    %v3707 = vld [vmem:[#allocation8 + $0xf0] sm:$0xff]
    %v3708 = vld [vmem:[#allocation8 + $0xf8] sm:$0xff]
    %v3741 = vunpack.c.l.b16 %v3677
    %v3742 = vunpack.c.h.b16 %v3677
    %v3743 = vunpack.c.l.b16 %v3678
    %v3744 = vunpack.c.h.b16 %v3678
    %v3745 = vunpack.c.l.b16 %v3679
    %v3746 = vunpack.c.h.b16 %v3679
    %v3747 = vunpack.c.l.b16 %v3680
    %v3748 = vunpack.c.h.b16 %v3680
    %v3749 = vunpack.c.l.b16 %v3681
    %v3750 = vunpack.c.h.b16 %v3681
    %v3751 = vunpack.c.l.b16 %v3682
    %v3752 = vunpack.c.h.b16 %v3682
    %v3753 = vunpack.c.l.b16 %v3683
    %v3754 = vunpack.c.h.b16 %v3683
    %v3755 = vunpack.c.l.b16 %v3684
    %v3756 = vunpack.c.h.b16 %v3684
    %v3757 = vunpack.c.l.b16 %v3685
    %v3758 = vunpack.c.h.b16 %v3685
    %v3759 = vunpack.c.l.b16 %v3686
    %v3760 = vunpack.c.h.b16 %v3686
    %v3761 = vunpack.c.l.b16 %v3687
    %v3762 = vunpack.c.h.b16 %v3687
    %v3763 = vunpack.c.l.b16 %v3688
    %v3764 = vunpack.c.h.b16 %v3688
    %v3765 = vunpack.c.l.b16 %v3689
    %v3766 = vunpack.c.h.b16 %v3689
    %v3767 = vunpack.c.l.b16 %v3690
    %v3768 = vunpack.c.h.b16 %v3690
    %v3769 = vunpack.c.l.b16 %v3691
    %v3770 = vunpack.c.h.b16 %v3691
    %v3771 = vunpack.c.l.b16 %v3692
    %v3772 = vunpack.c.h.b16 %v3692
    %v3773 = vunpack.c.l.b16 %v3693
    %v3774 = vunpack.c.h.b16 %v3693
    %v3775 = vunpack.c.l.b16 %v3694
    %v3776 = vunpack.c.h.b16 %v3694
    %v3777 = vunpack.c.l.b16 %v3695
    %v3778 = vunpack.c.h.b16 %v3695
    %v3779 = vunpack.c.l.b16 %v3696
    %v3780 = vunpack.c.h.b16 %v3696
    %v3781 = vunpack.c.l.b16 %v3697
    %v3782 = vunpack.c.h.b16 %v3697
    %v3783 = vunpack.c.l.b16 %v3698
    %v3784 = vunpack.c.h.b16 %v3698
    %v3785 = vunpack.c.l.b16 %v3699
    %v3786 = vunpack.c.h.b16 %v3699
    %v3787 = vunpack.c.l.b16 %v3700
    %v3788 = vunpack.c.h.b16 %v3700
    %v3789 = vunpack.c.l.b16 %v3701
    %v3790 = vunpack.c.h.b16 %v3701
    %v3791 = vunpack.c.l.b16 %v3702
    %v3792 = vunpack.c.h.b16 %v3702
    %v3793 = vunpack.c.l.b16 %v3703
    %v3794 = vunpack.c.h.b16 %v3703
    %v3795 = vunpack.c.l.b16 %v3704
    %v3796 = vunpack.c.h.b16 %v3704
    %v3797 = vunpack.c.l.b16 %v3705
    %v3798 = vunpack.c.h.b16 %v3705
    %v3799 = vunpack.c.l.b16 %v3706
    %v3800 = vunpack.c.h.b16 %v3706
    %v3801 = vunpack.c.l.b16 %v3707
    %v3802 = vunpack.c.h.b16 %v3707
    %v3803 = vunpack.c.l.b16 %v3708
    %v3804 = vunpack.c.h.b16 %v3708
    %v3805 = vpack.c.b16 %v3745, %v3741
    %v3806 = vpack.c.b16 %v3746, %v3742
    %v3807 = vpack.c.b16 %v3747, %v3743
    %v3808 = vpack.c.b16 %v3748, %v3744
    %v3809 = vpack.c.b16 %v3753, %v3749
    %v3810 = vpack.c.b16 %v3754, %v3750
    %v3811 = vpack.c.b16 %v3755, %v3751
    %v3812 = vpack.c.b16 %v3756, %v3752
    %v3813 = vpack.c.b16 %v3761, %v3757
    %v3814 = vpack.c.b16 %v3762, %v3758
    %v3815 = vpack.c.b16 %v3763, %v3759
    %v3816 = vpack.c.b16 %v3764, %v3760
    %v3817 = vpack.c.b16 %v3769, %v3765
    %v3818 = vpack.c.b16 %v3770, %v3766
    %v3819 = vpack.c.b16 %v3771, %v3767
    %v3820 = vpack.c.b16 %v3772, %v3768
    %v3821 = vpack.c.b16 %v3777, %v3773
    %v3822 = vpack.c.b16 %v3778, %v3774
    %v3823 = vpack.c.b16 %v3779, %v3775
    %v3824 = vpack.c.b16 %v3780, %v3776
    %v3825 = vpack.c.b16 %v3785, %v3781
    %v3826 = vpack.c.b16 %v3786, %v3782
    %v3827 = vpack.c.b16 %v3787, %v3783
    %v3828 = vpack.c.b16 %v3788, %v3784
    %v3829 = vpack.c.b16 %v3793, %v3789
    %v3830 = vpack.c.b16 %v3794, %v3790
    %v3831 = vpack.c.b16 %v3795, %v3791
    %v3832 = vpack.c.b16 %v3796, %v3792
    %v3833 = vpack.c.b16 %v3801, %v3797
    %v3834 = vpack.c.b16 %v3802, %v3798
    %v3835 = vpack.c.b16 %v3803, %v3799
    %v3836 = vpack.c.b16 %v3804, %v3800
    %3869 = vmatprep.subr.bf16.mxu0 %v3806
    %3870 = vmatpush1.bf16.msra.mxu0 %v3805
    %3871 = vmatprep.subr.bf16.mxu0 %v3810
    %3872 = vmatpush1.bf16.msra.mxu0 %v3809
    %3873 = vmatprep.subr.bf16.mxu0 %v3814
    %3874 = vmatpush1.bf16.msra.mxu0 %v3813
    %3875 = vmatprep.subr.bf16.mxu0 %v3818
    %3876 = vmatpush1.bf16.msra.mxu0 %v3817
    %3877 = vmatprep.subr.bf16.mxu0 %v3822
    %3878 = vmatpush1.bf16.msra.mxu0 %v3821
    %3879 = vmatprep.subr.bf16.mxu0 %v3826
    %3880 = vmatpush1.bf16.msra.mxu0 %v3825
    %3881 = vmatprep.subr.bf16.mxu0 %v3830
    %3882 = vmatpush1.bf16.msra.mxu0 %v3829
    %3883 = vmatprep.subr.bf16.mxu0 %v3834
    %3884 = vmatpush1.bf16.msra.mxu0 %v3833
    %3885 = vmatprep.subr.bf16.mxu0 0
    %3886 = vmatpush1.bf16.msra.mxu0 0
    %3887 = vmatprep.subr.bf16.mxu0 0
    %3888 = vmatpush1.bf16.msra.mxu0 0
    %3889 = vmatprep.subr.bf16.mxu0 0
    %3890 = vmatpush1.bf16.msra.mxu0 0
    %3891 = vmatprep.subr.bf16.mxu0 0
    %3892 = vmatpush1.bf16.msra.mxu0 0
    %3893 = vmatprep.subr.bf16.mxu0 0
    %3894 = vmatpush1.bf16.msra.mxu0 0
    %3895 = vmatprep.subr.bf16.mxu0 0
    %3896 = vmatpush1.bf16.msra.mxu0 0
    %3897 = vmatprep.subr.bf16.mxu0 0
    %3898 = vmatpush1.bf16.msra.mxu0 0
    %3899 = vmatprep.subr.bf16.mxu0 0
    %3900 = vmatpush1.bf16.msra.mxu0 0
    %3901 = vmatprep.mubr.bf16.mxu0 0
    %3902 = vmatmul.mubr.bf16.gmra.mrb[0].mxu0 %v3676
    %v3903 = vpop.f32.mrb[0].mxu0
    %v3904 = vadd.f32 0.0, %v3903
    %v3905 = vpop.f32.mrb[0].mxu0
    %v3906 = vadd.f32 0.0, %v3905
    %v3907 = vpop.f32.mrb[0].mxu0
    %v3908 = vpop.f32.mrb[0].mxu0
    %3909 = vdwg.mxu0
    %3910 = vmatprep.subr.bf16.mxu0 %v3808
    %3911 = vmatpush1.bf16.msra.mxu0 %v3807
    %3912 = vmatprep.subr.bf16.mxu0 %v3812
    %3913 = vmatpush1.bf16.msra.mxu0 %v3811
    %3914 = vmatprep.subr.bf16.mxu0 %v3816
    %3915 = vmatpush1.bf16.msra.mxu0 %v3815
    %3916 = vmatprep.subr.bf16.mxu0 %v3820
    %3917 = vmatpush1.bf16.msra.mxu0 %v3819
    %3918 = vmatprep.subr.bf16.mxu0 %v3824
    %3919 = vmatpush1.bf16.msra.mxu0 %v3823
    %3920 = vmatprep.subr.bf16.mxu0 %v3828
    %3921 = vmatpush1.bf16.msra.mxu0 %v3827
    %3922 = vmatprep.subr.bf16.mxu0 %v3832
    %3923 = vmatpush1.bf16.msra.mxu0 %v3831
    %3924 = vmatprep.subr.bf16.mxu0 %v3836
    %3925 = vmatpush1.bf16.msra.mxu0 %v3835
    %3926 = vmatprep.subr.bf16.mxu0 0
    %3927 = vmatpush1.bf16.msra.mxu0 0
    %3928 = vmatprep.subr.bf16.mxu0 0
    %3929 = vmatpush1.bf16.msra.mxu0 0
    %3930 = vmatprep.subr.bf16.mxu0 0
    %3931 = vmatpush1.bf16.msra.mxu0 0
    %3932 = vmatprep.subr.bf16.mxu0 0
    %3933 = vmatpush1.bf16.msra.mxu0 0
    %3934 = vmatprep.subr.bf16.mxu0 0
    %3935 = vmatpush1.bf16.msra.mxu0 0
    %3936 = vmatprep.subr.bf16.mxu0 0
    %3937 = vmatpush1.bf16.msra.mxu0 0
    %3938 = vmatprep.subr.bf16.mxu0 0
    %3939 = vmatpush1.bf16.msra.mxu0 0
    %3940 = vmatprep.subr.bf16.mxu0 0
    %3941 = vmatpush1.bf16.msra.mxu0 0
    %3942 = vmatprep.mubr.bf16.mxu0 0
    %3943 = vmatmul.mubr.bf16.gmra.mrb[0].mxu0 %v3676
    %v3944 = vpop.f32.mrb[0].mxu0
    %v3945 = vadd.f32 0.0, %v3944
    %v3946 = vpop.f32.mrb[0].mxu0
    %v3947 = vadd.f32 0.0, %v3946
    %v3948 = vpop.f32.mrb[0].mxu0
    %v3949 = vpop.f32.mrb[0].mxu0
    %3950 = vdwg.mxu0
    %v3951 = vadd.f32 %v1800, %v3904
    %v3952 = vadd.f32 %v1802, %v3906
    %v3953 = vadd.f32 %v1841, %v3945
    %v3954 = vadd.f32 %v1843, %v3947
    %v3955 = vxor.u32 %v3951, 2147483648
    %v3956 = vxor.u32 %v3952, 2147483648
    %v3957 = vxor.u32 %v3953, 2147483648
    %v3958 = vmul.f32 %v3955, 1.442695
    %v3959 = vpow.pop %v3958
    %v3960 = vmul.f32 %v3956, 1.442695
    %v3961 = vpow.pop %v3960
    %v3962 = vmul.f32 %v3957, 1.442695
    %v3963 = vpow.pop %v3962
    %v3964 = vadd.f32 %v3959, 1.0
    %v3965 = vadd.f32 %v3961, 1.0
    %v3966 = vadd.f32 %v3963, 1.0
    %v3967 = vrcp.pop %v3964
    %v3968 = vmul.f32 1.0, %v3967
    %v3969 = vrcp.pop %v3965
    %v3970 = vmul.f32 1.0, %v3969
    %v3971 = vrcp.pop %v3966
    %v3972 = vmul.f32 1.0, %v3971
    %v3973 = vtanh.pop %v3954
    %v3974 = vmul.f32 %v3970, %v3671
    %v3975 = vmul.f32 %v3968, %v3973
    %v3976 = vadd.f32 %v3974, %v3975
    %v3977 = vtanh.pop %v3976
    %v3978 = vmul.f32 %v3972, %v3977
    %v3979 = vmax.f32 %v3978, 0.0
    %3980 = vst [vmem:[#allocation3 + $0x30] sm:$0xff] %v3979
    %v3981 = vpack.c.bf16 %v3978, %v3978
    %v3982 = vld [vmem:[#allocation8] sm:$0xff]
    %v3983 = vld [vmem:[#allocation8 + $0x8] sm:$0xff]
    %v3984 = vld [vmem:[#allocation8 + $0x10] sm:$0xff]
    %v3985 = vld [vmem:[#allocation8 + $0x18] sm:$0xff]
    %v3986 = vld [vmem:[#allocation8 + $0x20] sm:$0xff]
    %v3987 = vld [vmem:[#allocation8 + $0x28] sm:$0xff]
    %v3988 = vld [vmem:[#allocation8 + $0x30] sm:$0xff]
    %v3989 = vld [vmem:[#allocation8 + $0x38] sm:$0xff]
    %v3990 = vld [vmem:[#allocation8 + $0x40] sm:$0xff]
    %v3991 = vld [vmem:[#allocation8 + $0x48] sm:$0xff]
    %v3992 = vld [vmem:[#allocation8 + $0x50] sm:$0xff]
    %v3993 = vld [vmem:[#allocation8 + $0x58] sm:$0xff]
    %v3994 = vld [vmem:[#allocation8 + $0x60] sm:$0xff]
    %v3995 = vld [vmem:[#allocation8 + $0x68] sm:$0xff]
    %v3996 = vld [vmem:[#allocation8 + $0x70] sm:$0xff]
    %v3997 = vld [vmem:[#allocation8 + $0x78] sm:$0xff]
    %v3998 = vld [vmem:[#allocation8 + $0x80] sm:$0xff]
    %v3999 = vld [vmem:[#allocation8 + $0x88] sm:$0xff]
    %v4000 = vld [vmem:[#allocation8 + $0x90] sm:$0xff]
    %v4001 = vld [vmem:[#allocation8 + $0x98] sm:$0xff]
    %v4002 = vld [vmem:[#allocation8 + $0xa0] sm:$0xff]
    %v4003 = vld [vmem:[#allocation8 + $0xa8] sm:$0xff]
    %v4004 = vld [vmem:[#allocation8 + $0xb0] sm:$0xff]
    %v4005 = vld [vmem:[#allocation8 + $0xb8] sm:$0xff]
    %v4006 = vld [vmem:[#allocation8 + $0xc0] sm:$0xff]
    %v4007 = vld [vmem:[#allocation8 + $0xc8] sm:$0xff]
    %v4008 = vld [vmem:[#allocation8 + $0xd0] sm:$0xff]
    %v4009 = vld [vmem:[#allocation8 + $0xd8] sm:$0xff]
    %v4010 = vld [vmem:[#allocation8 + $0xe0] sm:$0xff]
    %v4011 = vld [vmem:[#allocation8 + $0xe8] sm:$0xff]
    %v4012 = vld [vmem:[#allocation8 + $0xf0] sm:$0xff]
    %v4013 = vld [vmem:[#allocation8 + $0xf8] sm:$0xff]
    %v4046 = vunpack.c.l.b16 %v3982
    %v4047 = vunpack.c.h.b16 %v3982
    %v4048 = vunpack.c.l.b16 %v3983
    %v4049 = vunpack.c.h.b16 %v3983
    %v4050 = vunpack.c.l.b16 %v3984
    %v4051 = vunpack.c.h.b16 %v3984
    %v4052 = vunpack.c.l.b16 %v3985
    %v4053 = vunpack.c.h.b16 %v3985
    %v4054 = vunpack.c.l.b16 %v3986
    %v4055 = vunpack.c.h.b16 %v3986
    %v4056 = vunpack.c.l.b16 %v3987
    %v4057 = vunpack.c.h.b16 %v3987
    %v4058 = vunpack.c.l.b16 %v3988
    %v4059 = vunpack.c.h.b16 %v3988
    %v4060 = vunpack.c.l.b16 %v3989
    %v4061 = vunpack.c.h.b16 %v3989
    %v4062 = vunpack.c.l.b16 %v3990
    %v4063 = vunpack.c.h.b16 %v3990
    %v4064 = vunpack.c.l.b16 %v3991
    %v4065 = vunpack.c.h.b16 %v3991
    %v4066 = vunpack.c.l.b16 %v3992
    %v4067 = vunpack.c.h.b16 %v3992
    %v4068 = vunpack.c.l.b16 %v3993
    %v4069 = vunpack.c.h.b16 %v3993
    %v4070 = vunpack.c.l.b16 %v3994
    %v4071 = vunpack.c.h.b16 %v3994
    %v4072 = vunpack.c.l.b16 %v3995
    %v4073 = vunpack.c.h.b16 %v3995
    %v4074 = vunpack.c.l.b16 %v3996
    %v4075 = vunpack.c.h.b16 %v3996
    %v4076 = vunpack.c.l.b16 %v3997
    %v4077 = vunpack.c.h.b16 %v3997
    %v4078 = vunpack.c.l.b16 %v3998
    %v4079 = vunpack.c.h.b16 %v3998
    %v4080 = vunpack.c.l.b16 %v3999
    %v4081 = vunpack.c.h.b16 %v3999
    %v4082 = vunpack.c.l.b16 %v4000
    %v4083 = vunpack.c.h.b16 %v4000
    %v4084 = vunpack.c.l.b16 %v4001
    %v4085 = vunpack.c.h.b16 %v4001
    %v4086 = vunpack.c.l.b16 %v4002
    %v4087 = vunpack.c.h.b16 %v4002
    %v4088 = vunpack.c.l.b16 %v4003
    %v4089 = vunpack.c.h.b16 %v4003
    %v4090 = vunpack.c.l.b16 %v4004
    %v4091 = vunpack.c.h.b16 %v4004
    %v4092 = vunpack.c.l.b16 %v4005
    %v4093 = vunpack.c.h.b16 %v4005
    %v4094 = vunpack.c.l.b16 %v4006
    %v4095 = vunpack.c.h.b16 %v4006
    %v4096 = vunpack.c.l.b16 %v4007
    %v4097 = vunpack.c.h.b16 %v4007
    %v4098 = vunpack.c.l.b16 %v4008
    %v4099 = vunpack.c.h.b16 %v4008
    %v4100 = vunpack.c.l.b16 %v4009
    %v4101 = vunpack.c.h.b16 %v4009
    %v4102 = vunpack.c.l.b16 %v4010
    %v4103 = vunpack.c.h.b16 %v4010
    %v4104 = vunpack.c.l.b16 %v4011
    %v4105 = vunpack.c.h.b16 %v4011
    %v4106 = vunpack.c.l.b16 %v4012
    %v4107 = vunpack.c.h.b16 %v4012
    %v4108 = vunpack.c.l.b16 %v4013
    %v4109 = vunpack.c.h.b16 %v4013
    %v4110 = vpack.c.b16 %v4050, %v4046
    %v4111 = vpack.c.b16 %v4051, %v4047
    %v4112 = vpack.c.b16 %v4052, %v4048
    %v4113 = vpack.c.b16 %v4053, %v4049
    %v4114 = vpack.c.b16 %v4058, %v4054
    %v4115 = vpack.c.b16 %v4059, %v4055
    %v4116 = vpack.c.b16 %v4060, %v4056
    %v4117 = vpack.c.b16 %v4061, %v4057
    %v4118 = vpack.c.b16 %v4066, %v4062
    %v4119 = vpack.c.b16 %v4067, %v4063
    %v4120 = vpack.c.b16 %v4068, %v4064
    %v4121 = vpack.c.b16 %v4069, %v4065
    %v4122 = vpack.c.b16 %v4074, %v4070
    %v4123 = vpack.c.b16 %v4075, %v4071
    %v4124 = vpack.c.b16 %v4076, %v4072
    %v4125 = vpack.c.b16 %v4077, %v4073
    %v4126 = vpack.c.b16 %v4082, %v4078
    %v4127 = vpack.c.b16 %v4083, %v4079
    %v4128 = vpack.c.b16 %v4084, %v4080
    %v4129 = vpack.c.b16 %v4085, %v4081
    %v4130 = vpack.c.b16 %v4090, %v4086
    %v4131 = vpack.c.b16 %v4091, %v4087
    %v4132 = vpack.c.b16 %v4092, %v4088
    %v4133 = vpack.c.b16 %v4093, %v4089
    %v4134 = vpack.c.b16 %v4098, %v4094
    %v4135 = vpack.c.b16 %v4099, %v4095
    %v4136 = vpack.c.b16 %v4100, %v4096
    %v4137 = vpack.c.b16 %v4101, %v4097
    %v4138 = vpack.c.b16 %v4106, %v4102
    %v4139 = vpack.c.b16 %v4107, %v4103
    %v4140 = vpack.c.b16 %v4108, %v4104
    %v4141 = vpack.c.b16 %v4109, %v4105
    %4174 = vmatprep.subr.bf16.mxu0 %v4111
    %4175 = vmatpush1.bf16.msra.mxu0 %v4110
    %4176 = vmatprep.subr.bf16.mxu0 %v4115
    %4177 = vmatpush1.bf16.msra.mxu0 %v4114
    %4178 = vmatprep.subr.bf16.mxu0 %v4119
    %4179 = vmatpush1.bf16.msra.mxu0 %v4118
    %4180 = vmatprep.subr.bf16.mxu0 %v4123
    %4181 = vmatpush1.bf16.msra.mxu0 %v4122
    %4182 = vmatprep.subr.bf16.mxu0 %v4127
    %4183 = vmatpush1.bf16.msra.mxu0 %v4126
    %4184 = vmatprep.subr.bf16.mxu0 %v4131
    %4185 = vmatpush1.bf16.msra.mxu0 %v4130
    %4186 = vmatprep.subr.bf16.mxu0 %v4135
    %4187 = vmatpush1.bf16.msra.mxu0 %v4134
    %4188 = vmatprep.subr.bf16.mxu0 %v4139
    %4189 = vmatpush1.bf16.msra.mxu0 %v4138
    %4190 = vmatprep.subr.bf16.mxu0 0
    %4191 = vmatpush1.bf16.msra.mxu0 0
    %4192 = vmatprep.subr.bf16.mxu0 0
    %4193 = vmatpush1.bf16.msra.mxu0 0
    %4194 = vmatprep.subr.bf16.mxu0 0
    %4195 = vmatpush1.bf16.msra.mxu0 0
    %4196 = vmatprep.subr.bf16.mxu0 0
    %4197 = vmatpush1.bf16.msra.mxu0 0
    %4198 = vmatprep.subr.bf16.mxu0 0
    %4199 = vmatpush1.bf16.msra.mxu0 0
    %4200 = vmatprep.subr.bf16.mxu0 0
    %4201 = vmatpush1.bf16.msra.mxu0 0
    %4202 = vmatprep.subr.bf16.mxu0 0
    %4203 = vmatpush1.bf16.msra.mxu0 0
    %4204 = vmatprep.subr.bf16.mxu0 0
    %4205 = vmatpush1.bf16.msra.mxu0 0
    %4206 = vmatprep.mubr.bf16.mxu0 0
    %4207 = vmatmul.mubr.bf16.gmra.mrb[0].mxu0 %v3981
    %v4208 = vpop.f32.mrb[0].mxu0
    %v4209 = vadd.f32 0.0, %v4208
    %v4210 = vpop.f32.mrb[0].mxu0
    %v4211 = vadd.f32 0.0, %v4210
    %v4212 = vpop.f32.mrb[0].mxu0
    %v4213 = vpop.f32.mrb[0].mxu0
    %4214 = vdwg.mxu0
    %4215 = vmatprep.subr.bf16.mxu0 %v4113
    %4216 = vmatpush1.bf16.msra.mxu0 %v4112
    %4217 = vmatprep.subr.bf16.mxu0 %v4117
    %4218 = vmatpush1.bf16.msra.mxu0 %v4116
    %4219 = vmatprep.subr.bf16.mxu0 %v4121
    %4220 = vmatpush1.bf16.msra.mxu0 %v4120
    %4221 = vmatprep.subr.bf16.mxu0 %v4125
    %4222 = vmatpush1.bf16.msra.mxu0 %v4124
    %4223 = vmatprep.subr.bf16.mxu0 %v4129
    %4224 = vmatpush1.bf16.msra.mxu0 %v4128
    %4225 = vmatprep.subr.bf16.mxu0 %v4133
    %4226 = vmatpush1.bf16.msra.mxu0 %v4132
    %4227 = vmatprep.subr.bf16.mxu0 %v4137
    %4228 = vmatpush1.bf16.msra.mxu0 %v4136
    %4229 = vmatprep.subr.bf16.mxu0 %v4141
    %4230 = vmatpush1.bf16.msra.mxu0 %v4140
    %4231 = vmatprep.subr.bf16.mxu0 0
    %4232 = vmatpush1.bf16.msra.mxu0 0
    %4233 = vmatprep.subr.bf16.mxu0 0
    %4234 = vmatpush1.bf16.msra.mxu0 0
    %4235 = vmatprep.subr.bf16.mxu0 0
    %4236 = vmatpush1.bf16.msra.mxu0 0
    %4237 = vmatprep.subr.bf16.mxu0 0
    %4238 = vmatpush1.bf16.msra.mxu0 0
    %4239 = vmatprep.subr.bf16.mxu0 0
    %4240 = vmatpush1.bf16.msra.mxu0 0
    %4241 = vmatprep.subr.bf16.mxu0 0
    %4242 = vmatpush1.bf16.msra.mxu0 0
    %4243 = vmatprep.subr.bf16.mxu0 0
    %4244 = vmatpush1.bf16.msra.mxu0 0
    %4245 = vmatprep.subr.bf16.mxu0 0
    %4246 = vmatpush1.bf16.msra.mxu0 0
    %4247 = vmatprep.mubr.bf16.mxu0 0
    %4248 = vmatmul.mubr.bf16.gmra.mrb[0].mxu0 %v3981
    %v4249 = vpop.f32.mrb[0].mxu0
    %v4250 = vadd.f32 0.0, %v4249
    %v4251 = vpop.f32.mrb[0].mxu0
    %v4252 = vadd.f32 0.0, %v4251
    %v4253 = vpop.f32.mrb[0].mxu0
    %v4254 = vpop.f32.mrb[0].mxu0
    %4255 = vdwg.mxu0
    %v4256 = vadd.f32 %v1800, %v4209
    %v4257 = vadd.f32 %v1802, %v4211
    %v4258 = vadd.f32 %v1841, %v4250
    %v4259 = vadd.f32 %v1843, %v4252
    %v4260 = vxor.u32 %v4256, 2147483648
    %v4261 = vxor.u32 %v4257, 2147483648
    %v4262 = vxor.u32 %v4258, 2147483648
    %v4263 = vmul.f32 %v4260, 1.442695
    %v4264 = vpow.pop %v4263
    %v4265 = vmul.f32 %v4261, 1.442695
    %v4266 = vpow.pop %v4265
    %v4267 = vmul.f32 %v4262, 1.442695
    %v4268 = vpow.pop %v4267
    %v4269 = vadd.f32 %v4264, 1.0
    %v4270 = vadd.f32 %v4266, 1.0
    %v4271 = vadd.f32 %v4268, 1.0
    %v4272 = vrcp.pop %v4269
    %v4273 = vmul.f32 1.0, %v4272
    %v4274 = vrcp.pop %v4270
    %v4275 = vmul.f32 1.0, %v4274
    %v4276 = vrcp.pop %v4271
    %v4277 = vmul.f32 1.0, %v4276
    %v4278 = vtanh.pop %v4259
    %v4279 = vmul.f32 %v4275, %v3976
    %v4280 = vmul.f32 %v4273, %v4278
    %v4281 = vadd.f32 %v4279, %v4280
    %v4282 = vtanh.pop %v4281
    %v4283 = vmul.f32 %v4277, %v4282
    %v4284 = vmax.f32 %v4283, 0.0
    %4285 = vst [vmem:[#allocation3 + $0x38] sm:$0xff] %v4284
    %v4286 = vld [vmem:[%s2] sm:$0xf]
    %v4287 = vld [vmem:[%s2 + $0x4] sm:$0xf]
    %v4288 = vld [vmem:[#allocation3] sm:$0xff]
    %v4289 = vld [vmem:[#allocation3 + $0x8] sm:$0xff]
    %v4290 = vld [vmem:[#allocation3 + $0x10] sm:$0xff]
    %v4291 = vld [vmem:[#allocation3 + $0x18] sm:$0xff]
    %v4292 = vld [vmem:[#allocation3 + $0x20] sm:$0xff]
    %v4293 = vld [vmem:[#allocation3 + $0x28] sm:$0xff]
    %v4294 = vld [vmem:[#allocation3 + $0x30] sm:$0xff]
    %v4295 = vld [vmem:[#allocation3 + $0x38] sm:$0xff]
    %v4296 = vpack.c.bf16 %v4289, %v4288
    %v4297 = vpack.c.bf16 %v4291, %v4290
    %v4298 = vpack.c.bf16 %v4293, %v4292
    %v4299 = vpack.c.bf16 %v4295, %v4294
    %v4302 = vunpack.c.l.b16 %v4286
    %v4303 = vunpack.c.l.b16 %v4287
    %v4304 = vpack.c.b16 %v4303, %v4302
    %vm4305 = vcmask 523264
    %v4307 = vsel %vm4305, %v4304, 0
    %4309 = vmatprep.subr.bf16.mxu0 0
    %4310 = vmatpush1.bf16.msra.mxu0 %v4296
    %4311 = vmatprep.subr.bf16.mxu0 0
    %4312 = vmatpush1.bf16.msra.mxu0 %v4297
    %4313 = vmatprep.subr.bf16.mxu0 0
    %4314 = vmatpush1.bf16.msra.mxu0 %v4298
    %4315 = vmatprep.subr.bf16.mxu0 0
    %4316 = vmatpush1.bf16.msra.mxu0 %v4299
    %4317 = vmatprep.subr.bf16.mxu0 0
    %4318 = vmatpush1.bf16.msra.mxu0 0
    %4319 = vmatprep.subr.bf16.mxu0 0
    %4320 = vmatpush1.bf16.msra.mxu0 0
    %4321 = vmatprep.subr.bf16.mxu0 0
    %4322 = vmatpush1.bf16.msra.mxu0 0
    %4323 = vmatprep.subr.bf16.mxu0 0
    %4324 = vmatpush1.bf16.msra.mxu0 0
    %4325 = vmatprep.subr.bf16.mxu0 0
    %4326 = vmatpush1.bf16.msra.mxu0 0
    %4327 = vmatprep.subr.bf16.mxu0 0
    %4328 = vmatpush1.bf16.msra.mxu0 0
    %4329 = vmatprep.subr.bf16.mxu0 0
    %4330 = vmatpush1.bf16.msra.mxu0 0
    %4331 = vmatprep.subr.bf16.mxu0 0
    %4332 = vmatpush1.bf16.msra.mxu0 0
    %4333 = vmatprep.subr.bf16.mxu0 0
    %4334 = vmatpush1.bf16.msra.mxu0 0
    %4335 = vmatprep.subr.bf16.mxu0 0
    %4336 = vmatpush1.bf16.msra.mxu0 0
    %4337 = vmatprep.subr.bf16.mxu0 0
    %4338 = vmatpush1.bf16.msra.mxu0 0
    %4339 = vmatprep.subr.bf16.mxu0 0
    %4340 = vmatpush1.bf16.msra.mxu0 0
    %4341 = vmatprep.mubr.bf16.mxu0 0
    %4342 = vmatmul.mubr.bf16.gmra.mrb[0].mxu0 %v4307
    %v4343 = vpop.f32.mrb[0].mxu0
    %v4344 = vadd.f32 0.0, %v4343
    %v4345 = vpop.f32.mrb[0].mxu0
    %v4346 = vpop.f32.mrb[0].mxu0
    %v4347 = vadd.f32 0.0, %v4346
    %v4348 = vpop.f32.mrb[0].mxu0
    %4349 = vdwg.mxu0
    %v4350 = vpack.c.bf16 %v4347, %v4344
    %v4351 = vld [vmem:[%s9] sm:$0xf]
    %v4352 = vld [vmem:[%s9 + $0x4] sm:$0xf]
    %v4353 = vld [vmem:[%s9 + $0x8] sm:$0xf]
    %v4354 = vld [vmem:[%s9 + $0xc] sm:$0xf]
    %v4355 = vld [vmem:[%s9 + $0x10] sm:$0xf]
    %v4356 = vld [vmem:[%s9 + $0x14] sm:$0xf]
    %v4357 = vld [vmem:[%s9 + $0x18] sm:$0xf]
    %v4358 = vld [vmem:[%s9 + $0x1c] sm:$0xf]
    %v4359 = vld [vmem:[%s9 + $0x20] sm:$0xf]
    %v4360 = vld [vmem:[%s9 + $0x24] sm:$0xf]
    %v4361 = vld [vmem:[%s9 + $0x28] sm:$0xf]
    %v4362 = vld [vmem:[%s9 + $0x2c] sm:$0xf]
    %v4363 = vld [vmem:[%s9 + $0x30] sm:$0xf]
    %v4364 = vld [vmem:[%s9 + $0x34] sm:$0xf]
    %v4365 = vld [vmem:[%s9 + $0x38] sm:$0xf]
    %v4366 = vld [vmem:[%s9 + $0x3c] sm:$0xf]
    %v4367 = vld [vmem:[%s10] sm:$0x1]
    %v4369 = vlaneseq
    %v4370 = vshrl.u32 %v4369, 7
    %v4371 = vsub.s32 0, %v4370
    %v4372 = vrot.slane %v4367, %v4371
    %v4390 = vunpack.c.l.b16 %v4351
    %v4391 = vunpack.c.l.b16 %v4352
    %v4392 = vunpack.c.l.b16 %v4353
    %v4393 = vunpack.c.l.b16 %v4354
    %v4394 = vunpack.c.l.b16 %v4355
    %v4395 = vunpack.c.l.b16 %v4356
    %v4396 = vunpack.c.l.b16 %v4357
    %v4397 = vunpack.c.l.b16 %v4358
    %v4398 = vunpack.c.l.b16 %v4359
    %v4399 = vunpack.c.l.b16 %v4360
    %v4400 = vunpack.c.l.b16 %v4361
    %v4401 = vunpack.c.l.b16 %v4362
    %v4402 = vunpack.c.l.b16 %v4363
    %v4403 = vunpack.c.l.b16 %v4364
    %v4404 = vunpack.c.l.b16 %v4365
    %v4405 = vunpack.c.l.b16 %v4366
    %v4406 = vpack.c.b16 %v4391, %v4390
    %v4407 = vpack.c.b16 %v4393, %v4392
    %v4408 = vpack.c.b16 %v4395, %v4394
    %v4409 = vpack.c.b16 %v4397, %v4396
    %v4410 = vpack.c.b16 %v4399, %v4398
    %v4411 = vpack.c.b16 %v4401, %v4400
    %v4412 = vpack.c.b16 %v4403, %v4402
    %v4413 = vpack.c.b16 %v4405, %v4404
    %4422 = vmatprep.subr.bf16.mxu0 0
    %4423 = vmatpush1.bf16.msra.mxu0 %v4406
    %4424 = vmatprep.subr.bf16.mxu0 0
    %4425 = vmatpush1.bf16.msra.mxu0 %v4407
    %4426 = vmatprep.subr.bf16.mxu0 0
    %4427 = vmatpush1.bf16.msra.mxu0 %v4408
    %4428 = vmatprep.subr.bf16.mxu0 0
    %4429 = vmatpush1.bf16.msra.mxu0 %v4409
    %4430 = vmatprep.subr.bf16.mxu0 0
    %4431 = vmatpush1.bf16.msra.mxu0 %v4410
    %4432 = vmatprep.subr.bf16.mxu0 0
    %4433 = vmatpush1.bf16.msra.mxu0 %v4411
    %4434 = vmatprep.subr.bf16.mxu0 0
    %4435 = vmatpush1.bf16.msra.mxu0 %v4412
    %4436 = vmatprep.subr.bf16.mxu0 0
    %4437 = vmatpush1.bf16.msra.mxu0 %v4413
    %4438 = vmatprep.subr.bf16.mxu0 0
    %4439 = vmatpush1.bf16.msra.mxu0 0
    %4440 = vmatprep.subr.bf16.mxu0 0
    %4441 = vmatpush1.bf16.msra.mxu0 0
    %4442 = vmatprep.subr.bf16.mxu0 0
    %4443 = vmatpush1.bf16.msra.mxu0 0
    %4444 = vmatprep.subr.bf16.mxu0 0
    %4445 = vmatpush1.bf16.msra.mxu0 0
    %4446 = vmatprep.subr.bf16.mxu0 0
    %4447 = vmatpush1.bf16.msra.mxu0 0
    %4448 = vmatprep.subr.bf16.mxu0 0
    %4449 = vmatpush1.bf16.msra.mxu0 0
    %4450 = vmatprep.subr.bf16.mxu0 0
    %4451 = vmatpush1.bf16.msra.mxu0 0
    %4452 = vmatprep.subr.bf16.mxu0 0
    %4453 = vmatpush1.bf16.msra.mxu0 0
    %4454 = vmatprep.mubr.bf16.mxu0 0
    %4455 = vmatmul.mubr.bf16.gmra.mrb[0].mxu0 %v4350
    %v4456 = vpop.f32.mrb[0].mxu0
    %v4457 = vadd.f32 %v4372, %v4456
    %v4458 = vpop.f32.mrb[0].mxu0
    %v4459 = vpop.f32.mrb[0].mxu0
    %v4460 = vadd.f32 %v4372, %v4459
    %v4461 = vpop.f32.mrb[0].mxu0
    %4462 = vdwg.mxu0
    %4463 = vst.msk [vmem:[%s11] sm:$0xff] %vm234, %v4457
    %4464 = vst.msk [vmem:[%s11 + $0x8] sm:$0xff] %vm234, %v4460
    // Predicated region
    $region58: #{recurrent_autoencoder_forward.1} parent=1 // pred_check
      _
    $region59: #{recurrent_autoencoder_forward.1} parent=1 // pred_check_branch
      %4466 = sbr.rel (0) target = $region61
    $region60: #{recurrent_autoencoder_forward.1} parent=1 // pred_region
      _
    $region61: #{recurrent_autoencoder_forward.1} parent=1 // pred_fallthru
      _
    // Predicated region
    $region62: #{recurrent_autoencoder_forward.1} parent=1 // pred_check
      _
    $region63: #{recurrent_autoencoder_forward.1} parent=1 // pred_check_branch
      %4468 = sbr.rel (0) target = $region65
    $region64: #{recurrent_autoencoder_forward.1} parent=1 // pred_region
      _
    $region65: #{recurrent_autoencoder_forward.1} parent=1 // pred_fallthru
      _
    %4469 = vsyncpa [#allocation5], 1
    %4470 = vsyncpa [#allocation7], 1

</llo_original>
